<compile_context>
chip_gen: v6e
topology: v6e:2x2x1
jax: 0.10.0
libtpu: 0.0.40
codegen_flags: <defaults>
</compile_context>

<pallas_src>
import functools

import jax
import jax.numpy as jnp
import numpy as np
from jax.experimental import pallas as pl
from jax.experimental.pallas import tpu as pltpu


# ------------------------------ fused Pallas kernel ------------------------- #
def _upblock_kernel(w1_ref, b1_ref, w2_ref, b2_ref, p1_ref, o_ref, s1_ref,
                    *, co, ho, wo, halo):
    """Entire UpBlock for one batch image; everything stays resident in VMEM.

      w1_ref : (2Co, K1)     bf16  [deconv1 ; residual-deconv1] weight rows
      b1_ref : (2Co, 1)      f32   [b1 ; br1]
      w2_ref : (9, Co, 2Co)  f32   per-3x3-tap stage-2 weights, cols = [d1 | r1]
      b2_ref : (Co, 1)       f32   b2 + br2
      p1_ref : (1, K1, M)    bf16  stage-1 im2col patches of this image, M = Ho*Wo
      o_ref  : (1, Co, M)    f32   tanh(deconv2(d1) + residual2(r1))
      s1_ref : (2Co, halo+M+halo) f32 scratch: stage-1 output with zero halos
    """
    m = ho * wo

    # ---- stage 1: both branches in one MXU matmul; tanh only on the main rows ----
    acc1 = jnp.dot(w1_ref[...], p1_ref[0], preferred_element_type=jnp.float32)
    acc1 = acc1 + b1_ref[...]

    zeros_halo = jnp.zeros((2 * co, halo), jnp.float32)
    s1_ref[:, 0:halo] = zeros_halo                      # 3x3 row under-run reads 0
    s1_ref[:, halo + m:halo + m + halo] = zeros_halo    # 3x3 row over-run  reads 0
    # Co == 8 is an f32 sublane-tile boundary -> both stores are layout-aligned.
    s1_ref[0:co, halo:halo + m] = jnp.tanh(acc1[0:co, :])
    s1_ref[co:2 * co, halo:halo + m] = acc1[co:2 * co, :]

    # ---- stage 2: build the nine 3x3 taps straight from the resident VMEM tile ----
    col = jax.lax.broadcasted_iota(jnp.int32, (1, m), 1) % wo
    ok_left = col > 0              # tap dw = -1 is invalid in the first column
    ok_right = col < wo - 1        # tap dw = +1 is invalid in the last  column

    acc2 = jnp.zeros((co, m), jnp.float32)
    for kh in range(3):
        for kw in range(3):
            # tap[c, h*Wo+w] = s1[c, h+kh-1, w+kw-1]; row over/under-run hits the
            # zero halo, column wrap is masked below.
            off = halo + (kh - 1) * wo + (kw - 1)
            tap = s1_ref[:, off:off + m]                         # (2Co, M) f32
            contrib = jnp.dot(w2_ref[kh * 3 + kw], tap,
                              preferred_element_type=jnp.float32)
            if kw == 0:
                contrib = jnp.where(ok_left, contrib, 0.0)
            elif kw == 2:
                contrib = jnp.where(ok_right, contrib, 0.0)
            acc2 = acc2 + contrib

    o_ref[0, :, :] = jnp.tanh(acc2 + b2_ref[...])


# ------------------------------ JAX wrapper --------------------------------- #
def _weight_to_matrix(w):
    # PyTorch ConvTranspose2d weight (Ci, Co, k, k) -> equivalent stride-1-conv
    # matrix (Co, k*k*Ci); K ordered (kh, kw, ci) to match the patch builder.
    ci, co, k, _ = w.shape
    wf = jnp.flip(w, axis=(2, 3))            # (Ci, Co, kh, kw)
    wf = jnp.transpose(wf, (2, 3, 0, 1))     # (kh, kw, Ci, Co)
    return wf.reshape(k * k * ci, co).T      # (Co, k*k*Ci)


def _stage1_patches(x_nchw, k, stride, padding):
    # ConvTranspose2d(stride, padding) == stride-1 conv over the interior-dilated,
    # edge-padded input.  Returns patches (N, k*k*Ci, Ho*Wo), K ordered (kh, kw, ci).
    n, c, h, w = x_nchw.shape
    q = k - 1 - padding
    xp = jax.lax.pad(x_nchw, jnp.array(0, x_nchw.dtype),
                     ((0, 0, 0), (0, 0, 0), (q, q, stride - 1), (q, q, stride - 1)))
    ho = (h - 1) * stride - 2 * padding + k
    wo = (w - 1) * stride - 2 * padding + k
    taps = [xp[:, :, kh:kh + ho, kw:kw + wo] for kh in range(k) for kw in range(k)]
    pt = jnp.stack(taps, axis=1)                         # (N, k*k, Ci, Ho, Wo)
    return pt.reshape(n, k * k * c, ho * wo), (ho, wo)


def upblock_forward(x_nchw, params, scale_factor=2):
    co = params["w1"].shape[1]
    n = x_nchw.shape[0]
    k1 = params["w1"].shape[2]

    # stage-1 im2col patches, cast to bf16 BEFORE the Kx expansion
    p1, (ho, wo) = _stage1_patches(x_nchw.astype(jnp.bfloat16), k1, scale_factor, 1)
    m = ho * wo
    k1k = p1.shape[1]

    # stage-1 weights: both branches stacked along the output rows
    w1cat = jnp.concatenate([_weight_to_matrix(params["w1"]),
                             _weight_to_matrix(params["wr1"])],
                            axis=0).astype(jnp.bfloat16)                   # (2Co, K1)
    b1cat = jnp.concatenate([params["b1"], params["br1"]]
                            ).reshape(-1, 1).astype(jnp.float32)           # (2Co, 1)

    # stage-2 weights as 9 per-tap (Co, 2Co) blocks, columns = [d1 | r1] channels
    w2m = _weight_to_matrix(params["w2"]).reshape(co, 9, co)
    wr2m = _weight_to_matrix(params["wr2"]).reshape(co, 9, co)
    w2taps = jnp.transpose(jnp.concatenate([w2m, wr2m], axis=2),
                           (1, 0, 2)).astype(jnp.float32)                  # (9, Co, 2Co)
    b2sum = (params["b2"] + params["br2"]).reshape(-1, 1).astype(jnp.float32)

    halo = pl.cdiv(wo + 1, 128) * 128            # zero halo >= one output row + 1

    kernel = functools.partial(_upblock_kernel, co=co, ho=ho, wo=wo, halo=halo)
    out = pl.pallas_call(
        kernel,
        out_shape=jax.ShapeDtypeStruct((n, co, m), jnp.float32),
        grid=(n,),
        in_specs=[
            pl.BlockSpec((2 * co, k1k), lambda i: (0, 0)),
            pl.BlockSpec((2 * co, 1), lambda i: (0, 0)),
            pl.BlockSpec((9, co, 2 * co), lambda i: (0, 0, 0)),
            pl.BlockSpec((co, 1), lambda i: (0, 0)),
            pl.BlockSpec((1, k1k, m), lambda i: (i, 0, 0)),
        ],
        out_specs=pl.BlockSpec((1, co, m), lambda i: (i, 0, 0)),
        scratch_shapes=[pltpu.VMEM((2 * co, m + 2 * halo), jnp.float32)],
        compiler_params=pltpu.CompilerParams(dimension_semantics=("parallel",)),
    )(w1cat, b1cat, w2taps, b2sum, p1)

    return out.reshape(n, co, ho, wo)            # already NCHW


# --------------------------- numpy reference -------------------------------- #
def _conv_transpose_ref(x, w, b, stride, pad):
    # x: (N, Ci, H, W), w: (Ci, Co, k, k)  -- direct scatter implementation
    N, Ci, H, W = x.shape
    Co, k = w.shape[1], w.shape[2]
    fh, fw = (H - 1) * stride + k, (W - 1) * stride + k
    y = np.zeros((N, Co, fh, fw), dtype=np.float64)
    for n in range(N):
        for ih in range(H):
            for iw in range(W):
                contrib = np.tensordot(x[n, :, ih, iw], w, axes=([0], [0]))  # (Co,k,k)
                y[n, :, ih * stride:ih * stride + k, iw * stride:iw * stride + k] += contrib
    y = y[:, :, pad:fh - pad, pad:fw - pad]
    return y + b[None, :, None, None]


def upblock_ref(x, params, scale_factor=2):
    x = np.asarray(x, np.float64)
    p = {k: np.asarray(v, np.float64) for k, v in params.items()}
    r1 = _conv_transpose_ref(x, p["wr1"], p["br1"], scale_factor, 1)
    residual = _conv_transpose_ref(r1, p["wr2"], p["br2"], 1, 1)
    d1 = np.tanh(_conv_transpose_ref(x, p["w1"], p["b1"], scale_factor, 1))
    d2 = _conv_transpose_ref(d1, p["w2"], p["b2"], 1, 1)
    return np.tanh(d2 + residual)


# --------------------------------- main ------------------------------------- #
if __name__ == "__main__":
    in_channels, out_channels, scale_factor = 4, 8, 2
    N, H, W = 2, 16, 16
    k1 = 4 if scale_factor > 1 else 3

    key = jax.random.PRNGKey(0)
    keys = jax.random.split(key, 9)
    params = {
        # PyTorch ConvTranspose2d weight layout: (C_in, C_out, kH, kW)
        "w1":  0.1 * jax.random.normal(keys[0], (in_channels, out_channels, k1, k1), jnp.float32),
        "b1":  0.1 * jax.random.normal(keys[1], (out_channels,), jnp.float32),
        "w2":  0.1 * jax.random.normal(keys[2], (out_channels, out_channels, 3, 3), jnp.float32),
        "b2":  0.1 * jax.random.normal(keys[3], (out_channels,), jnp.float32),
        "wr1": 0.1 * jax.random.normal(keys[4], (in_channels, out_channels, k1, k1), jnp.float32),
        "br1": 0.1 * jax.random.normal(keys[5], (out_channels,), jnp.float32),
        "wr2": 0.1 * jax.random.normal(keys[6], (out_channels, out_channels, 3, 3), jnp.float32),
        "br2": 0.1 * jax.random.normal(keys[7], (out_channels,), jnp.float32),
    }
    x = jax.random.normal(keys[8], (N, in_channels, H, W), jnp.float32)

    fwd = jax.jit(functools.partial(upblock_forward, scale_factor=scale_factor))
    out = jax.block_until_ready(fwd(x, params))

    ref = upblock_ref(x, params, scale_factor)
    assert out.shape == ref.shape, (out.shape, ref.shape)
    np.testing.assert_allclose(np.asarray(out), ref, atol=2e-2, rtol=2e-2)
    print("KERNEL_OK")
</pallas_src>

<mosaic_0001>
module attributes {stable_mosaic.version = 11 : i64} {
  func.func @_upblock_kernel(%arg0: i32, %arg1: memref<16x64xbf16, #tpu.memory_space<vmem>>, %arg2: memref<16x1xf32, #tpu.memory_space<vmem>>, %arg3: memref<9x8x16xf32, #tpu.memory_space<vmem>>, %arg4: memref<8x1xf32, #tpu.memory_space<vmem>>, %arg5: memref<1x64x1024xbf16, #tpu.memory_space<vmem>>, %arg6: memref<1x8x1024xf32, #tpu.memory_space<vmem>>, %arg7: memref<16x1280xf32, #tpu.memory_space<vmem>>) attributes {dimension_semantics = [#tpu.dimension_semantics<parallel>], iteration_bounds = array<i64: 2>, scalar_prefetch = 0 : i64, scratch_operands = 1 : i64, tpu.core_type = #tpu.core_type<tc>, window_params = [{pipeline_mode = #tpu.pipeline_mode<synchronous>, transform_indices = @transform_0, window_bounds = array<i64: 16, 64>}, {pipeline_mode = #tpu.pipeline_mode<synchronous>, transform_indices = @transform_1, window_bounds = array<i64: 16, 1>}, {pipeline_mode = #tpu.pipeline_mode<synchronous>, transform_indices = @transform_2, window_bounds = array<i64: 9, 8, 16>}, {pipeline_mode = #tpu.pipeline_mode<synchronous>, transform_indices = @transform_3, window_bounds = array<i64: 8, 1>}, {transform_indices = @transform_4, window_bounds = array<i64: 1, 64, 1024>}, {transform_indices = @transform_5, window_bounds = array<i64: 1, 8, 1024>}]} {
    %c0 = arith.constant 0 : index
    %c0_0 = arith.constant 0 : index
    %0 = vector.load %arg1[%c0, %c0_0] : memref<16x64xbf16, #tpu.memory_space<vmem>>, vector<16x64xbf16>
    %c0_1 = arith.constant 0 : index
    %c0_2 = arith.constant 0 : index
    %c0_3 = arith.constant 0 : index
    %1 = vector.load %arg5[%c0_1, %c0_2, %c0_3] : memref<1x64x1024xbf16, #tpu.memory_space<vmem>>, vector<1x64x1024xbf16>
    %2 = vector.shape_cast %1 : vector<1x64x1024xbf16> to vector<64x1024xbf16>
    %cst = arith.constant dense<0.000000e+00> : vector<16x1024xf32>
    %3 = tpu.matmul %0, %2, %cst {dimension_numbers = #tpu.dot_dimension_numbers<[1], [0], [0], [1], [0, 0, 1, 1], [], []>} : vector<16x64xbf16>, vector<64x1024xbf16>, vector<16x1024xf32> -> vector<16x1024xf32>
    %c0_4 = arith.constant 0 : index
    %c0_5 = arith.constant 0 : index
    %4 = vector.load %arg2[%c0_4, %c0_5] : memref<16x1xf32, #tpu.memory_space<vmem>>, vector<16x1xf32>
    %5 = vector.broadcast %4 : vector<16x1xf32> to vector<16x1024xf32>
    %6 = arith.addf %3, %5 : vector<16x1024xf32>
    %cst_6 = arith.constant 0.000000e+00 : f32
    %7 = vector.broadcast %cst_6 : f32 to vector<16x128xf32>
    %c0_7 = arith.constant 0 : index
    %c0_8 = arith.constant 0 : index
    %8 = vector.load %arg7[%c0_7, %c0_8] : memref<16x1280xf32, #tpu.memory_space<vmem>>, vector<16x128xf32>
    tpu.vector_store %arg7[%c0_7, %c0_8], %7 {strides = array<i32>} : memref<16x1280xf32, #tpu.memory_space<vmem>>, vector<16x128xf32>,
    %c0_9 = arith.constant 0 : index
    %c1152 = arith.constant 1152 : index
    %9 = vector.load %arg7[%c0_9, %c1152] : memref<16x1280xf32, #tpu.memory_space<vmem>>, vector<16x128xf32>
    tpu.vector_store %arg7[%c0_9, %c1152], %7 {strides = array<i32>} : memref<16x1280xf32, #tpu.memory_space<vmem>>, vector<16x128xf32>,
    %10 = vector.extract_strided_slice %6 {offsets = [0, 0], sizes = [8, 1024], strides = [1, 1]} : vector<16x1024xf32> to vector<8x1024xf32>
    %11 = math.tanh %10 : vector<8x1024xf32>
    %c0_10 = arith.constant 0 : index
    %c128 = arith.constant 128 : index
    %12 = vector.load %arg7[%c0_10, %c128] : memref<16x1280xf32, #tpu.memory_space<vmem>>, vector<8x1024xf32>
    tpu.vector_store %arg7[%c0_10, %c128], %11 {strides = array<i32>} : memref<16x1280xf32, #tpu.memory_space<vmem>>, vector<8x1024xf32>,
    %13 = vector.extract_strided_slice %6 {offsets = [8, 0], sizes = [8, 1024], strides = [1, 1]} : vector<16x1024xf32> to vector<8x1024xf32>
    %c8 = arith.constant 8 : index
    %c128_11 = arith.constant 128 : index
    %14 = vector.load %arg7[%c8, %c128_11] : memref<16x1280xf32, #tpu.memory_space<vmem>>, vector<8x1024xf32>
    tpu.vector_store %arg7[%c8, %c128_11], %13 {strides = array<i32>} : memref<16x1280xf32, #tpu.memory_space<vmem>>, vector<8x1024xf32>,
    %15 = tpu.iota {dimensions = array<i32: 1>} : vector<1x1024xi32>
    %c32_i32 = arith.constant 32 : i32
    %c0_i32 = arith.constant 0 : i32
    %16 = arith.cmpi eq, %c32_i32, %c0_i32 : i32
    %c1_i32 = arith.constant 1 : i32
    %17 = arith.select %16, %c1_i32, %c32_i32 : i32
    %18 = vector.broadcast %17 : i32 to vector<1x1024xi32>
    %19 = arith.remsi %15, %18 : vector<1x1024xi32>
    %c0_i32_12 = arith.constant 0 : i32
    %20 = vector.broadcast %c0_i32_12 : i32 to vector<1x1024xi32>
    %21 = arith.cmpi ne, %19, %20 : vector<1x1024xi32>
    %c0_i32_13 = arith.constant 0 : i32
    %22 = vector.broadcast %c0_i32_13 : i32 to vector<1x1024xi32>
    %23 = arith.cmpi slt, %19, %22 : vector<1x1024xi32>
    %c0_i32_14 = arith.constant 0 : i32
    %24 = arith.cmpi slt, %17, %c0_i32_14 : i32
    %25 = vector.broadcast %24 : i1 to vector<1x1024xi1>
    %26 = vector.broadcast %25 : vector<1x1024xi1> to vector<1x1024xi1>
    %27 = arith.xori %23, %26 : vector<1x1024xi1>
    %28 = arith.andi %27, %21 : vector<1x1024xi1>
    %29 = vector.broadcast %17 : i32 to vector<1x1024xi32>
    %30 = arith.addi %19, %29 : vector<1x1024xi32>
    %31 = arith.select %28, %30, %19 : vector<1x1024xi1>, vector<1x1024xi32>
    %c0_i32_15 = arith.constant 0 : i32
    %32 = vector.broadcast %c0_i32_15 : i32 to vector<1x1024xi32>
    %33 = arith.cmpi sgt, %31, %32 : vector<1x1024xi32>
    %c31_i32 = arith.constant 31 : i32
    %34 = vector.broadcast %c31_i32 : i32 to vector<1x1024xi32>
    %35 = arith.cmpi slt, %31, %34 : vector<1x1024xi32>
    %cst_16 = arith.constant 0.000000e+00 : f32
    %36 = vector.broadcast %cst_16 : f32 to vector<8x1024xf32>
    %c0_17 = arith.constant 0 : index
    %c95 = arith.constant 95 : index
    %37 = vector.load %arg7[%c0_17, %c95] : memref<16x1280xf32, #tpu.memory_space<vmem>>, vector<16x1024xf32>
    %c0_18 = arith.constant 0 : index
    %c0_19 = arith.constant 0 : index
    %c0_20 = arith.constant 0 : index
    %38 = vector.load %arg3[%c0_18, %c0_19, %c0_20] : memref<9x8x16xf32, #tpu.memory_space<vmem>>, vector<1x8x16xf32>
    %39 = vector.shape_cast %38 : vector<1x8x16xf32> to vector<8x16xf32>
    %cst_21 = arith.constant dense<0.000000e+00> : vector<8x1024xf32>
    %40 = tpu.matmul %39, %37, %cst_21 {dimension_numbers = #tpu.dot_dimension_numbers<[1], [0], [0], [1], [0, 0, 1, 1], [], []>} : vector<8x16xf32>, vector<16x1024xf32>, vector<8x1024xf32> -> vector<8x1024xf32>
    %cst_22 = arith.constant 0.000000e+00 : f32
    %41 = vector.shape_cast %33 : vector<1x1024xi1> to vector<1x1024xi1>
    %42 = vector.broadcast %41 : vector<1x1024xi1> to vector<8x1024xi1>
    %43 = vector.broadcast %cst_22 : f32 to vector<8x1024xf32>
    %44 = arith.select %42, %40, %43 : vector<8x1024xi1>, vector<8x1024xf32>
    %45 = arith.addf %36, %44 : vector<8x1024xf32>
    %c0_23 = arith.constant 0 : index
    %c96 = arith.constant 96 : index
    %46 = vector.load %arg7[%c0_23, %c96] : memref<16x1280xf32, #tpu.memory_space<vmem>>, vector<16x1024xf32>
    %c1 = arith.constant 1 : index
    %c0_24 = arith.constant 0 : index
    %c0_25 = arith.constant 0 : index
    %47 = vector.load %arg3[%c1, %c0_24, %c0_25] : memref<9x8x16xf32, #tpu.memory_space<vmem>>, vector<1x8x16xf32>
    %48 = vector.shape_cast %47 : vector<1x8x16xf32> to vector<8x16xf32>
    %cst_26 = arith.constant dense<0.000000e+00> : vector<8x1024xf32>
    %49 = tpu.matmul %48, %46, %cst_26 {dimension_numbers = #tpu.dot_dimension_numbers<[1], [0], [0], [1], [0, 0, 1, 1], [], []>} : vector<8x16xf32>, vector<16x1024xf32>, vector<8x1024xf32> -> vector<8x1024xf32>
    %50 = arith.addf %45, %49 : vector<8x1024xf32>
    %c0_27 = arith.constant 0 : index
    %c97 = arith.constant 97 : index
    %51 = vector.load %arg7[%c0_27, %c97] : memref<16x1280xf32, #tpu.memory_space<vmem>>, vector<16x1024xf32>
    %c2 = arith.constant 2 : index
    %c0_28 = arith.constant 0 : index
    %c0_29 = arith.constant 0 : index
    %52 = vector.load %arg3[%c2, %c0_28, %c0_29] : memref<9x8x16xf32, #tpu.memory_space<vmem>>, vector<1x8x16xf32>
    %53 = vector.shape_cast %52 : vector<1x8x16xf32> to vector<8x16xf32>
    %cst_30 = arith.constant dense<0.000000e+00> : vector<8x1024xf32>
    %54 = tpu.matmul %53, %51, %cst_30 {dimension_numbers = #tpu.dot_dimension_numbers<[1], [0], [0], [1], [0, 0, 1, 1], [], []>} : vector<8x16xf32>, vector<16x1024xf32>, vector<8x1024xf32> -> vector<8x1024xf32>
    %cst_31 = arith.constant 0.000000e+00 : f32
    %55 = vector.shape_cast %35 : vector<1x1024xi1> to vector<1x1024xi1>
    %56 = vector.broadcast %55 : vector<1x1024xi1> to vector<8x1024xi1>
    %57 = vector.broadcast %cst_31 : f32 to vector<8x1024xf32>
    %58 = arith.select %56, %54, %57 : vector<8x1024xi1>, vector<8x1024xf32>
    %59 = arith.addf %50, %58 : vector<8x1024xf32>
    %c0_32 = arith.constant 0 : index
    %c127 = arith.constant 127 : index
    %60 = vector.load %arg7[%c0_32, %c127] : memref<16x1280xf32, #tpu.memory_space<vmem>>, vector<16x1024xf32>
    %c3 = arith.constant 3 : index
    %c0_33 = arith.constant 0 : index
    %c0_34 = arith.constant 0 : index
    %61 = vector.load %arg3[%c3, %c0_33, %c0_34] : memref<9x8x16xf32, #tpu.memory_space<vmem>>, vector<1x8x16xf32>
    %62 = vector.shape_cast %61 : vector<1x8x16xf32> to vector<8x16xf32>
    %cst_35 = arith.constant dense<0.000000e+00> : vector<8x1024xf32>
    %63 = tpu.matmul %62, %60, %cst_35 {dimension_numbers = #tpu.dot_dimension_numbers<[1], [0], [0], [1], [0, 0, 1, 1], [], []>} : vector<8x16xf32>, vector<16x1024xf32>, vector<8x1024xf32> -> vector<8x1024xf32>
    %cst_36 = arith.constant 0.000000e+00 : f32
    %64 = vector.shape_cast %33 : vector<1x1024xi1> to vector<1x1024xi1>
    %65 = vector.broadcast %64 : vector<1x1024xi1> to vector<8x1024xi1>
    %66 = vector.broadcast %cst_36 : f32 to vector<8x1024xf32>
    %67 = arith.select %65, %63, %66 : vector<8x1024xi1>, vector<8x1024xf32>
    %68 = arith.addf %59, %67 : vector<8x1024xf32>
    %c0_37 = arith.constant 0 : index
    %c128_38 = arith.constant 128 : index
    %69 = vector.load %arg7[%c0_37, %c128_38] : memref<16x1280xf32, #tpu.memory_space<vmem>>, vector<16x1024xf32>
    %c4 = arith.constant 4 : index
    %c0_39 = arith.constant 0 : index
    %c0_40 = arith.constant 0 : index
    %70 = vector.load %arg3[%c4, %c0_39, %c0_40] : memref<9x8x16xf32, #tpu.memory_space<vmem>>, vector<1x8x16xf32>
    %71 = vector.shape_cast %70 : vector<1x8x16xf32> to vector<8x16xf32>
    %cst_41 = arith.constant dense<0.000000e+00> : vector<8x1024xf32>
    %72 = tpu.matmul %71, %69, %cst_41 {dimension_numbers = #tpu.dot_dimension_numbers<[1], [0], [0], [1], [0, 0, 1, 1], [], []>} : vector<8x16xf32>, vector<16x1024xf32>, vector<8x1024xf32> -> vector<8x1024xf32>
    %73 = arith.addf %68, %72 : vector<8x1024xf32>
    %c0_42 = arith.constant 0 : index
    %c129 = arith.constant 129 : index
    %74 = vector.load %arg7[%c0_42, %c129] : memref<16x1280xf32, #tpu.memory_space<vmem>>, vector<16x1024xf32>
    %c5 = arith.constant 5 : index
    %c0_43 = arith.constant 0 : index
    %c0_44 = arith.constant 0 : index
    %75 = vector.load %arg3[%c5, %c0_43, %c0_44] : memref<9x8x16xf32, #tpu.memory_space<vmem>>, vector<1x8x16xf32>
    %76 = vector.shape_cast %75 : vector<1x8x16xf32> to vector<8x16xf32>
    %cst_45 = arith.constant dense<0.000000e+00> : vector<8x1024xf32>
    %77 = tpu.matmul %76, %74, %cst_45 {dimension_numbers = #tpu.dot_dimension_numbers<[1], [0], [0], [1], [0, 0, 1, 1], [], []>} : vector<8x16xf32>, vector<16x1024xf32>, vector<8x1024xf32> -> vector<8x1024xf32>
    %cst_46 = arith.constant 0.000000e+00 : f32
    %78 = vector.shape_cast %35 : vector<1x1024xi1> to vector<1x1024xi1>
    %79 = vector.broadcast %78 : vector<1x1024xi1> to vector<8x1024xi1>
    %80 = vector.broadcast %cst_46 : f32 to vector<8x1024xf32>
    %81 = arith.select %79, %77, %80 : vector<8x1024xi1>, vector<8x1024xf32>
    %82 = arith.addf %73, %81 : vector<8x1024xf32>
    %c0_47 = arith.constant 0 : index
    %c159 = arith.constant 159 : index
    %83 = vector.load %arg7[%c0_47, %c159] : memref<16x1280xf32, #tpu.memory_space<vmem>>, vector<16x1024xf32>
    %c6 = arith.constant 6 : index
    %c0_48 = arith.constant 0 : index
    %c0_49 = arith.constant 0 : index
    %84 = vector.load %arg3[%c6, %c0_48, %c0_49] : memref<9x8x16xf32, #tpu.memory_space<vmem>>, vector<1x8x16xf32>
    %85 = vector.shape_cast %84 : vector<1x8x16xf32> to vector<8x16xf32>
    %cst_50 = arith.constant dense<0.000000e+00> : vector<8x1024xf32>
    %86 = tpu.matmul %85, %83, %cst_50 {dimension_numbers = #tpu.dot_dimension_numbers<[1], [0], [0], [1], [0, 0, 1, 1], [], []>} : vector<8x16xf32>, vector<16x1024xf32>, vector<8x1024xf32> -> vector<8x1024xf32>
    %cst_51 = arith.constant 0.000000e+00 : f32
    %87 = vector.shape_cast %33 : vector<1x1024xi1> to vector<1x1024xi1>
    %88 = vector.broadcast %87 : vector<1x1024xi1> to vector<8x1024xi1>
    %89 = vector.broadcast %cst_51 : f32 to vector<8x1024xf32>
    %90 = arith.select %88, %86, %89 : vector<8x1024xi1>, vector<8x1024xf32>
    %91 = arith.addf %82, %90 : vector<8x1024xf32>
    %c0_52 = arith.constant 0 : index
    %c160 = arith.constant 160 : index
    %92 = vector.load %arg7[%c0_52, %c160] : memref<16x1280xf32, #tpu.memory_space<vmem>>, vector<16x1024xf32>
    %c7 = arith.constant 7 : index
    %c0_53 = arith.constant 0 : index
    %c0_54 = arith.constant 0 : index
    %93 = vector.load %arg3[%c7, %c0_53, %c0_54] : memref<9x8x16xf32, #tpu.memory_space<vmem>>, vector<1x8x16xf32>
    %94 = vector.shape_cast %93 : vector<1x8x16xf32> to vector<8x16xf32>
    %cst_55 = arith.constant dense<0.000000e+00> : vector<8x1024xf32>
    %95 = tpu.matmul %94, %92, %cst_55 {dimension_numbers = #tpu.dot_dimension_numbers<[1], [0], [0], [1], [0, 0, 1, 1], [], []>} : vector<8x16xf32>, vector<16x1024xf32>, vector<8x1024xf32> -> vector<8x1024xf32>
    %96 = arith.addf %91, %95 : vector<8x1024xf32>
    %c0_56 = arith.constant 0 : index
    %c161 = arith.constant 161 : index
    %97 = vector.load %arg7[%c0_56, %c161] : memref<16x1280xf32, #tpu.memory_space<vmem>>, vector<16x1024xf32>
    %c8_57 = arith.constant 8 : index
    %c0_58 = arith.constant 0 : index
    %c0_59 = arith.constant 0 : index
    %98 = vector.load %arg3[%c8_57, %c0_58, %c0_59] : memref<9x8x16xf32, #tpu.memory_space<vmem>>, vector<1x8x16xf32>
    %99 = vector.shape_cast %98 : vector<1x8x16xf32> to vector<8x16xf32>
    %cst_60 = arith.constant dense<0.000000e+00> : vector<8x1024xf32>
    %100 = tpu.matmul %99, %97, %cst_60 {dimension_numbers = #tpu.dot_dimension_numbers<[1], [0], [0], [1], [0, 0, 1, 1], [], []>} : vector<8x16xf32>, vector<16x1024xf32>, vector<8x1024xf32> -> vector<8x1024xf32>
    %cst_61 = arith.constant 0.000000e+00 : f32
    %101 = vector.shape_cast %35 : vector<1x1024xi1> to vector<1x1024xi1>
    %102 = vector.broadcast %101 : vector<1x1024xi1> to vector<8x1024xi1>
    %103 = vector.broadcast %cst_61 : f32 to vector<8x1024xf32>
    %104 = arith.select %102, %100, %103 : vector<8x1024xi1>, vector<8x1024xf32>
    %105 = arith.addf %96, %104 : vector<8x1024xf32>
    %c0_62 = arith.constant 0 : index
    %c0_63 = arith.constant 0 : index
    %106 = vector.load %arg4[%c0_62, %c0_63] : memref<8x1xf32, #tpu.memory_space<vmem>>, vector<8x1xf32>
    %107 = vector.broadcast %106 : vector<8x1xf32> to vector<8x1024xf32>
    %108 = arith.addf %105, %107 : vector<8x1024xf32>
    %109 = math.tanh %108 : vector<8x1024xf32>
    %c0_64 = arith.constant 0 : index
    %c0_65 = arith.constant 0 : index
    %c0_66 = arith.constant 0 : index
    %110 = vector.load %arg6[%c0_64, %c0_65, %c0_66] : memref<1x8x1024xf32, #tpu.memory_space<vmem>>, vector<1x8x1024xf32>
    %111 = vector.shape_cast %110 : vector<1x8x1024xf32> to vector<8x1024xf32>
    %112 = vector.shape_cast %109 : vector<8x1024xf32> to vector<1x8x1024xf32>
    tpu.vector_store %arg6[%c0_64, %c0_65, %c0_66], %112 {strides = array<i32>} : memref<1x8x1024xf32, #tpu.memory_space<vmem>>, vector<1x8x1024xf32>,
    return
  }
  func.func @transform_0(%arg0: i32) -> (i32, i32) {
    %c0_i32 = arith.constant 0 : i32
    %c0_i32_0 = arith.constant 0 : i32
    %c0_i32_1 = arith.constant 0 : i32
    return %c0_i32, %c0_i32_0 : i32, i32
  }
  func.func @transform_1(%arg0: i32) -> (i32, i32) {
    %c0_i32 = arith.constant 0 : i32
    %c0_i32_0 = arith.constant 0 : i32
    %c0_i32_1 = arith.constant 0 : i32
    return %c0_i32, %c0_i32_0 : i32, i32
  }
  func.func @transform_2(%arg0: i32) -> (i32, i32, i32) {
    %c0_i32 = arith.constant 0 : i32
    %c0_i32_0 = arith.constant 0 : i32
    %c0_i32_1 = arith.constant 0 : i32
    %c0_i32_2 = arith.constant 0 : i32
    return %c0_i32, %c0_i32_0, %c0_i32_1 : i32, i32, i32
  }
  func.func @transform_3(%arg0: i32) -> (i32, i32) {
    %c0_i32 = arith.constant 0 : i32
    %c0_i32_0 = arith.constant 0 : i32
    %c0_i32_1 = arith.constant 0 : i32
    return %c0_i32, %c0_i32_0 : i32, i32
  }
  func.func @transform_4(%arg0: i32) -> (i32, i32, i32) {
    %c0_i32 = arith.constant 0 : i32
    %c0_i32_0 = arith.constant 0 : i32
    %c0_i32_1 = arith.constant 0 : i32
    return %arg0, %c0_i32, %c0_i32_0 : i32, i32, i32
  }
  func.func @transform_5(%arg0: i32) -> (i32, i32, i32) {
    %c0_i32 = arith.constant 0 : i32
    %c0_i32_0 = arith.constant 0 : i32
    %c0_i32_1 = arith.constant 0 : i32
    return %arg0, %c0_i32, %c0_i32_0 : i32, i32, i32
  }
}

</mosaic_0001>

<llo_original>
// kernel: upblock_forward.1
$region0: #{upblock_forward.1}
  #allocation0 [shape = 'u32[]', space=smem, size = 0x4, offset = 0x4, fixed_abs, tag = 'smem constant byte address 0x4 - core index']
  #allocation1 [shape = 'u32[144,128]{1,0:T(1,128)}', space=vmem, size = 0x12000, scoped, tag = 'internal scratch']
  #allocation2 [shape = 'f32[16,1280]{1,0:T(8,128)}', space=vmem, size = 0x14000, scoped, tag = 'scratch operand']
  %s0 = inlined_call_operand.vmem [shape: bf16[16,64], index: 0, kind: input, shape index: {}]
  %s1 = inlined_call_operand.vmem [shape: f32[16,1], index: 1, kind: input, shape index: {}]
  %s2 = inlined_call_operand.vmem [shape: f32[9,8,16], index: 2, kind: input, shape index: {}]
  %s3 = inlined_call_operand.vmem [shape: f32[8,1], index: 3, kind: input, shape index: {}]
  %s4 = inlined_call_operand.vmem [shape: bf16[2,64,1024], index: 4, kind: input, shape index: {}]
  %s5 = inlined_call_operand.vmem [shape: f32[2,8,1024], index: 5, kind: output, shape index: {}]
  %s6 = sld [smem:[#allocation0]]
  $region53: #{upblock_forward.1} parent=0
    _
  %s8 = ssub.s32 1, %s6
  %s9 = scalar_select 0, %s8, %s6
  loop: start=0, step=1, limit=4
  $region2: #{upblock_forward.1} parent=0 // loop_pre_header
    _
  $region3: #{upblock_forward.1} parent=0 // loop_header
    %s11 = sphi 0, %s15
    %p12 = scmp.ge.s32.totalorder %s11, 4
    %s19 = sphi 0, %s19
    %s21 = sphi 0, %s19
    %s22 = sphi 0, %s21
    %s36 = sphi 0, %s22
    %s40 = sphi 0, %s40
    %s42 = sphi 0, %s40
    %s43 = sphi 0, %s42
    %s57 = sphi 0, %s43
    %s61 = sphi 0, %s61
    %s63 = sphi 0, %s61
    %s64 = sphi 0, %s63
    %s78 = sphi 0, %s64
    %s82 = sphi 0, %s82
    %s84 = sphi 0, %s82
    %s85 = sphi 0, %s84
    %s99 = sphi 0, %s85
    %s105 = sphi 0, %s107
    %s108 = sphi 0, %s105
    %s109 = sphi 0, %s108
    %s125 = sphi 0, %s109
    %s131 = sphi 0, %s133
    %s134 = sphi 0, %s131
    %s135 = sphi 0, %s134
    %s151 = sphi 0, %s135
  $region4: #{upblock_forward.1} parent=0 // loop_header_branch
    %14 = sbr.rel (%p12) target = $region8
  $region5: #{upblock_forward.1} parent=0 // loop_body
    %s16 = ssub.s32 %s11, 1
    %s17 = ssub.s32 %s11, 2
    %s18 = sadd.s32 %s11, 1
    %s20 = sadd.s32 %s19, 1
    %p23 = scmp.eq.s32.totalorder %s11, 1
    %p24 = scmp.ne.s32.totalorder %s19, %s21
    %p25 = scmp.eq.s32.totalorder %s11, 0
    %p26 = por %p24, %p25
    %p27 = scmp.ne.s32.totalorder %s19, %s21
    %p28 = scmp.eq.s32.totalorder %s16, 1
    %p29 = por %p27, %p28
    %p30 = scmp.ne.s32.totalorder %s21, %s22
    %p31 = scmp.eq.s32.totalorder %s16, 0
    %p32 = por %p30, %p31
    %p33 = scmp.ne.s32.totalorder %s21, %s22
    %p34 = scmp.eq.s32.totalorder %s17, 1
    %p35 = por %p33, %p34
    %p37 = scmp.ne.s32.totalorder %s22, %s36
    %p38 = scmp.eq.s32.totalorder %s17, 0
    %p39 = por %p37, %p38
    %s41 = sadd.s32 %s40, 1
    %p44 = scmp.eq.s32.totalorder %s11, 1
    %p45 = scmp.ne.s32.totalorder %s40, %s42
    %p46 = scmp.eq.s32.totalorder %s11, 0
    %p47 = por %p45, %p46
    %p48 = scmp.ne.s32.totalorder %s40, %s42
    %p49 = scmp.eq.s32.totalorder %s16, 1
    %p50 = por %p48, %p49
    %p51 = scmp.ne.s32.totalorder %s42, %s43
    %p52 = scmp.eq.s32.totalorder %s16, 0
    %p53 = por %p51, %p52
    %p54 = scmp.ne.s32.totalorder %s42, %s43
    %p55 = scmp.eq.s32.totalorder %s17, 1
    %p56 = por %p54, %p55
    %p58 = scmp.ne.s32.totalorder %s43, %s57
    %p59 = scmp.eq.s32.totalorder %s17, 0
    %p60 = por %p58, %p59
    %s62 = sadd.s32 %s61, 1
    %p65 = scmp.eq.s32.totalorder %s11, 1
    %p66 = scmp.ne.s32.totalorder %s61, %s63
    %p67 = scmp.eq.s32.totalorder %s11, 0
    %p68 = por %p66, %p67
    %p69 = scmp.ne.s32.totalorder %s61, %s63
    %p70 = scmp.eq.s32.totalorder %s16, 1
    %p71 = por %p69, %p70
    %p72 = scmp.ne.s32.totalorder %s63, %s64
    %p73 = scmp.eq.s32.totalorder %s16, 0
    %p74 = por %p72, %p73
    %p75 = scmp.ne.s32.totalorder %s63, %s64
    %p76 = scmp.eq.s32.totalorder %s17, 1
    %p77 = por %p75, %p76
    %p79 = scmp.ne.s32.totalorder %s64, %s78
    %p80 = scmp.eq.s32.totalorder %s17, 0
    %p81 = por %p79, %p80
    %s83 = sadd.s32 %s82, 1
    %p86 = scmp.eq.s32.totalorder %s11, 1
    %p87 = scmp.ne.s32.totalorder %s82, %s84
    %p88 = scmp.eq.s32.totalorder %s11, 0
    %p89 = por %p87, %p88
    %p90 = scmp.ne.s32.totalorder %s82, %s84
    %p91 = scmp.eq.s32.totalorder %s16, 1
    %p92 = por %p90, %p91
    %p93 = scmp.ne.s32.totalorder %s84, %s85
    %p94 = scmp.eq.s32.totalorder %s16, 0
    %p95 = por %p93, %p94
    %p96 = scmp.ne.s32.totalorder %s84, %s85
    %p97 = scmp.eq.s32.totalorder %s17, 1
    %p98 = por %p96, %p97
    %p100 = scmp.ne.s32.totalorder %s85, %s99
    %p101 = scmp.eq.s32.totalorder %s17, 0
    %p102 = por %p100, %p101
    %s103 = ssub.s32 %s11, %s18
    %p104 = scmp.eq.s32.totalorder %s103, 0
    %s106 = sadd.s32 %s105, 1
    %s107 = scalar_select %p104, %s105, %s106
    %p110 = pneg %p104
    %p111 = scmp.eq.s32.totalorder %s11, 1
    %p112 = por %p110, %p111
    %p113 = scmp.ne.s32.totalorder %s105, %s108
    %p114 = scmp.eq.s32.totalorder %s11, 0
    %p115 = por %p113, %p114
    %p116 = scmp.ne.s32.totalorder %s105, %s108
    %p117 = scmp.eq.s32.totalorder %s16, 1
    %p118 = por %p116, %p117
    %p119 = scmp.ne.s32.totalorder %s108, %s109
    %p120 = scmp.eq.s32.totalorder %s16, 0
    %p121 = por %p119, %p120
    %p122 = scmp.ne.s32.totalorder %s108, %s109
    %p123 = scmp.eq.s32.totalorder %s17, 1
    %p124 = por %p122, %p123
    %p126 = scmp.ne.s32.totalorder %s109, %s125
    %p127 = scmp.eq.s32.totalorder %s17, 0
    %p128 = por %p126, %p127
    %s129 = ssub.s32 %s11, %s18
    %p130 = scmp.eq.s32.totalorder %s129, 0
    %s132 = sadd.s32 %s131, 1
    %s133 = scalar_select %p130, %s131, %s132
    %p136 = pneg %p130
    %p137 = scmp.eq.s32.totalorder %s11, 1
    %p138 = por %p136, %p137
    %p139 = scmp.ne.s32.totalorder %s131, %s134
    %p140 = scmp.eq.s32.totalorder %s11, 0
    %p141 = por %p139, %p140
    %p142 = scmp.ne.s32.totalorder %s131, %s134
    %p143 = scmp.eq.s32.totalorder %s16, 1
    %p144 = por %p142, %p143
    %p145 = scmp.ne.s32.totalorder %s134, %s135
    %p146 = scmp.eq.s32.totalorder %s16, 0
    %p147 = por %p145, %p146
    %p148 = scmp.ne.s32.totalorder %s134, %s135
    %p149 = scmp.eq.s32.totalorder %s17, 1
    %p150 = por %p148, %p149
    %p152 = scmp.ne.s32.totalorder %s135, %s151
    %p153 = scmp.eq.s32.totalorder %s17, 0
    %p154 = por %p152, %p153
    %p155 = scmp.le.s32.totalorder 1, %s11
    %p156 = scmp.lt.s32.totalorder %s11, 3
    %p157 = pnand %p155, %p156
    %p158 = pneg %p157
    // Predicated region
    $region9: #{upblock_forward.1} parent=5 // pred_check
      _
    $region10: #{upblock_forward.1} parent=5 // pred_check_branch
      %160 = sbr.rel (%p157) target = $region12
    $region11: #{upblock_forward.1} parent=5 // pred_region
      %s161 = ssub.s32 %s11, 1
      // Predicated region
      $region13: #{upblock_forward.1} parent=11 // pred_check
        %p162 = pneg %p32
      $region14: #{upblock_forward.1} parent=11 // pred_check_branch
        %164 = sbr.rel (%p162) target = $region16
      $region15: #{upblock_forward.1} parent=11 // pred_region
        _
      $region16: #{upblock_forward.1} parent=11 // pred_fallthru
        _
      // Predicated region
      $region17: #{upblock_forward.1} parent=11 // pred_check
        %p165 = pneg %p53
      $region18: #{upblock_forward.1} parent=11 // pred_check_branch
        %167 = sbr.rel (%p165) target = $region20
      $region19: #{upblock_forward.1} parent=11 // pred_region
        _
      $region20: #{upblock_forward.1} parent=11 // pred_fallthru
        _
      // Predicated region
      $region21: #{upblock_forward.1} parent=11 // pred_check
        %p168 = pneg %p74
      $region22: #{upblock_forward.1} parent=11 // pred_check_branch
        %170 = sbr.rel (%p168) target = $region24
      $region23: #{upblock_forward.1} parent=11 // pred_region
        _
      $region24: #{upblock_forward.1} parent=11 // pred_fallthru
        _
      // Predicated region
      $region25: #{upblock_forward.1} parent=11 // pred_check
        %p171 = pneg %p95
      $region26: #{upblock_forward.1} parent=11 // pred_check_branch
        %173 = sbr.rel (%p171) target = $region28
      $region27: #{upblock_forward.1} parent=11 // pred_region
        _
      $region28: #{upblock_forward.1} parent=11 // pred_fallthru
        _
    $region12: #{upblock_forward.1} parent=5 // pred_fallthru
      _
    %p174 = scmp.lt.s32.totalorder %s11, 2
    // Predicated region
    $region29: #{upblock_forward.1} parent=5 // pred_check
      %p175 = pneg %p174
    $region30: #{upblock_forward.1} parent=5 // pred_check_branch
      %177 = sbr.rel (%p175) target = $region32
    $region31: #{upblock_forward.1} parent=5 // pred_region
      // Predicated region
      $region33: #{upblock_forward.1} parent=31 // pred_check
        %p178 = pneg %p115
      $region34: #{upblock_forward.1} parent=31 // pred_check_branch
        %180 = sbr.rel (%p178) target = $region36
      $region35: #{upblock_forward.1} parent=31 // pred_region
        %p181 = scmp.lt.s32.totalorder %s11, 1
        %s182 = scalar_select %p181, %s11, 1
        %s183 = smul.addr %s182, 64
        %s184 = smul.addr %s183, 4
        %s185 = scalar_lea.vmem %s4, %s184
      $region36: #{upblock_forward.1} parent=31 // pred_fallthru
        _
    $region32: #{upblock_forward.1} parent=5 // pred_fallthru
      _
    %p186 = scmp.le.s32.totalorder 1, %s11
    %p187 = scmp.lt.s32.totalorder %s11, 3
    %p188 = pnand %p186, %p187
    %p189 = pneg %p188
    // Predicated region
    $region37: #{upblock_forward.1} parent=5 // pred_check
      _
    $region38: #{upblock_forward.1} parent=5 // pred_check_branch
      %191 = sbr.rel (%p188) target = $region40
    $region39: #{upblock_forward.1} parent=5 // pred_region
      %s192 = ssub.s32 %s11, 1
      %p193 = pneg %p32
      %p194 = pneg %p29
      %p195 = pneg %p53
      %p196 = pneg %p50
      %p197 = pneg %p74
      %p198 = pneg %p71
      %p199 = pneg %p95
      %p200 = pneg %p92
      %p201 = scmp.lt.s32.totalorder %s16, 1
      %s202 = scalar_select %p201, %s16, 1
      %s203 = smul.addr %s202, 64
      %s204 = smul.addr %s203, 4
      %s205 = scalar_lea.vmem %s4, %s204
      %p206 = pneg %p121
      %p207 = pneg %p118
      %p208 = pneg %p147
      %p209 = pneg %p144
      %p210 = scmp.lt.s32.totalorder %s16, 1
      %s211 = scalar_select %p210, %s16, 1
      %s212 = smul.addr %s211, 8
      %s213 = smul.addr %s212, 8
      %s214 = scalar_lea.vmem %s5, %s213
      %p215 = scmp.lt.s32.totalorder %s16, 1
      %s216 = scalar_select %p215, %s16, 1
      %s217 = smul.addr %s216, 64
      %s218 = smul.addr %s217, 4
      %s219 = scalar_lea.vmem %s4, %s218
      %p220 = scmp.lt.s32.totalorder %s16, 1
      %s221 = scalar_select %p220, %s16, 1
      %s222 = smul.addr %s221, 8
      %s223 = smul.addr %s222, 8
      %s224 = scalar_lea.vmem %s5, %s223
      %v226 = vld [vmem:[%s0] sm:$0xf]
      %v227 = vld [vmem:[%s0 + $0x4] sm:$0xf]
      %v228 = vld [vmem:[%s219] sm:$0xff]
      %v229 = vld [vmem:[%s219 + $0x8] sm:$0xff]
      %v230 = vld [vmem:[%s219 + $0x10] sm:$0xff]
      %v231 = vld [vmem:[%s219 + $0x18] sm:$0xff]
      %v232 = vld [vmem:[%s219 + $0x20] sm:$0xff]
      %v233 = vld [vmem:[%s219 + $0x28] sm:$0xff]
      %v234 = vld [vmem:[%s219 + $0x30] sm:$0xff]
      %v235 = vld [vmem:[%s219 + $0x38] sm:$0xff]
      %v236 = vld [vmem:[%s219 + $0x40] sm:$0xff]
      %v237 = vld [vmem:[%s219 + $0x48] sm:$0xff]
      %v238 = vld [vmem:[%s219 + $0x50] sm:$0xff]
      %v239 = vld [vmem:[%s219 + $0x58] sm:$0xff]
      %v240 = vld [vmem:[%s219 + $0x60] sm:$0xff]
      %v241 = vld [vmem:[%s219 + $0x68] sm:$0xff]
      %v242 = vld [vmem:[%s219 + $0x70] sm:$0xff]
      %v243 = vld [vmem:[%s219 + $0x78] sm:$0xff]
      %v244 = vld [vmem:[%s219 + $0x80] sm:$0xff]
      %v245 = vld [vmem:[%s219 + $0x88] sm:$0xff]
      %v246 = vld [vmem:[%s219 + $0x90] sm:$0xff]
      %v247 = vld [vmem:[%s219 + $0x98] sm:$0xff]
      %v248 = vld [vmem:[%s219 + $0xa0] sm:$0xff]
      %v249 = vld [vmem:[%s219 + $0xa8] sm:$0xff]
      %v250 = vld [vmem:[%s219 + $0xb0] sm:$0xff]
      %v251 = vld [vmem:[%s219 + $0xb8] sm:$0xff]
      %v252 = vld [vmem:[%s219 + $0xc0] sm:$0xff]
      %v253 = vld [vmem:[%s219 + $0xc8] sm:$0xff]
      %v254 = vld [vmem:[%s219 + $0xd0] sm:$0xff]
      %v255 = vld [vmem:[%s219 + $0xd8] sm:$0xff]
      %v256 = vld [vmem:[%s219 + $0xe0] sm:$0xff]
      %v257 = vld [vmem:[%s219 + $0xe8] sm:$0xff]
      %v258 = vld [vmem:[%s219 + $0xf0] sm:$0xff]
      %v259 = vld [vmem:[%s219 + $0xf8] sm:$0xff]
      %v260 = vld [vmem:[%s1] sm:$0xff]
      %v261 = vld [vmem:[%s1 + $0x8] sm:$0xff]
      %263 = vset.pattern.permute.xlu0 0
      %264 = vperm.xlu0 %263, %v260
      %v265 = vpop.permute.xlu0 %264
      %268 = vset.pattern.permute.xlu0 0
      %269 = vperm.xlu0 %268, %v261
      %v270 = vpop.permute.xlu0 %269
      %v274 = vunpack.c.l.b16 %v226
      %v275 = vunpack.c.l.b16 %v227
      %v276 = vpack.c.b16 %v275, %v274
      %v309 = vunpack.c.l.b16 %v228
      %v310 = vunpack.c.h.b16 %v228
      %v311 = vunpack.c.l.b16 %v229
      %v312 = vunpack.c.h.b16 %v229
      %v313 = vunpack.c.l.b16 %v230
      %v314 = vunpack.c.h.b16 %v230
      %v315 = vunpack.c.l.b16 %v231
      %v316 = vunpack.c.h.b16 %v231
      %v317 = vunpack.c.l.b16 %v232
      %v318 = vunpack.c.h.b16 %v232
      %v319 = vunpack.c.l.b16 %v233
      %v320 = vunpack.c.h.b16 %v233
      %v321 = vunpack.c.l.b16 %v234
      %v322 = vunpack.c.h.b16 %v234
      %v323 = vunpack.c.l.b16 %v235
      %v324 = vunpack.c.h.b16 %v235
      %v325 = vunpack.c.l.b16 %v236
      %v326 = vunpack.c.h.b16 %v236
      %v327 = vunpack.c.l.b16 %v237
      %v328 = vunpack.c.h.b16 %v237
      %v329 = vunpack.c.l.b16 %v238
      %v330 = vunpack.c.h.b16 %v238
      %v331 = vunpack.c.l.b16 %v239
      %v332 = vunpack.c.h.b16 %v239
      %v333 = vunpack.c.l.b16 %v240
      %v334 = vunpack.c.h.b16 %v240
      %v335 = vunpack.c.l.b16 %v241
      %v336 = vunpack.c.h.b16 %v241
      %v337 = vunpack.c.l.b16 %v242
      %v338 = vunpack.c.h.b16 %v242
      %v339 = vunpack.c.l.b16 %v243
      %v340 = vunpack.c.h.b16 %v243
      %v341 = vunpack.c.l.b16 %v244
      %v342 = vunpack.c.h.b16 %v244
      %v343 = vunpack.c.l.b16 %v245
      %v344 = vunpack.c.h.b16 %v245
      %v345 = vunpack.c.l.b16 %v246
      %v346 = vunpack.c.h.b16 %v246
      %v347 = vunpack.c.l.b16 %v247
      %v348 = vunpack.c.h.b16 %v247
      %v349 = vunpack.c.l.b16 %v248
      %v350 = vunpack.c.h.b16 %v248
      %v351 = vunpack.c.l.b16 %v249
      %v352 = vunpack.c.h.b16 %v249
      %v353 = vunpack.c.l.b16 %v250
      %v354 = vunpack.c.h.b16 %v250
      %v355 = vunpack.c.l.b16 %v251
      %v356 = vunpack.c.h.b16 %v251
      %v357 = vunpack.c.l.b16 %v252
      %v358 = vunpack.c.h.b16 %v252
      %v359 = vunpack.c.l.b16 %v253
      %v360 = vunpack.c.h.b16 %v253
      %v361 = vunpack.c.l.b16 %v254
      %v362 = vunpack.c.h.b16 %v254
      %v363 = vunpack.c.l.b16 %v255
      %v364 = vunpack.c.h.b16 %v255
      %v365 = vunpack.c.l.b16 %v256
      %v366 = vunpack.c.h.b16 %v256
      %v367 = vunpack.c.l.b16 %v257
      %v368 = vunpack.c.h.b16 %v257
      %v369 = vunpack.c.l.b16 %v258
      %v370 = vunpack.c.h.b16 %v258
      %v371 = vunpack.c.l.b16 %v259
      %v372 = vunpack.c.h.b16 %v259
      %v373 = vpack.c.b16 %v317, %v309
      %v374 = vpack.c.b16 %v318, %v310
      %v375 = vpack.c.b16 %v319, %v311
      %v376 = vpack.c.b16 %v320, %v312
      %v377 = vpack.c.b16 %v321, %v313
      %v378 = vpack.c.b16 %v322, %v314
      %v379 = vpack.c.b16 %v323, %v315
      %v380 = vpack.c.b16 %v324, %v316
      %v381 = vpack.c.b16 %v333, %v325
      %v382 = vpack.c.b16 %v334, %v326
      %v383 = vpack.c.b16 %v335, %v327
      %v384 = vpack.c.b16 %v336, %v328
      %v385 = vpack.c.b16 %v337, %v329
      %v386 = vpack.c.b16 %v338, %v330
      %v387 = vpack.c.b16 %v339, %v331
      %v388 = vpack.c.b16 %v340, %v332
      %v389 = vpack.c.b16 %v349, %v341
      %v390 = vpack.c.b16 %v350, %v342
      %v391 = vpack.c.b16 %v351, %v343
      %v392 = vpack.c.b16 %v352, %v344
      %v393 = vpack.c.b16 %v353, %v345
      %v394 = vpack.c.b16 %v354, %v346
      %v395 = vpack.c.b16 %v355, %v347
      %v396 = vpack.c.b16 %v356, %v348
      %v397 = vpack.c.b16 %v365, %v357
      %v398 = vpack.c.b16 %v366, %v358
      %v399 = vpack.c.b16 %v367, %v359
      %v400 = vpack.c.b16 %v368, %v360
      %v401 = vpack.c.b16 %v369, %v361
      %v402 = vpack.c.b16 %v370, %v362
      %v403 = vpack.c.b16 %v371, %v363
      %v404 = vpack.c.b16 %v372, %v364
      %vm437 = vcmask 523264
      %v439 = vsel %vm437, %v276, 0
      %441 = vmatprep.subr.bf16.mxu0 0
      %442 = vmatpush1.bf16.msra.mxu0 0
      %443 = vmatprep.subr.bf16.mxu0 0
      %444 = vmatpush1.bf16.msra.mxu0 0
      %445 = vmatprep.subr.bf16.mxu0 0
      %446 = vmatpush1.bf16.msra.mxu0 0
      %447 = vmatprep.subr.bf16.mxu0 0
      %448 = vmatpush1.bf16.msra.mxu0 0
      %449 = vmatprep.subr.bf16.mxu0 %v398
      %450 = vmatpush1.bf16.msra.mxu0 %v397
      %451 = vmatprep.subr.bf16.mxu0 %v390
      %452 = vmatpush1.bf16.msra.mxu0 %v389
      %453 = vmatprep.subr.bf16.mxu0 %v382
      %454 = vmatpush1.bf16.msra.mxu0 %v381
      %455 = vmatprep.subr.bf16.mxu0 %v374
      %456 = vmatpush1.bf16.msra.mxu0 %v373
      %457 = vmatprep.subr.bf16.mxu0 0
      %458 = vmatpush2.bf16.msra.mxu0 0
      %459 = vmatprep.subr.bf16.mxu0 0
      %460 = vmatpush2.bf16.msra.mxu0 0
      %461 = vmatprep.subr.bf16.mxu0 0
      %462 = vmatpush2.bf16.msra.mxu0 0
      %463 = vmatprep.subr.bf16.mxu0 0
      %464 = vmatpush2.bf16.msra.mxu0 0
      %465 = vmatprep.subr.bf16.mxu0 0
      %466 = vmatpush2.bf16.msra.mxu0 0
      %467 = vmatprep.subr.bf16.mxu0 0
      %468 = vmatpush2.bf16.msra.mxu0 0
      %469 = vmatprep.subr.bf16.mxu0 0
      %470 = vmatpush2.bf16.msra.mxu0 0
      %471 = vmatprep.subr.bf16.mxu0 0
      %472 = vmatpush2.bf16.msra.mxu0 0
      %473 = vmatprep.mubr.bf16.mxu0 0
      %474 = vmatmul.mubr.bf16.gmra.mxu0 %v439
      %v475 = vpop.f32.mrf.mxu0
      %v476 = vadd.f32 %v265, %v475
      %v477 = vpop.f32.mrf.mxu0
      %v478 = vadd.f32 %v265, %v477
      %v479 = vpop.f32.mrf.mxu0
      %v480 = vadd.f32 %v270, %v479
      %v481 = vpop.f32.mrf.mxu0
      %v482 = vadd.f32 %v270, %v481
      %483 = vdwg.mxu0
      %484 = vmatprep.subr.bf16.mxu0 0
      %485 = vmatpush1.bf16.msra.mxu0 0
      %486 = vmatprep.subr.bf16.mxu0 0
      %487 = vmatpush1.bf16.msra.mxu0 0
      %488 = vmatprep.subr.bf16.mxu0 0
      %489 = vmatpush1.bf16.msra.mxu0 0
      %490 = vmatprep.subr.bf16.mxu0 0
      %491 = vmatpush1.bf16.msra.mxu0 0
      %492 = vmatprep.subr.bf16.mxu0 %v400
      %493 = vmatpush1.bf16.msra.mxu0 %v399
      %494 = vmatprep.subr.bf16.mxu0 %v392
      %495 = vmatpush1.bf16.msra.mxu0 %v391
      %496 = vmatprep.subr.bf16.mxu0 %v384
      %497 = vmatpush1.bf16.msra.mxu0 %v383
      %498 = vmatprep.subr.bf16.mxu0 %v376
      %499 = vmatpush1.bf16.msra.mxu0 %v375
      %500 = vmatprep.subr.bf16.mxu0 0
      %501 = vmatpush2.bf16.msra.mxu0 0
      %502 = vmatprep.subr.bf16.mxu0 0
      %503 = vmatpush2.bf16.msra.mxu0 0
      %504 = vmatprep.subr.bf16.mxu0 0
      %505 = vmatpush2.bf16.msra.mxu0 0
      %506 = vmatprep.subr.bf16.mxu0 0
      %507 = vmatpush2.bf16.msra.mxu0 0
      %508 = vmatprep.subr.bf16.mxu0 0
      %509 = vmatpush2.bf16.msra.mxu0 0
      %510 = vmatprep.subr.bf16.mxu0 0
      %511 = vmatpush2.bf16.msra.mxu0 0
      %512 = vmatprep.subr.bf16.mxu0 0
      %513 = vmatpush2.bf16.msra.mxu0 0
      %514 = vmatprep.subr.bf16.mxu0 0
      %515 = vmatpush2.bf16.msra.mxu0 0
      %516 = vmatprep.mubr.bf16.mxu0 0
      %517 = vmatmul.mubr.bf16.gmra.mxu0 %v439
      %v518 = vpop.f32.mrf.mxu0
      %v519 = vadd.f32 %v265, %v518
      %v520 = vpop.f32.mrf.mxu0
      %v521 = vadd.f32 %v265, %v520
      %v522 = vpop.f32.mrf.mxu0
      %v523 = vadd.f32 %v270, %v522
      %v524 = vpop.f32.mrf.mxu0
      %v525 = vadd.f32 %v270, %v524
      %526 = vdwg.mxu0
      %527 = vmatprep.subr.bf16.mxu0 0
      %528 = vmatpush1.bf16.msra.mxu0 0
      %529 = vmatprep.subr.bf16.mxu0 0
      %530 = vmatpush1.bf16.msra.mxu0 0
      %531 = vmatprep.subr.bf16.mxu0 0
      %532 = vmatpush1.bf16.msra.mxu0 0
      %533 = vmatprep.subr.bf16.mxu0 0
      %534 = vmatpush1.bf16.msra.mxu0 0
      %535 = vmatprep.subr.bf16.mxu0 %v402
      %536 = vmatpush1.bf16.msra.mxu0 %v401
      %537 = vmatprep.subr.bf16.mxu0 %v394
      %538 = vmatpush1.bf16.msra.mxu0 %v393
      %539 = vmatprep.subr.bf16.mxu0 %v386
      %540 = vmatpush1.bf16.msra.mxu0 %v385
      %541 = vmatprep.subr.bf16.mxu0 %v378
      %542 = vmatpush1.bf16.msra.mxu0 %v377
      %543 = vmatprep.subr.bf16.mxu0 0
      %544 = vmatpush2.bf16.msra.mxu0 0
      %545 = vmatprep.subr.bf16.mxu0 0
      %546 = vmatpush2.bf16.msra.mxu0 0
      %547 = vmatprep.subr.bf16.mxu0 0
      %548 = vmatpush2.bf16.msra.mxu0 0
      %549 = vmatprep.subr.bf16.mxu0 0
      %550 = vmatpush2.bf16.msra.mxu0 0
      %551 = vmatprep.subr.bf16.mxu0 0
      %552 = vmatpush2.bf16.msra.mxu0 0
      %553 = vmatprep.subr.bf16.mxu0 0
      %554 = vmatpush2.bf16.msra.mxu0 0
      %555 = vmatprep.subr.bf16.mxu0 0
      %556 = vmatpush2.bf16.msra.mxu0 0
      %557 = vmatprep.subr.bf16.mxu0 0
      %558 = vmatpush2.bf16.msra.mxu0 0
      %559 = vmatprep.mubr.bf16.mxu0 0
      %560 = vmatmul.mubr.bf16.gmra.mxu0 %v439
      %v561 = vpop.f32.mrf.mxu0
      %v562 = vadd.f32 %v265, %v561
      %v563 = vpop.f32.mrf.mxu0
      %v564 = vadd.f32 %v265, %v563
      %v565 = vpop.f32.mrf.mxu0
      %v566 = vadd.f32 %v270, %v565
      %v567 = vpop.f32.mrf.mxu0
      %v568 = vadd.f32 %v270, %v567
      %569 = vdwg.mxu0
      %570 = vmatprep.subr.bf16.mxu0 0
      %571 = vmatpush1.bf16.msra.mxu0 0
      %572 = vmatprep.subr.bf16.mxu0 0
      %573 = vmatpush1.bf16.msra.mxu0 0
      %574 = vmatprep.subr.bf16.mxu0 0
      %575 = vmatpush1.bf16.msra.mxu0 0
      %576 = vmatprep.subr.bf16.mxu0 0
      %577 = vmatpush1.bf16.msra.mxu0 0
      %578 = vmatprep.subr.bf16.mxu0 %v404
      %579 = vmatpush1.bf16.msra.mxu0 %v403
      %580 = vmatprep.subr.bf16.mxu0 %v396
      %581 = vmatpush1.bf16.msra.mxu0 %v395
      %582 = vmatprep.subr.bf16.mxu0 %v388
      %583 = vmatpush1.bf16.msra.mxu0 %v387
      %584 = vmatprep.subr.bf16.mxu0 %v380
      %585 = vmatpush1.bf16.msra.mxu0 %v379
      %586 = vmatprep.subr.bf16.mxu0 0
      %587 = vmatpush2.bf16.msra.mxu0 0
      %588 = vmatprep.subr.bf16.mxu0 0
      %589 = vmatpush2.bf16.msra.mxu0 0
      %590 = vmatprep.subr.bf16.mxu0 0
      %591 = vmatpush2.bf16.msra.mxu0 0
      %592 = vmatprep.subr.bf16.mxu0 0
      %593 = vmatpush2.bf16.msra.mxu0 0
      %594 = vmatprep.subr.bf16.mxu0 0
      %595 = vmatpush2.bf16.msra.mxu0 0
      %596 = vmatprep.subr.bf16.mxu0 0
      %597 = vmatpush2.bf16.msra.mxu0 0
      %598 = vmatprep.subr.bf16.mxu0 0
      %599 = vmatpush2.bf16.msra.mxu0 0
      %600 = vmatprep.subr.bf16.mxu0 0
      %601 = vmatpush2.bf16.msra.mxu0 0
      %602 = vmatprep.mubr.bf16.mxu0 0
      %603 = vmatmul.mubr.bf16.gmra.mxu0 %v439
      %v604 = vpop.f32.mrf.mxu0
      %v605 = vadd.f32 %v265, %v604
      %v606 = vpop.f32.mrf.mxu0
      %v607 = vadd.f32 %v265, %v606
      %v608 = vpop.f32.mrf.mxu0
      %v609 = vadd.f32 %v270, %v608
      %v610 = vpop.f32.mrf.mxu0
      %v611 = vadd.f32 %v270, %v610
      %612 = vdwg.mxu0
      %613 = vst [vmem:[#allocation2] sm:$0xff] 0.0
      %614 = vst [vmem:[#allocation2 + $0x50] sm:$0xff] 0.0
      %615 = vst [vmem:[#allocation2 + $0x48] sm:$0xff] 0.0
      %616 = vst [vmem:[#allocation2 + $0x98] sm:$0xff] 0.0
      %v617 = vtanh.pop %v476
      %v618 = vtanh.pop %v478
      %v619 = vtanh.pop %v519
      %v620 = vtanh.pop %v521
      %v621 = vtanh.pop %v562
      %v622 = vtanh.pop %v564
      %v623 = vtanh.pop %v605
      %v624 = vtanh.pop %v607
      %625 = vst [vmem:[#allocation2 + $0x8] sm:$0xff] %v617
      %626 = vst [vmem:[#allocation2 + $0x10] sm:$0xff] %v618
      %627 = vst [vmem:[#allocation2 + $0x18] sm:$0xff] %v619
      %628 = vst [vmem:[#allocation2 + $0x20] sm:$0xff] %v620
      %629 = vst [vmem:[#allocation2 + $0x28] sm:$0xff] %v621
      %630 = vst [vmem:[#allocation2 + $0x30] sm:$0xff] %v622
      %631 = vst [vmem:[#allocation2 + $0x38] sm:$0xff] %v623
      %632 = vst [vmem:[#allocation2 + $0x40] sm:$0xff] %v624
      %633 = vst [vmem:[#allocation2 + $0x58] sm:$0xff] %v480
      %634 = vst [vmem:[#allocation2 + $0x60] sm:$0xff] %v482
      %635 = vst [vmem:[#allocation2 + $0x68] sm:$0xff] %v523
      %636 = vst [vmem:[#allocation2 + $0x70] sm:$0xff] %v525
      %637 = vst [vmem:[#allocation2 + $0x78] sm:$0xff] %v566
      %638 = vst [vmem:[#allocation2 + $0x80] sm:$0xff] %v568
      %639 = vst [vmem:[#allocation2 + $0x88] sm:$0xff] %v609
      %640 = vst [vmem:[#allocation2 + $0x90] sm:$0xff] %v611
      %v641 = vlaneseq
      %v642 = vand.u32 %v641, 127
      %v643 = vadd.s32 %v642, 128
      %v644 = vadd.s32 %v642, 256
      %v645 = vadd.s32 %v642, 384
      %v646 = vadd.s32 %v642, 512
      %v647 = vadd.s32 %v642, 640
      %v648 = vadd.s32 %v642, 768
      %v649 = vadd.s32 %v642, 896
      %vm650 = vcmp.lt.s32.totalorder %v642, 0
      %v651 = vsub.s32 0, %v642
      %v652 = vsel %vm650, %v651, %v642
      %v653 = vshrl.u32 %v652, 5
      %v654 = vand.u32 %v652, 31
      %v655 = vsub.s32 0, %v654
      %v656 = vsel %vm650, %v655, %v654
      %vm657 = vcmp.lt.s32.totalorder %v643, 0
      %v658 = vsub.s32 0, %v643
      %v659 = vsel %vm657, %v658, %v643
      %v660 = vshrl.u32 %v659, 5
      %v661 = vand.u32 %v659, 31
      %v662 = vsub.s32 0, %v661
      %v663 = vsel %vm657, %v662, %v661
      %vm664 = vcmp.lt.s32.totalorder %v644, 0
      %v665 = vsub.s32 0, %v644
      %v666 = vsel %vm664, %v665, %v644
      %v667 = vshrl.u32 %v666, 5
      %v668 = vand.u32 %v666, 31
      %v669 = vsub.s32 0, %v668
      %v670 = vsel %vm664, %v669, %v668
      %vm671 = vcmp.lt.s32.totalorder %v645, 0
      %v672 = vsub.s32 0, %v645
      %v673 = vsel %vm671, %v672, %v645
      %v674 = vshrl.u32 %v673, 5
      %v675 = vand.u32 %v673, 31
      %v676 = vsub.s32 0, %v675
      %v677 = vsel %vm671, %v676, %v675
      %vm678 = vcmp.lt.s32.totalorder %v646, 0
      %v679 = vsub.s32 0, %v646
      %v680 = vsel %vm678, %v679, %v646
      %v681 = vshrl.u32 %v680, 5
      %v682 = vand.u32 %v680, 31
      %v683 = vsub.s32 0, %v682
      %v684 = vsel %vm678, %v683, %v682
      %vm685 = vcmp.lt.s32.totalorder %v647, 0
      %v686 = vsub.s32 0, %v647
      %v687 = vsel %vm685, %v686, %v647
      %v688 = vshrl.u32 %v687, 5
      %v689 = vand.u32 %v687, 31
      %v690 = vsub.s32 0, %v689
      %v691 = vsel %vm685, %v690, %v689
      %vm692 = vcmp.lt.s32.totalorder %v648, 0
      %v693 = vsub.s32 0, %v648
      %v694 = vsel %vm692, %v693, %v648
      %v695 = vshrl.u32 %v694, 5
      %v696 = vand.u32 %v694, 31
      %v697 = vsub.s32 0, %v696
      %v698 = vsel %vm692, %v697, %v696
      %vm699 = vcmp.lt.s32.totalorder %v649, 0
      %v700 = vsub.s32 0, %v649
      %v701 = vsel %vm699, %v700, %v649
      %v702 = vshrl.u32 %v701, 5
      %v703 = vand.u32 %v701, 31
      %v704 = vsub.s32 0, %v703
      %v705 = vsel %vm699, %v704, %v703
      %vm706 = vcmp.ne.s32.totalorder %v656, 0
      %vm707 = vcmp.ne.s32.totalorder %v663, 0
      %vm708 = vcmp.ne.s32.totalorder %v670, 0
      %vm709 = vcmp.ne.s32.totalorder %v677, 0
      %vm710 = vcmp.ne.s32.totalorder %v684, 0
      %vm711 = vcmp.ne.s32.totalorder %v691, 0
      %vm712 = vcmp.ne.s32.totalorder %v698, 0
      %vm713 = vcmp.ne.s32.totalorder %v705, 0
      %vm714 = vcmp.lt.s32.totalorder %v656, 0
      %vm715 = vcmp.lt.s32.totalorder %v663, 0
      %vm716 = vcmp.lt.s32.totalorder %v670, 0
      %vm717 = vcmp.lt.s32.totalorder %v677, 0
      %vm718 = vcmp.lt.s32.totalorder %v684, 0
      %vm719 = vcmp.lt.s32.totalorder %v691, 0
      %vm720 = vcmp.lt.s32.totalorder %v698, 0
      %vm721 = vcmp.lt.s32.totalorder %v705, 0
      %vm722 = vmand %vm714, %vm706
      %vm723 = vmand %vm715, %vm707
      %vm724 = vmand %vm716, %vm708
      %vm725 = vmand %vm717, %vm709
      %vm726 = vmand %vm718, %vm710
      %vm727 = vmand %vm719, %vm711
      %vm728 = vmand %vm720, %vm712
      %vm729 = vmand %vm721, %vm713
      %v730 = vadd.s32 %v656, 32
      %v731 = vadd.s32 %v663, 32
      %v732 = vadd.s32 %v670, 32
      %v733 = vadd.s32 %v677, 32
      %v734 = vadd.s32 %v684, 32
      %v735 = vadd.s32 %v691, 32
      %v736 = vadd.s32 %v698, 32
      %v737 = vadd.s32 %v705, 32
      %v738 = vsel %vm722, %v730, %v656
      %v739 = vsel %vm723, %v731, %v663
      %v740 = vsel %vm724, %v732, %v670
      %v741 = vsel %vm725, %v733, %v677
      %v742 = vsel %vm726, %v734, %v684
      %v743 = vsel %vm727, %v735, %v691
      %v744 = vsel %vm728, %v736, %v698
      %v745 = vsel %vm729, %v737, %v705
      %vm746 = vcmp.gt.s32.totalorder %v738, 0
      %vm747 = vcmp.gt.s32.totalorder %v739, 0
      %vm748 = vcmp.gt.s32.totalorder %v740, 0
      %vm749 = vcmp.gt.s32.totalorder %v741, 0
      %vm750 = vcmp.gt.s32.totalorder %v742, 0
      %vm751 = vcmp.gt.s32.totalorder %v743, 0
      %vm752 = vcmp.gt.s32.totalorder %v744, 0
      %vm753 = vcmp.gt.s32.totalorder %v745, 0
      %vm754 = vcmp.lt.s32.totalorder %v738, 31
      %vm755 = vcmp.lt.s32.totalorder %v739, 31
      %vm756 = vcmp.lt.s32.totalorder %v740, 31
      %vm757 = vcmp.lt.s32.totalorder %v741, 31
      %vm758 = vcmp.lt.s32.totalorder %v742, 31
      %vm759 = vcmp.lt.s32.totalorder %v743, 31
      %vm760 = vcmp.lt.s32.totalorder %v744, 31
      %vm761 = vcmp.lt.s32.totalorder %v745, 31
      %v762 = vld [vmem:[#allocation2] sm:$0xff]
      %v763 = vld [vmem:[#allocation2 + $0x8] sm:$0xff]
      %v764 = vld [vmem:[#allocation2 + $0x10] sm:$0xff]
      %v765 = vld [vmem:[#allocation2 + $0x18] sm:$0xff]
      %v766 = vld [vmem:[#allocation2 + $0x20] sm:$0xff]
      %v767 = vld [vmem:[#allocation2 + $0x28] sm:$0xff]
      %v768 = vld [vmem:[#allocation2 + $0x30] sm:$0xff]
      %v769 = vld [vmem:[#allocation2 + $0x38] sm:$0xff]
      %v770 = vld [vmem:[#allocation2 + $0x40] sm:$0xff]
      %v771 = vld [vmem:[#allocation2 + $0x50] sm:$0xff]
      %v772 = vld [vmem:[#allocation2 + $0x58] sm:$0xff]
      %v773 = vld [vmem:[#allocation2 + $0x60] sm:$0xff]
      %v774 = vld [vmem:[#allocation2 + $0x68] sm:$0xff]
      %v775 = vld [vmem:[#allocation2 + $0x70] sm:$0xff]
      %v776 = vld [vmem:[#allocation2 + $0x78] sm:$0xff]
      %v777 = vld [vmem:[#allocation2 + $0x80] sm:$0xff]
      %v778 = vld [vmem:[#allocation2 + $0x88] sm:$0xff]
      %v779 = vld [vmem:[#allocation2 + $0x90] sm:$0xff]
      %v780 = vld [vmem:[%s2] sm:$0xff]
      %799 = vrot.lane.b32.xlu0 %v762, 33
      %v800 = vpop.permute.xlu0 %799
      %801 = vrot.lane.b32.xlu0 %v763, 33
      %v802 = vpop.permute.xlu0 %801
      %803 = vrot.lane.b32.xlu0 %v764, 33
      %v804 = vpop.permute.xlu0 %803
      %805 = vrot.lane.b32.xlu0 %v765, 33
      %v806 = vpop.permute.xlu0 %805
      %807 = vrot.lane.b32.xlu0 %v766, 33
      %v808 = vpop.permute.xlu0 %807
      %809 = vrot.lane.b32.xlu0 %v767, 33
      %v810 = vpop.permute.xlu0 %809
      %811 = vrot.lane.b32.xlu0 %v768, 33
      %v812 = vpop.permute.xlu0 %811
      %813 = vrot.lane.b32.xlu0 %v769, 33
      %v814 = vpop.permute.xlu0 %813
      %815 = vrot.lane.b32.xlu0 %v770, 33
      %v816 = vpop.permute.xlu0 %815
      %817 = vrot.lane.b32.xlu0 %v771, 33
      %v818 = vpop.permute.xlu0 %817
      %819 = vrot.lane.b32.xlu0 %v772, 33
      %v820 = vpop.permute.xlu0 %819
      %821 = vrot.lane.b32.xlu0 %v773, 33
      %v822 = vpop.permute.xlu0 %821
      %823 = vrot.lane.b32.xlu0 %v774, 33
      %v824 = vpop.permute.xlu0 %823
      %825 = vrot.lane.b32.xlu0 %v775, 33
      %v826 = vpop.permute.xlu0 %825
      %827 = vrot.lane.b32.xlu0 %v776, 33
      %v828 = vpop.permute.xlu0 %827
      %829 = vrot.lane.b32.xlu0 %v777, 33
      %v830 = vpop.permute.xlu0 %829
      %831 = vrot.lane.b32.xlu0 %v778, 33
      %v832 = vpop.permute.xlu0 %831
      %833 = vrot.lane.b32.xlu0 %v779, 33
      %v834 = vpop.permute.xlu0 %833
      %vm835 = vcmask 269312
      %v836 = vsel %vm835, %v800, %v802
      %v837 = vsel %vm835, %v802, %v804
      %v838 = vsel %vm835, %v804, %v806
      %v839 = vsel %vm835, %v806, %v808
      %v840 = vsel %vm835, %v808, %v810
      %v841 = vsel %vm835, %v810, %v812
      %v842 = vsel %vm835, %v812, %v814
      %v843 = vsel %vm835, %v814, %v816
      %v844 = vsel %vm835, %v818, %v820
      %v845 = vsel %vm835, %v820, %v822
      %v846 = vsel %vm835, %v822, %v824
      %v847 = vsel %vm835, %v824, %v826
      %v848 = vsel %vm835, %v826, %v828
      %v849 = vsel %vm835, %v828, %v830
      %v850 = vsel %vm835, %v830, %v832
      %v851 = vsel %vm835, %v832, %v834
      %vm868 = vcmask 130048
      %v870 = vsel %vm868, %v780, 0
      %872 = vmatprep.subr.mxu0 0.0
      %873 = vmatpush1.msra.mxu0 0.0
      %874 = vmatprep.subr.mxu0 0.0
      %875 = vmatpush1.msra.mxu0 0.0
      %876 = vmatprep.subr.mxu0 0.0
      %877 = vmatpush1.msra.mxu0 0.0
      %878 = vmatprep.subr.mxu0 0.0
      %879 = vmatpush1.msra.mxu0 0.0
      %880 = vmatprep.subr.mxu0 0.0
      %881 = vmatpush1.msra.mxu0 0.0
      %882 = vmatprep.subr.mxu0 0.0
      %883 = vmatpush1.msra.mxu0 0.0
      %884 = vmatprep.subr.mxu0 0.0
      %885 = vmatpush1.msra.mxu0 0.0
      %886 = vmatprep.subr.mxu0 0.0
      %887 = vmatpush1.msra.mxu0 0.0
      %888 = vmatprep.subr.mxu0 0.0
      %889 = vmatpush1.msra.mxu0 0.0
      %890 = vmatprep.subr.mxu0 0.0
      %891 = vmatpush1.msra.mxu0 0.0
      %892 = vmatprep.subr.mxu0 0.0
      %893 = vmatpush1.msra.mxu0 0.0
      %894 = vmatprep.subr.mxu0 0.0
      %895 = vmatpush1.msra.mxu0 0.0
      %896 = vmatprep.subr.mxu0 0.0
      %897 = vmatpush1.msra.mxu0 0.0
      %898 = vmatprep.subr.mxu0 0.0
      %899 = vmatpush1.msra.mxu0 0.0
      %900 = vmatprep.subr.mxu0 %v845
      %901 = vmatpush1.msra.mxu0 %v844
      %902 = vmatprep.subr.mxu0 %v837
      %903 = vmatpush1.msra.mxu0 %v836
      %904 = vmatprep.subr.mxu0 0.0
      %905 = vmatpush2.msra.mxu0 0.0
      %906 = vmatprep.subr.mxu0 0.0
      %907 = vmatpush2.msra.mxu0 0.0
      %908 = vmatprep.subr.mxu0 0.0
      %909 = vmatpush2.msra.mxu0 0.0
      %910 = vmatprep.subr.mxu0 0.0
      %911 = vmatpush2.msra.mxu0 0.0
      %912 = vmatprep.subr.mxu0 0.0
      %913 = vmatpush2.msra.mxu0 0.0
      %914 = vmatprep.subr.mxu0 0.0
      %915 = vmatpush2.msra.mxu0 0.0
      %916 = vmatprep.subr.mxu0 0.0
      %917 = vmatpush2.msra.mxu0 0.0
      %918 = vmatprep.subr.mxu0 0.0
      %919 = vmatpush2.msra.mxu0 0.0
      %920 = vmatprep.subr.mxu0 0.0
      %921 = vmatpush2.msra.mxu0 0.0
      %922 = vmatprep.subr.mxu0 0.0
      %923 = vmatpush2.msra.mxu0 0.0
      %924 = vmatprep.subr.mxu0 0.0
      %925 = vmatpush2.msra.mxu0 0.0
      %926 = vmatprep.subr.mxu0 0.0
      %927 = vmatpush2.msra.mxu0 0.0
      %928 = vmatprep.subr.mxu0 0.0
      %929 = vmatpush2.msra.mxu0 0.0
      %930 = vmatprep.subr.mxu0 0.0
      %931 = vmatpush2.msra.mxu0 0.0
      %932 = vmatprep.subr.mxu0 0.0
      %933 = vmatpush2.msra.mxu0 0.0
      %934 = vmatprep.subr.mxu0 0.0
      %935 = vmatpush2.msra.mxu0 0.0
      %936 = vmatprep.mubr.f32.mxu0 0.0
      %937 = vmatmul.mubr.f32.gmra.mxu0 %v870
      %v938 = vpop.f32.mrf.mxu0
      %v939 = vadd.f32 0.0, %v938
      %v940 = vpop.f32.mrf.mxu0
      %v941 = vadd.f32 0.0, %v940
      %942 = vdwg.mxu0
      %943 = vmatprep.subr.mxu0 0.0
      %944 = vmatpush1.msra.mxu0 0.0
      %945 = vmatprep.subr.mxu0 0.0
      %946 = vmatpush1.msra.mxu0 0.0
      %947 = vmatprep.subr.mxu0 0.0
      %948 = vmatpush1.msra.mxu0 0.0
      %949 = vmatprep.subr.mxu0 0.0
      %950 = vmatpush1.msra.mxu0 0.0
      %951 = vmatprep.subr.mxu0 0.0
      %952 = vmatpush1.msra.mxu0 0.0
      %953 = vmatprep.subr.mxu0 0.0
      %954 = vmatpush1.msra.mxu0 0.0
      %955 = vmatprep.subr.mxu0 0.0
      %956 = vmatpush1.msra.mxu0 0.0
      %957 = vmatprep.subr.mxu0 0.0
      %958 = vmatpush1.msra.mxu0 0.0
      %959 = vmatprep.subr.mxu0 0.0
      %960 = vmatpush1.msra.mxu0 0.0
      %961 = vmatprep.subr.mxu0 0.0
      %962 = vmatpush1.msra.mxu0 0.0
      %963 = vmatprep.subr.mxu0 0.0
      %964 = vmatpush1.msra.mxu0 0.0
      %965 = vmatprep.subr.mxu0 0.0
      %966 = vmatpush1.msra.mxu0 0.0
      %967 = vmatprep.subr.mxu0 0.0
      %968 = vmatpush1.msra.mxu0 0.0
      %969 = vmatprep.subr.mxu0 0.0
      %970 = vmatpush1.msra.mxu0 0.0
      %971 = vmatprep.subr.mxu0 %v847
      %972 = vmatpush1.msra.mxu0 %v846
      %973 = vmatprep.subr.mxu0 %v839
      %974 = vmatpush1.msra.mxu0 %v838
      %975 = vmatprep.subr.mxu0 0.0
      %976 = vmatpush2.msra.mxu0 0.0
      %977 = vmatprep.subr.mxu0 0.0
      %978 = vmatpush2.msra.mxu0 0.0
      %979 = vmatprep.subr.mxu0 0.0
      %980 = vmatpush2.msra.mxu0 0.0
      %981 = vmatprep.subr.mxu0 0.0
      %982 = vmatpush2.msra.mxu0 0.0
      %983 = vmatprep.subr.mxu0 0.0
      %984 = vmatpush2.msra.mxu0 0.0
      %985 = vmatprep.subr.mxu0 0.0
      %986 = vmatpush2.msra.mxu0 0.0
      %987 = vmatprep.subr.mxu0 0.0
      %988 = vmatpush2.msra.mxu0 0.0
      %989 = vmatprep.subr.mxu0 0.0
      %990 = vmatpush2.msra.mxu0 0.0
      %991 = vmatprep.subr.mxu0 0.0
      %992 = vmatpush2.msra.mxu0 0.0
      %993 = vmatprep.subr.mxu0 0.0
      %994 = vmatpush2.msra.mxu0 0.0
      %995 = vmatprep.subr.mxu0 0.0
      %996 = vmatpush2.msra.mxu0 0.0
      %997 = vmatprep.subr.mxu0 0.0
      %998 = vmatpush2.msra.mxu0 0.0
      %999 = vmatprep.subr.mxu0 0.0
      %1000 = vmatpush2.msra.mxu0 0.0
      %1001 = vmatprep.subr.mxu0 0.0
      %1002 = vmatpush2.msra.mxu0 0.0
      %1003 = vmatprep.subr.mxu0 0.0
      %1004 = vmatpush2.msra.mxu0 0.0
      %1005 = vmatprep.subr.mxu0 0.0
      %1006 = vmatpush2.msra.mxu0 0.0
      %1007 = vmatprep.mubr.f32.mxu0 0.0
      %1008 = vmatmul.mubr.f32.gmra.mxu0 %v870
      %v1009 = vpop.f32.mrf.mxu0
      %v1010 = vadd.f32 0.0, %v1009
      %v1011 = vpop.f32.mrf.mxu0
      %v1012 = vadd.f32 0.0, %v1011
      %1013 = vdwg.mxu0
      %1014 = vmatprep.subr.mxu0 0.0
      %1015 = vmatpush1.msra.mxu0 0.0
      %1016 = vmatprep.subr.mxu0 0.0
      %1017 = vmatpush1.msra.mxu0 0.0
      %1018 = vmatprep.subr.mxu0 0.0
      %1019 = vmatpush1.msra.mxu0 0.0
      %1020 = vmatprep.subr.mxu0 0.0
      %1021 = vmatpush1.msra.mxu0 0.0
      %1022 = vmatprep.subr.mxu0 0.0
      %1023 = vmatpush1.msra.mxu0 0.0
      %1024 = vmatprep.subr.mxu0 0.0
      %1025 = vmatpush1.msra.mxu0 0.0
      %1026 = vmatprep.subr.mxu0 0.0
      %1027 = vmatpush1.msra.mxu0 0.0
      %1028 = vmatprep.subr.mxu0 0.0
      %1029 = vmatpush1.msra.mxu0 0.0
      %1030 = vmatprep.subr.mxu0 0.0
      %1031 = vmatpush1.msra.mxu0 0.0
      %1032 = vmatprep.subr.mxu0 0.0
      %1033 = vmatpush1.msra.mxu0 0.0
      %1034 = vmatprep.subr.mxu0 0.0
      %1035 = vmatpush1.msra.mxu0 0.0
      %1036 = vmatprep.subr.mxu0 0.0
      %1037 = vmatpush1.msra.mxu0 0.0
      %1038 = vmatprep.subr.mxu0 0.0
      %1039 = vmatpush1.msra.mxu0 0.0
      %1040 = vmatprep.subr.mxu0 0.0
      %1041 = vmatpush1.msra.mxu0 0.0
      %1042 = vmatprep.subr.mxu0 %v849
      %1043 = vmatpush1.msra.mxu0 %v848
      %1044 = vmatprep.subr.mxu0 %v841
      %1045 = vmatpush1.msra.mxu0 %v840
      %1046 = vmatprep.subr.mxu0 0.0
      %1047 = vmatpush2.msra.mxu0 0.0
      %1048 = vmatprep.subr.mxu0 0.0
      %1049 = vmatpush2.msra.mxu0 0.0
      %1050 = vmatprep.subr.mxu0 0.0
      %1051 = vmatpush2.msra.mxu0 0.0
      %1052 = vmatprep.subr.mxu0 0.0
      %1053 = vmatpush2.msra.mxu0 0.0
      %1054 = vmatprep.subr.mxu0 0.0
      %1055 = vmatpush2.msra.mxu0 0.0
      %1056 = vmatprep.subr.mxu0 0.0
      %1057 = vmatpush2.msra.mxu0 0.0
      %1058 = vmatprep.subr.mxu0 0.0
      %1059 = vmatpush2.msra.mxu0 0.0
      %1060 = vmatprep.subr.mxu0 0.0
      %1061 = vmatpush2.msra.mxu0 0.0
      %1062 = vmatprep.subr.mxu0 0.0
      %1063 = vmatpush2.msra.mxu0 0.0
      %1064 = vmatprep.subr.mxu0 0.0
      %1065 = vmatpush2.msra.mxu0 0.0
      %1066 = vmatprep.subr.mxu0 0.0
      %1067 = vmatpush2.msra.mxu0 0.0
      %1068 = vmatprep.subr.mxu0 0.0
      %1069 = vmatpush2.msra.mxu0 0.0
      %1070 = vmatprep.subr.mxu0 0.0
      %1071 = vmatpush2.msra.mxu0 0.0
      %1072 = vmatprep.subr.mxu0 0.0
      %1073 = vmatpush2.msra.mxu0 0.0
      %1074 = vmatprep.subr.mxu0 0.0
      %1075 = vmatpush2.msra.mxu0 0.0
      %1076 = vmatprep.subr.mxu0 0.0
      %1077 = vmatpush2.msra.mxu0 0.0
      %1078 = vmatprep.mubr.f32.mxu0 0.0
      %1079 = vmatmul.mubr.f32.gmra.mxu0 %v870
      %v1080 = vpop.f32.mrf.mxu0
      %v1081 = vadd.f32 0.0, %v1080
      %v1082 = vpop.f32.mrf.mxu0
      %v1083 = vadd.f32 0.0, %v1082
      %1084 = vdwg.mxu0
      %1085 = vmatprep.subr.mxu0 0.0
      %1086 = vmatpush1.msra.mxu0 0.0
      %1087 = vmatprep.subr.mxu0 0.0
      %1088 = vmatpush1.msra.mxu0 0.0
      %1089 = vmatprep.subr.mxu0 0.0
      %1090 = vmatpush1.msra.mxu0 0.0
      %1091 = vmatprep.subr.mxu0 0.0
      %1092 = vmatpush1.msra.mxu0 0.0
      %1093 = vmatprep.subr.mxu0 0.0
      %1094 = vmatpush1.msra.mxu0 0.0
      %1095 = vmatprep.subr.mxu0 0.0
      %1096 = vmatpush1.msra.mxu0 0.0
      %1097 = vmatprep.subr.mxu0 0.0
      %1098 = vmatpush1.msra.mxu0 0.0
      %1099 = vmatprep.subr.mxu0 0.0
      %1100 = vmatpush1.msra.mxu0 0.0
      %1101 = vmatprep.subr.mxu0 0.0
      %1102 = vmatpush1.msra.mxu0 0.0
      %1103 = vmatprep.subr.mxu0 0.0
      %1104 = vmatpush1.msra.mxu0 0.0
      %1105 = vmatprep.subr.mxu0 0.0
      %1106 = vmatpush1.msra.mxu0 0.0
      %1107 = vmatprep.subr.mxu0 0.0
      %1108 = vmatpush1.msra.mxu0 0.0
      %1109 = vmatprep.subr.mxu0 0.0
      %1110 = vmatpush1.msra.mxu0 0.0
      %1111 = vmatprep.subr.mxu0 0.0
      %1112 = vmatpush1.msra.mxu0 0.0
      %1113 = vmatprep.subr.mxu0 %v851
      %1114 = vmatpush1.msra.mxu0 %v850
      %1115 = vmatprep.subr.mxu0 %v843
      %1116 = vmatpush1.msra.mxu0 %v842
      %1117 = vmatprep.subr.mxu0 0.0
      %1118 = vmatpush2.msra.mxu0 0.0
      %1119 = vmatprep.subr.mxu0 0.0
      %1120 = vmatpush2.msra.mxu0 0.0
      %1121 = vmatprep.subr.mxu0 0.0
      %1122 = vmatpush2.msra.mxu0 0.0
      %1123 = vmatprep.subr.mxu0 0.0
      %1124 = vmatpush2.msra.mxu0 0.0
      %1125 = vmatprep.subr.mxu0 0.0
      %1126 = vmatpush2.msra.mxu0 0.0
      %1127 = vmatprep.subr.mxu0 0.0
      %1128 = vmatpush2.msra.mxu0 0.0
      %1129 = vmatprep.subr.mxu0 0.0
      %1130 = vmatpush2.msra.mxu0 0.0
      %1131 = vmatprep.subr.mxu0 0.0
      %1132 = vmatpush2.msra.mxu0 0.0
      %1133 = vmatprep.subr.mxu0 0.0
      %1134 = vmatpush2.msra.mxu0 0.0
      %1135 = vmatprep.subr.mxu0 0.0
      %1136 = vmatpush2.msra.mxu0 0.0
      %1137 = vmatprep.subr.mxu0 0.0
      %1138 = vmatpush2.msra.mxu0 0.0
      %1139 = vmatprep.subr.mxu0 0.0
      %1140 = vmatpush2.msra.mxu0 0.0
      %1141 = vmatprep.subr.mxu0 0.0
      %1142 = vmatpush2.msra.mxu0 0.0
      %1143 = vmatprep.subr.mxu0 0.0
      %1144 = vmatpush2.msra.mxu0 0.0
      %1145 = vmatprep.subr.mxu0 0.0
      %1146 = vmatpush2.msra.mxu0 0.0
      %1147 = vmatprep.subr.mxu0 0.0
      %1148 = vmatpush2.msra.mxu0 0.0
      %1149 = vmatprep.mubr.f32.mxu0 0.0
      %1150 = vmatmul.mubr.f32.gmra.mxu0 %v870
      %v1151 = vpop.f32.mrf.mxu0
      %v1152 = vadd.f32 0.0, %v1151
      %v1153 = vpop.f32.mrf.mxu0
      %v1154 = vadd.f32 0.0, %v1153
      %1155 = vdwg.mxu0
      %v1156 = vsel %vm746, 1, 0
      %v1157 = vsel %vm747, 1, 0
      %v1158 = vsel %vm748, 1, 0
      %v1159 = vsel %vm749, 1, 0
      %v1160 = vsel %vm750, 1, 0
      %v1161 = vsel %vm751, 1, 0
      %v1162 = vsel %vm752, 1, 0
      %v1163 = vsel %vm753, 1, 0
      %vm1164 = vcmp.eq.s32.totalorder %v1156, 1
      %vm1165 = vcmp.eq.s32.totalorder %v1157, 1
      %vm1166 = vcmp.eq.s32.totalorder %v1158, 1
      %vm1167 = vcmp.eq.s32.totalorder %v1159, 1
      %vm1168 = vcmp.eq.s32.totalorder %v1160, 1
      %vm1169 = vcmp.eq.s32.totalorder %v1161, 1
      %vm1170 = vcmp.eq.s32.totalorder %v1162, 1
      %vm1171 = vcmp.eq.s32.totalorder %v1163, 1
      %v1172 = vsel %vm1164, %v939, 0.0
      %v1173 = vsel %vm1165, %v941, 0.0
      %v1174 = vsel %vm1166, %v1010, 0.0
      %v1175 = vsel %vm1167, %v1012, 0.0
      %v1176 = vsel %vm1168, %v1081, 0.0
      %v1177 = vsel %vm1169, %v1083, 0.0
      %v1178 = vsel %vm1170, %v1152, 0.0
      %v1179 = vsel %vm1171, %v1154, 0.0
      %v1180 = vadd.f32 %v1172, 0.0
      %v1181 = vadd.f32 %v1173, 0.0
      %v1182 = vadd.f32 %v1174, 0.0
      %v1183 = vadd.f32 %v1175, 0.0
      %v1184 = vadd.f32 %v1176, 0.0
      %v1185 = vadd.f32 %v1177, 0.0
      %v1186 = vadd.f32 %v1178, 0.0
      %v1187 = vadd.f32 %v1179, 0.0
      %s1188 = scalar_lea.vmem %s2, 8
      %v1189 = vld [vmem:[%s1188] sm:$0xff]
      %1190 = vrot.lane.b32.xlu0 %v762, 32
      %v1191 = vpop.permute.xlu0 %1190
      %1192 = vrot.lane.b32.xlu0 %v763, 32
      %v1193 = vpop.permute.xlu0 %1192
      %1194 = vrot.lane.b32.xlu0 %v764, 32
      %v1195 = vpop.permute.xlu0 %1194
      %1196 = vrot.lane.b32.xlu0 %v765, 32
      %v1197 = vpop.permute.xlu0 %1196
      %1198 = vrot.lane.b32.xlu0 %v766, 32
      %v1199 = vpop.permute.xlu0 %1198
      %1200 = vrot.lane.b32.xlu0 %v767, 32
      %v1201 = vpop.permute.xlu0 %1200
      %1202 = vrot.lane.b32.xlu0 %v768, 32
      %v1203 = vpop.permute.xlu0 %1202
      %1204 = vrot.lane.b32.xlu0 %v769, 32
      %v1205 = vpop.permute.xlu0 %1204
      %1206 = vrot.lane.b32.xlu0 %v770, 32
      %v1207 = vpop.permute.xlu0 %1206
      %1208 = vrot.lane.b32.xlu0 %v771, 32
      %v1209 = vpop.permute.xlu0 %1208
      %1210 = vrot.lane.b32.xlu0 %v772, 32
      %v1211 = vpop.permute.xlu0 %1210
      %1212 = vrot.lane.b32.xlu0 %v773, 32
      %v1213 = vpop.permute.xlu0 %1212
      %1214 = vrot.lane.b32.xlu0 %v774, 32
      %v1215 = vpop.permute.xlu0 %1214
      %1216 = vrot.lane.b32.xlu0 %v775, 32
      %v1217 = vpop.permute.xlu0 %1216
      %1218 = vrot.lane.b32.xlu0 %v776, 32
      %v1219 = vpop.permute.xlu0 %1218
      %1220 = vrot.lane.b32.xlu0 %v777, 32
      %v1221 = vpop.permute.xlu0 %1220
      %1222 = vrot.lane.b32.xlu0 %v778, 32
      %v1223 = vpop.permute.xlu0 %1222
      %1224 = vrot.lane.b32.xlu0 %v779, 32
      %v1225 = vpop.permute.xlu0 %1224
      %vm1226 = vcmask 261120
      %v1227 = vsel %vm1226, %v1191, %v1193
      %v1228 = vsel %vm1226, %v1193, %v1195
      %v1229 = vsel %vm1226, %v1195, %v1197
      %v1230 = vsel %vm1226, %v1197, %v1199
      %v1231 = vsel %vm1226, %v1199, %v1201
      %v1232 = vsel %vm1226, %v1201, %v1203
      %v1233 = vsel %vm1226, %v1203, %v1205
      %v1234 = vsel %vm1226, %v1205, %v1207
      %v1235 = vsel %vm1226, %v1209, %v1211
      %v1236 = vsel %vm1226, %v1211, %v1213
      %v1237 = vsel %vm1226, %v1213, %v1215
      %v1238 = vsel %vm1226, %v1215, %v1217
      %v1239 = vsel %vm1226, %v1217, %v1219
      %v1240 = vsel %vm1226, %v1219, %v1221
      %v1241 = vsel %vm1226, %v1221, %v1223
      %v1242 = vsel %vm1226, %v1223, %v1225
      %v1260 = vsel %vm868, %v1189, 0
      %1262 = vmatprep.subr.mxu0 0.0
      %1263 = vmatpush1.msra.mxu0 0.0
      %1264 = vmatprep.subr.mxu0 0.0
      %1265 = vmatpush1.msra.mxu0 0.0
      %1266 = vmatprep.subr.mxu0 0.0
      %1267 = vmatpush1.msra.mxu0 0.0
      %1268 = vmatprep.subr.mxu0 0.0
      %1269 = vmatpush1.msra.mxu0 0.0
      %1270 = vmatprep.subr.mxu0 0.0
      %1271 = vmatpush1.msra.mxu0 0.0
      %1272 = vmatprep.subr.mxu0 0.0
      %1273 = vmatpush1.msra.mxu0 0.0
      %1274 = vmatprep.subr.mxu0 0.0
      %1275 = vmatpush1.msra.mxu0 0.0
      %1276 = vmatprep.subr.mxu0 0.0
      %1277 = vmatpush1.msra.mxu0 0.0
      %1278 = vmatprep.subr.mxu0 0.0
      %1279 = vmatpush1.msra.mxu0 0.0
      %1280 = vmatprep.subr.mxu0 0.0
      %1281 = vmatpush1.msra.mxu0 0.0
      %1282 = vmatprep.subr.mxu0 0.0
      %1283 = vmatpush1.msra.mxu0 0.0
      %1284 = vmatprep.subr.mxu0 0.0
      %1285 = vmatpush1.msra.mxu0 0.0
      %1286 = vmatprep.subr.mxu0 0.0
      %1287 = vmatpush1.msra.mxu0 0.0
      %1288 = vmatprep.subr.mxu0 0.0
      %1289 = vmatpush1.msra.mxu0 0.0
      %1290 = vmatprep.subr.mxu0 %v1236
      %1291 = vmatpush1.msra.mxu0 %v1235
      %1292 = vmatprep.subr.mxu0 %v1228
      %1293 = vmatpush1.msra.mxu0 %v1227
      %1294 = vmatprep.subr.mxu0 0.0
      %1295 = vmatpush2.msra.mxu0 0.0
      %1296 = vmatprep.subr.mxu0 0.0
      %1297 = vmatpush2.msra.mxu0 0.0
      %1298 = vmatprep.subr.mxu0 0.0
      %1299 = vmatpush2.msra.mxu0 0.0
      %1300 = vmatprep.subr.mxu0 0.0
      %1301 = vmatpush2.msra.mxu0 0.0
      %1302 = vmatprep.subr.mxu0 0.0
      %1303 = vmatpush2.msra.mxu0 0.0
      %1304 = vmatprep.subr.mxu0 0.0
      %1305 = vmatpush2.msra.mxu0 0.0
      %1306 = vmatprep.subr.mxu0 0.0
      %1307 = vmatpush2.msra.mxu0 0.0
      %1308 = vmatprep.subr.mxu0 0.0
      %1309 = vmatpush2.msra.mxu0 0.0
      %1310 = vmatprep.subr.mxu0 0.0
      %1311 = vmatpush2.msra.mxu0 0.0
      %1312 = vmatprep.subr.mxu0 0.0
      %1313 = vmatpush2.msra.mxu0 0.0
      %1314 = vmatprep.subr.mxu0 0.0
      %1315 = vmatpush2.msra.mxu0 0.0
      %1316 = vmatprep.subr.mxu0 0.0
      %1317 = vmatpush2.msra.mxu0 0.0
      %1318 = vmatprep.subr.mxu0 0.0
      %1319 = vmatpush2.msra.mxu0 0.0
      %1320 = vmatprep.subr.mxu0 0.0
      %1321 = vmatpush2.msra.mxu0 0.0
      %1322 = vmatprep.subr.mxu0 0.0
      %1323 = vmatpush2.msra.mxu0 0.0
      %1324 = vmatprep.subr.mxu0 0.0
      %1325 = vmatpush2.msra.mxu0 0.0
      %1326 = vmatprep.mubr.f32.mxu0 0.0
      %1327 = vmatmul.mubr.f32.gmra.mxu0 %v1260
      %v1328 = vpop.f32.mrf.mxu0
      %v1329 = vadd.f32 0.0, %v1328
      %v1330 = vpop.f32.mrf.mxu0
      %v1331 = vadd.f32 0.0, %v1330
      %1332 = vdwg.mxu0
      %1333 = vmatprep.subr.mxu0 0.0
      %1334 = vmatpush1.msra.mxu0 0.0
      %1335 = vmatprep.subr.mxu0 0.0
      %1336 = vmatpush1.msra.mxu0 0.0
      %1337 = vmatprep.subr.mxu0 0.0
      %1338 = vmatpush1.msra.mxu0 0.0
      %1339 = vmatprep.subr.mxu0 0.0
      %1340 = vmatpush1.msra.mxu0 0.0
      %1341 = vmatprep.subr.mxu0 0.0
      %1342 = vmatpush1.msra.mxu0 0.0
      %1343 = vmatprep.subr.mxu0 0.0
      %1344 = vmatpush1.msra.mxu0 0.0
      %1345 = vmatprep.subr.mxu0 0.0
      %1346 = vmatpush1.msra.mxu0 0.0
      %1347 = vmatprep.subr.mxu0 0.0
      %1348 = vmatpush1.msra.mxu0 0.0
      %1349 = vmatprep.subr.mxu0 0.0
      %1350 = vmatpush1.msra.mxu0 0.0
      %1351 = vmatprep.subr.mxu0 0.0
      %1352 = vmatpush1.msra.mxu0 0.0
      %1353 = vmatprep.subr.mxu0 0.0
      %1354 = vmatpush1.msra.mxu0 0.0
      %1355 = vmatprep.subr.mxu0 0.0
      %1356 = vmatpush1.msra.mxu0 0.0
      %1357 = vmatprep.subr.mxu0 0.0
      %1358 = vmatpush1.msra.mxu0 0.0
      %1359 = vmatprep.subr.mxu0 0.0
      %1360 = vmatpush1.msra.mxu0 0.0
      %1361 = vmatprep.subr.mxu0 %v1238
      %1362 = vmatpush1.msra.mxu0 %v1237
      %1363 = vmatprep.subr.mxu0 %v1230
      %1364 = vmatpush1.msra.mxu0 %v1229
      %1365 = vmatprep.subr.mxu0 0.0
      %1366 = vmatpush2.msra.mxu0 0.0
      %1367 = vmatprep.subr.mxu0 0.0
      %1368 = vmatpush2.msra.mxu0 0.0
      %1369 = vmatprep.subr.mxu0 0.0
      %1370 = vmatpush2.msra.mxu0 0.0
      %1371 = vmatprep.subr.mxu0 0.0
      %1372 = vmatpush2.msra.mxu0 0.0
      %1373 = vmatprep.subr.mxu0 0.0
      %1374 = vmatpush2.msra.mxu0 0.0
      %1375 = vmatprep.subr.mxu0 0.0
      %1376 = vmatpush2.msra.mxu0 0.0
      %1377 = vmatprep.subr.mxu0 0.0
      %1378 = vmatpush2.msra.mxu0 0.0
      %1379 = vmatprep.subr.mxu0 0.0
      %1380 = vmatpush2.msra.mxu0 0.0
      %1381 = vmatprep.subr.mxu0 0.0
      %1382 = vmatpush2.msra.mxu0 0.0
      %1383 = vmatprep.subr.mxu0 0.0
      %1384 = vmatpush2.msra.mxu0 0.0
      %1385 = vmatprep.subr.mxu0 0.0
      %1386 = vmatpush2.msra.mxu0 0.0
      %1387 = vmatprep.subr.mxu0 0.0
      %1388 = vmatpush2.msra.mxu0 0.0
      %1389 = vmatprep.subr.mxu0 0.0
      %1390 = vmatpush2.msra.mxu0 0.0
      %1391 = vmatprep.subr.mxu0 0.0
      %1392 = vmatpush2.msra.mxu0 0.0
      %1393 = vmatprep.subr.mxu0 0.0
      %1394 = vmatpush2.msra.mxu0 0.0
      %1395 = vmatprep.subr.mxu0 0.0
      %1396 = vmatpush2.msra.mxu0 0.0
      %1397 = vmatprep.mubr.f32.mxu0 0.0
      %1398 = vmatmul.mubr.f32.gmra.mxu0 %v1260
      %v1399 = vpop.f32.mrf.mxu0
      %v1400 = vadd.f32 0.0, %v1399
      %v1401 = vpop.f32.mrf.mxu0
      %v1402 = vadd.f32 0.0, %v1401
      %1403 = vdwg.mxu0
      %1404 = vmatprep.subr.mxu0 0.0
      %1405 = vmatpush1.msra.mxu0 0.0
      %1406 = vmatprep.subr.mxu0 0.0
      %1407 = vmatpush1.msra.mxu0 0.0
      %1408 = vmatprep.subr.mxu0 0.0
      %1409 = vmatpush1.msra.mxu0 0.0
      %1410 = vmatprep.subr.mxu0 0.0
      %1411 = vmatpush1.msra.mxu0 0.0
      %1412 = vmatprep.subr.mxu0 0.0
      %1413 = vmatpush1.msra.mxu0 0.0
      %1414 = vmatprep.subr.mxu0 0.0
      %1415 = vmatpush1.msra.mxu0 0.0
      %1416 = vmatprep.subr.mxu0 0.0
      %1417 = vmatpush1.msra.mxu0 0.0
      %1418 = vmatprep.subr.mxu0 0.0
      %1419 = vmatpush1.msra.mxu0 0.0
      %1420 = vmatprep.subr.mxu0 0.0
      %1421 = vmatpush1.msra.mxu0 0.0
      %1422 = vmatprep.subr.mxu0 0.0
      %1423 = vmatpush1.msra.mxu0 0.0
      %1424 = vmatprep.subr.mxu0 0.0
      %1425 = vmatpush1.msra.mxu0 0.0
      %1426 = vmatprep.subr.mxu0 0.0
      %1427 = vmatpush1.msra.mxu0 0.0
      %1428 = vmatprep.subr.mxu0 0.0
      %1429 = vmatpush1.msra.mxu0 0.0
      %1430 = vmatprep.subr.mxu0 0.0
      %1431 = vmatpush1.msra.mxu0 0.0
      %1432 = vmatprep.subr.mxu0 %v1240
      %1433 = vmatpush1.msra.mxu0 %v1239
      %1434 = vmatprep.subr.mxu0 %v1232
      %1435 = vmatpush1.msra.mxu0 %v1231
      %1436 = vmatprep.subr.mxu0 0.0
      %1437 = vmatpush2.msra.mxu0 0.0
      %1438 = vmatprep.subr.mxu0 0.0
      %1439 = vmatpush2.msra.mxu0 0.0
      %1440 = vmatprep.subr.mxu0 0.0
      %1441 = vmatpush2.msra.mxu0 0.0
      %1442 = vmatprep.subr.mxu0 0.0
      %1443 = vmatpush2.msra.mxu0 0.0
      %1444 = vmatprep.subr.mxu0 0.0
      %1445 = vmatpush2.msra.mxu0 0.0
      %1446 = vmatprep.subr.mxu0 0.0
      %1447 = vmatpush2.msra.mxu0 0.0
      %1448 = vmatprep.subr.mxu0 0.0
      %1449 = vmatpush2.msra.mxu0 0.0
      %1450 = vmatprep.subr.mxu0 0.0
      %1451 = vmatpush2.msra.mxu0 0.0
      %1452 = vmatprep.subr.mxu0 0.0
      %1453 = vmatpush2.msra.mxu0 0.0
      %1454 = vmatprep.subr.mxu0 0.0
      %1455 = vmatpush2.msra.mxu0 0.0
      %1456 = vmatprep.subr.mxu0 0.0
      %1457 = vmatpush2.msra.mxu0 0.0
      %1458 = vmatprep.subr.mxu0 0.0
      %1459 = vmatpush2.msra.mxu0 0.0
      %1460 = vmatprep.subr.mxu0 0.0
      %1461 = vmatpush2.msra.mxu0 0.0
      %1462 = vmatprep.subr.mxu0 0.0
      %1463 = vmatpush2.msra.mxu0 0.0
      %1464 = vmatprep.subr.mxu0 0.0
      %1465 = vmatpush2.msra.mxu0 0.0
      %1466 = vmatprep.subr.mxu0 0.0
      %1467 = vmatpush2.msra.mxu0 0.0
      %1468 = vmatprep.mubr.f32.mxu0 0.0
      %1469 = vmatmul.mubr.f32.gmra.mxu0 %v1260
      %v1470 = vpop.f32.mrf.mxu0
      %v1471 = vadd.f32 0.0, %v1470
      %v1472 = vpop.f32.mrf.mxu0
      %v1473 = vadd.f32 0.0, %v1472
      %1474 = vdwg.mxu0
      %1475 = vmatprep.subr.mxu0 0.0
      %1476 = vmatpush1.msra.mxu0 0.0
      %1477 = vmatprep.subr.mxu0 0.0
      %1478 = vmatpush1.msra.mxu0 0.0
      %1479 = vmatprep.subr.mxu0 0.0
      %1480 = vmatpush1.msra.mxu0 0.0
      %1481 = vmatprep.subr.mxu0 0.0
      %1482 = vmatpush1.msra.mxu0 0.0
      %1483 = vmatprep.subr.mxu0 0.0
      %1484 = vmatpush1.msra.mxu0 0.0
      %1485 = vmatprep.subr.mxu0 0.0
      %1486 = vmatpush1.msra.mxu0 0.0
      %1487 = vmatprep.subr.mxu0 0.0
      %1488 = vmatpush1.msra.mxu0 0.0
      %1489 = vmatprep.subr.mxu0 0.0
      %1490 = vmatpush1.msra.mxu0 0.0
      %1491 = vmatprep.subr.mxu0 0.0
      %1492 = vmatpush1.msra.mxu0 0.0
      %1493 = vmatprep.subr.mxu0 0.0
      %1494 = vmatpush1.msra.mxu0 0.0
      %1495 = vmatprep.subr.mxu0 0.0
      %1496 = vmatpush1.msra.mxu0 0.0
      %1497 = vmatprep.subr.mxu0 0.0
      %1498 = vmatpush1.msra.mxu0 0.0
      %1499 = vmatprep.subr.mxu0 0.0
      %1500 = vmatpush1.msra.mxu0 0.0
      %1501 = vmatprep.subr.mxu0 0.0
      %1502 = vmatpush1.msra.mxu0 0.0
      %1503 = vmatprep.subr.mxu0 %v1242
      %1504 = vmatpush1.msra.mxu0 %v1241
      %1505 = vmatprep.subr.mxu0 %v1234
      %1506 = vmatpush1.msra.mxu0 %v1233
      %1507 = vmatprep.subr.mxu0 0.0
      %1508 = vmatpush2.msra.mxu0 0.0
      %1509 = vmatprep.subr.mxu0 0.0
      %1510 = vmatpush2.msra.mxu0 0.0
      %1511 = vmatprep.subr.mxu0 0.0
      %1512 = vmatpush2.msra.mxu0 0.0
      %1513 = vmatprep.subr.mxu0 0.0
      %1514 = vmatpush2.msra.mxu0 0.0
      %1515 = vmatprep.subr.mxu0 0.0
      %1516 = vmatpush2.msra.mxu0 0.0
      %1517 = vmatprep.subr.mxu0 0.0
      %1518 = vmatpush2.msra.mxu0 0.0
      %1519 = vmatprep.subr.mxu0 0.0
      %1520 = vmatpush2.msra.mxu0 0.0
      %1521 = vmatprep.subr.mxu0 0.0
      %1522 = vmatpush2.msra.mxu0 0.0
      %1523 = vmatprep.subr.mxu0 0.0
      %1524 = vmatpush2.msra.mxu0 0.0
      %1525 = vmatprep.subr.mxu0 0.0
      %1526 = vmatpush2.msra.mxu0 0.0
      %1527 = vmatprep.subr.mxu0 0.0
      %1528 = vmatpush2.msra.mxu0 0.0
      %1529 = vmatprep.subr.mxu0 0.0
      %1530 = vmatpush2.msra.mxu0 0.0
      %1531 = vmatprep.subr.mxu0 0.0
      %1532 = vmatpush2.msra.mxu0 0.0
      %1533 = vmatprep.subr.mxu0 0.0
      %1534 = vmatpush2.msra.mxu0 0.0
      %1535 = vmatprep.subr.mxu0 0.0
      %1536 = vmatpush2.msra.mxu0 0.0
      %1537 = vmatprep.subr.mxu0 0.0
      %1538 = vmatpush2.msra.mxu0 0.0
      %1539 = vmatprep.mubr.f32.mxu0 0.0
      %1540 = vmatmul.mubr.f32.gmra.mxu0 %v1260
      %v1541 = vpop.f32.mrf.mxu0
      %v1542 = vadd.f32 0.0, %v1541
      %v1543 = vpop.f32.mrf.mxu0
      %v1544 = vadd.f32 0.0, %v1543
      %1545 = vdwg.mxu0
      %v1546 = vadd.f32 %v1180, %v1329
      %v1547 = vadd.f32 %v1181, %v1331
      %v1548 = vadd.f32 %v1182, %v1400
      %v1549 = vadd.f32 %v1183, %v1402
      %v1550 = vadd.f32 %v1184, %v1471
      %v1551 = vadd.f32 %v1185, %v1473
      %v1552 = vadd.f32 %v1186, %v1542
      %v1553 = vadd.f32 %v1187, %v1544
      %s1554 = scalar_lea.vmem %s2, 16
      %v1555 = vld [vmem:[%s1554] sm:$0xff]
      %1556 = vrot.lane.b32.xlu0 %v762, 31
      %v1557 = vpop.permute.xlu0 %1556
      %1558 = vrot.lane.b32.xlu0 %v763, 31
      %v1559 = vpop.permute.xlu0 %1558
      %1560 = vrot.lane.b32.xlu0 %v764, 31
      %v1561 = vpop.permute.xlu0 %1560
      %1562 = vrot.lane.b32.xlu0 %v765, 31
      %v1563 = vpop.permute.xlu0 %1562
      %1564 = vrot.lane.b32.xlu0 %v766, 31
      %v1565 = vpop.permute.xlu0 %1564
      %1566 = vrot.lane.b32.xlu0 %v767, 31
      %v1567 = vpop.permute.xlu0 %1566
      %1568 = vrot.lane.b32.xlu0 %v768, 31
      %v1569 = vpop.permute.xlu0 %1568
      %1570 = vrot.lane.b32.xlu0 %v769, 31
      %v1571 = vpop.permute.xlu0 %1570
      %1572 = vrot.lane.b32.xlu0 %v770, 31
      %v1573 = vpop.permute.xlu0 %1572
      %1574 = vrot.lane.b32.xlu0 %v771, 31
      %v1575 = vpop.permute.xlu0 %1574
      %1576 = vrot.lane.b32.xlu0 %v772, 31
      %v1577 = vpop.permute.xlu0 %1576
      %1578 = vrot.lane.b32.xlu0 %v773, 31
      %v1579 = vpop.permute.xlu0 %1578
      %1580 = vrot.lane.b32.xlu0 %v774, 31
      %v1581 = vpop.permute.xlu0 %1580
      %1582 = vrot.lane.b32.xlu0 %v775, 31
      %v1583 = vpop.permute.xlu0 %1582
      %1584 = vrot.lane.b32.xlu0 %v776, 31
      %v1585 = vpop.permute.xlu0 %1584
      %1586 = vrot.lane.b32.xlu0 %v777, 31
      %v1587 = vpop.permute.xlu0 %1586
      %1588 = vrot.lane.b32.xlu0 %v778, 31
      %v1589 = vpop.permute.xlu0 %1588
      %1590 = vrot.lane.b32.xlu0 %v779, 31
      %v1591 = vpop.permute.xlu0 %1590
      %vm1592 = vcmask 252928
      %v1593 = vsel %vm1592, %v1557, %v1559
      %v1594 = vsel %vm1592, %v1559, %v1561
      %v1595 = vsel %vm1592, %v1561, %v1563
      %v1596 = vsel %vm1592, %v1563, %v1565
      %v1597 = vsel %vm1592, %v1565, %v1567
      %v1598 = vsel %vm1592, %v1567, %v1569
      %v1599 = vsel %vm1592, %v1569, %v1571
      %v1600 = vsel %vm1592, %v1571, %v1573
      %v1601 = vsel %vm1592, %v1575, %v1577
      %v1602 = vsel %vm1592, %v1577, %v1579
      %v1603 = vsel %vm1592, %v1579, %v1581
      %v1604 = vsel %vm1592, %v1581, %v1583
      %v1605 = vsel %vm1592, %v1583, %v1585
      %v1606 = vsel %vm1592, %v1585, %v1587
      %v1607 = vsel %vm1592, %v1587, %v1589
      %v1608 = vsel %vm1592, %v1589, %v1591
      %v1626 = vsel %vm868, %v1555, 0
      %1628 = vmatprep.subr.mxu0 0.0
      %1629 = vmatpush1.msra.mxu0 0.0
      %1630 = vmatprep.subr.mxu0 0.0
      %1631 = vmatpush1.msra.mxu0 0.0
      %1632 = vmatprep.subr.mxu0 0.0
      %1633 = vmatpush1.msra.mxu0 0.0
      %1634 = vmatprep.subr.mxu0 0.0
      %1635 = vmatpush1.msra.mxu0 0.0
      %1636 = vmatprep.subr.mxu0 0.0
      %1637 = vmatpush1.msra.mxu0 0.0
      %1638 = vmatprep.subr.mxu0 0.0
      %1639 = vmatpush1.msra.mxu0 0.0
      %1640 = vmatprep.subr.mxu0 0.0
      %1641 = vmatpush1.msra.mxu0 0.0
      %1642 = vmatprep.subr.mxu0 0.0
      %1643 = vmatpush1.msra.mxu0 0.0
      %1644 = vmatprep.subr.mxu0 0.0
      %1645 = vmatpush1.msra.mxu0 0.0
      %1646 = vmatprep.subr.mxu0 0.0
      %1647 = vmatpush1.msra.mxu0 0.0
      %1648 = vmatprep.subr.mxu0 0.0
      %1649 = vmatpush1.msra.mxu0 0.0
      %1650 = vmatprep.subr.mxu0 0.0
      %1651 = vmatpush1.msra.mxu0 0.0
      %1652 = vmatprep.subr.mxu0 0.0
      %1653 = vmatpush1.msra.mxu0 0.0
      %1654 = vmatprep.subr.mxu0 0.0
      %1655 = vmatpush1.msra.mxu0 0.0
      %1656 = vmatprep.subr.mxu0 %v1602
      %1657 = vmatpush1.msra.mxu0 %v1601
      %1658 = vmatprep.subr.mxu0 %v1594
      %1659 = vmatpush1.msra.mxu0 %v1593
      %1660 = vmatprep.subr.mxu0 0.0
      %1661 = vmatpush2.msra.mxu0 0.0
      %1662 = vmatprep.subr.mxu0 0.0
      %1663 = vmatpush2.msra.mxu0 0.0
      %1664 = vmatprep.subr.mxu0 0.0
      %1665 = vmatpush2.msra.mxu0 0.0
      %1666 = vmatprep.subr.mxu0 0.0
      %1667 = vmatpush2.msra.mxu0 0.0
      %1668 = vmatprep.subr.mxu0 0.0
      %1669 = vmatpush2.msra.mxu0 0.0
      %1670 = vmatprep.subr.mxu0 0.0
      %1671 = vmatpush2.msra.mxu0 0.0
      %1672 = vmatprep.subr.mxu0 0.0
      %1673 = vmatpush2.msra.mxu0 0.0
      %1674 = vmatprep.subr.mxu0 0.0
      %1675 = vmatpush2.msra.mxu0 0.0
      %1676 = vmatprep.subr.mxu0 0.0
      %1677 = vmatpush2.msra.mxu0 0.0
      %1678 = vmatprep.subr.mxu0 0.0
      %1679 = vmatpush2.msra.mxu0 0.0
      %1680 = vmatprep.subr.mxu0 0.0
      %1681 = vmatpush2.msra.mxu0 0.0
      %1682 = vmatprep.subr.mxu0 0.0
      %1683 = vmatpush2.msra.mxu0 0.0
      %1684 = vmatprep.subr.mxu0 0.0
      %1685 = vmatpush2.msra.mxu0 0.0
      %1686 = vmatprep.subr.mxu0 0.0
      %1687 = vmatpush2.msra.mxu0 0.0
      %1688 = vmatprep.subr.mxu0 0.0
      %1689 = vmatpush2.msra.mxu0 0.0
      %1690 = vmatprep.subr.mxu0 0.0
      %1691 = vmatpush2.msra.mxu0 0.0
      %1692 = vmatprep.mubr.f32.mxu0 0.0
      %1693 = vmatmul.mubr.f32.gmra.mxu0 %v1626
      %v1694 = vpop.f32.mrf.mxu0
      %v1695 = vadd.f32 0.0, %v1694
      %v1696 = vpop.f32.mrf.mxu0
      %v1697 = vadd.f32 0.0, %v1696
      %1698 = vdwg.mxu0
      %1699 = vmatprep.subr.mxu0 0.0
      %1700 = vmatpush1.msra.mxu0 0.0
      %1701 = vmatprep.subr.mxu0 0.0
      %1702 = vmatpush1.msra.mxu0 0.0
      %1703 = vmatprep.subr.mxu0 0.0
      %1704 = vmatpush1.msra.mxu0 0.0
      %1705 = vmatprep.subr.mxu0 0.0
      %1706 = vmatpush1.msra.mxu0 0.0
      %1707 = vmatprep.subr.mxu0 0.0
      %1708 = vmatpush1.msra.mxu0 0.0
      %1709 = vmatprep.subr.mxu0 0.0
      %1710 = vmatpush1.msra.mxu0 0.0
      %1711 = vmatprep.subr.mxu0 0.0
      %1712 = vmatpush1.msra.mxu0 0.0
      %1713 = vmatprep.subr.mxu0 0.0
      %1714 = vmatpush1.msra.mxu0 0.0
      %1715 = vmatprep.subr.mxu0 0.0
      %1716 = vmatpush1.msra.mxu0 0.0
      %1717 = vmatprep.subr.mxu0 0.0
      %1718 = vmatpush1.msra.mxu0 0.0
      %1719 = vmatprep.subr.mxu0 0.0
      %1720 = vmatpush1.msra.mxu0 0.0
      %1721 = vmatprep.subr.mxu0 0.0
      %1722 = vmatpush1.msra.mxu0 0.0
      %1723 = vmatprep.subr.mxu0 0.0
      %1724 = vmatpush1.msra.mxu0 0.0
      %1725 = vmatprep.subr.mxu0 0.0
      %1726 = vmatpush1.msra.mxu0 0.0
      %1727 = vmatprep.subr.mxu0 %v1604
      %1728 = vmatpush1.msra.mxu0 %v1603
      %1729 = vmatprep.subr.mxu0 %v1596
      %1730 = vmatpush1.msra.mxu0 %v1595
      %1731 = vmatprep.subr.mxu0 0.0
      %1732 = vmatpush2.msra.mxu0 0.0
      %1733 = vmatprep.subr.mxu0 0.0
      %1734 = vmatpush2.msra.mxu0 0.0
      %1735 = vmatprep.subr.mxu0 0.0
      %1736 = vmatpush2.msra.mxu0 0.0
      %1737 = vmatprep.subr.mxu0 0.0
      %1738 = vmatpush2.msra.mxu0 0.0
      %1739 = vmatprep.subr.mxu0 0.0
      %1740 = vmatpush2.msra.mxu0 0.0
      %1741 = vmatprep.subr.mxu0 0.0
      %1742 = vmatpush2.msra.mxu0 0.0
      %1743 = vmatprep.subr.mxu0 0.0
      %1744 = vmatpush2.msra.mxu0 0.0
      %1745 = vmatprep.subr.mxu0 0.0
      %1746 = vmatpush2.msra.mxu0 0.0
      %1747 = vmatprep.subr.mxu0 0.0
      %1748 = vmatpush2.msra.mxu0 0.0
      %1749 = vmatprep.subr.mxu0 0.0
      %1750 = vmatpush2.msra.mxu0 0.0
      %1751 = vmatprep.subr.mxu0 0.0
      %1752 = vmatpush2.msra.mxu0 0.0
      %1753 = vmatprep.subr.mxu0 0.0
      %1754 = vmatpush2.msra.mxu0 0.0
      %1755 = vmatprep.subr.mxu0 0.0
      %1756 = vmatpush2.msra.mxu0 0.0
      %1757 = vmatprep.subr.mxu0 0.0
      %1758 = vmatpush2.msra.mxu0 0.0
      %1759 = vmatprep.subr.mxu0 0.0
      %1760 = vmatpush2.msra.mxu0 0.0
      %1761 = vmatprep.subr.mxu0 0.0
      %1762 = vmatpush2.msra.mxu0 0.0
      %1763 = vmatprep.mubr.f32.mxu0 0.0
      %1764 = vmatmul.mubr.f32.gmra.mxu0 %v1626
      %v1765 = vpop.f32.mrf.mxu0
      %v1766 = vadd.f32 0.0, %v1765
      %v1767 = vpop.f32.mrf.mxu0
      %v1768 = vadd.f32 0.0, %v1767
      %1769 = vdwg.mxu0
      %1770 = vmatprep.subr.mxu0 0.0
      %1771 = vmatpush1.msra.mxu0 0.0
      %1772 = vmatprep.subr.mxu0 0.0
      %1773 = vmatpush1.msra.mxu0 0.0
      %1774 = vmatprep.subr.mxu0 0.0
      %1775 = vmatpush1.msra.mxu0 0.0
      %1776 = vmatprep.subr.mxu0 0.0
      %1777 = vmatpush1.msra.mxu0 0.0
      %1778 = vmatprep.subr.mxu0 0.0
      %1779 = vmatpush1.msra.mxu0 0.0
      %1780 = vmatprep.subr.mxu0 0.0
      %1781 = vmatpush1.msra.mxu0 0.0
      %1782 = vmatprep.subr.mxu0 0.0
      %1783 = vmatpush1.msra.mxu0 0.0
      %1784 = vmatprep.subr.mxu0 0.0
      %1785 = vmatpush1.msra.mxu0 0.0
      %1786 = vmatprep.subr.mxu0 0.0
      %1787 = vmatpush1.msra.mxu0 0.0
      %1788 = vmatprep.subr.mxu0 0.0
      %1789 = vmatpush1.msra.mxu0 0.0
      %1790 = vmatprep.subr.mxu0 0.0
      %1791 = vmatpush1.msra.mxu0 0.0
      %1792 = vmatprep.subr.mxu0 0.0
      %1793 = vmatpush1.msra.mxu0 0.0
      %1794 = vmatprep.subr.mxu0 0.0
      %1795 = vmatpush1.msra.mxu0 0.0
      %1796 = vmatprep.subr.mxu0 0.0
      %1797 = vmatpush1.msra.mxu0 0.0
      %1798 = vmatprep.subr.mxu0 %v1606
      %1799 = vmatpush1.msra.mxu0 %v1605
      %1800 = vmatprep.subr.mxu0 %v1598
      %1801 = vmatpush1.msra.mxu0 %v1597
      %1802 = vmatprep.subr.mxu0 0.0
      %1803 = vmatpush2.msra.mxu0 0.0
      %1804 = vmatprep.subr.mxu0 0.0
      %1805 = vmatpush2.msra.mxu0 0.0
      %1806 = vmatprep.subr.mxu0 0.0
      %1807 = vmatpush2.msra.mxu0 0.0
      %1808 = vmatprep.subr.mxu0 0.0
      %1809 = vmatpush2.msra.mxu0 0.0
      %1810 = vmatprep.subr.mxu0 0.0
      %1811 = vmatpush2.msra.mxu0 0.0
      %1812 = vmatprep.subr.mxu0 0.0
      %1813 = vmatpush2.msra.mxu0 0.0
      %1814 = vmatprep.subr.mxu0 0.0
      %1815 = vmatpush2.msra.mxu0 0.0
      %1816 = vmatprep.subr.mxu0 0.0
      %1817 = vmatpush2.msra.mxu0 0.0
      %1818 = vmatprep.subr.mxu0 0.0
      %1819 = vmatpush2.msra.mxu0 0.0
      %1820 = vmatprep.subr.mxu0 0.0
      %1821 = vmatpush2.msra.mxu0 0.0
      %1822 = vmatprep.subr.mxu0 0.0
      %1823 = vmatpush2.msra.mxu0 0.0
      %1824 = vmatprep.subr.mxu0 0.0
      %1825 = vmatpush2.msra.mxu0 0.0
      %1826 = vmatprep.subr.mxu0 0.0
      %1827 = vmatpush2.msra.mxu0 0.0
      %1828 = vmatprep.subr.mxu0 0.0
      %1829 = vmatpush2.msra.mxu0 0.0
      %1830 = vmatprep.subr.mxu0 0.0
      %1831 = vmatpush2.msra.mxu0 0.0
      %1832 = vmatprep.subr.mxu0 0.0
      %1833 = vmatpush2.msra.mxu0 0.0
      %1834 = vmatprep.mubr.f32.mxu0 0.0
      %1835 = vmatmul.mubr.f32.gmra.mxu0 %v1626
      %v1836 = vpop.f32.mrf.mxu0
      %v1837 = vadd.f32 0.0, %v1836
      %v1838 = vpop.f32.mrf.mxu0
      %v1839 = vadd.f32 0.0, %v1838
      %1840 = vdwg.mxu0
      %1841 = vmatprep.subr.mxu0 0.0
      %1842 = vmatpush1.msra.mxu0 0.0
      %1843 = vmatprep.subr.mxu0 0.0
      %1844 = vmatpush1.msra.mxu0 0.0
      %1845 = vmatprep.subr.mxu0 0.0
      %1846 = vmatpush1.msra.mxu0 0.0
      %1847 = vmatprep.subr.mxu0 0.0
      %1848 = vmatpush1.msra.mxu0 0.0
      %1849 = vmatprep.subr.mxu0 0.0
      %1850 = vmatpush1.msra.mxu0 0.0
      %1851 = vmatprep.subr.mxu0 0.0
      %1852 = vmatpush1.msra.mxu0 0.0
      %1853 = vmatprep.subr.mxu0 0.0
      %1854 = vmatpush1.msra.mxu0 0.0
      %1855 = vmatprep.subr.mxu0 0.0
      %1856 = vmatpush1.msra.mxu0 0.0
      %1857 = vmatprep.subr.mxu0 0.0
      %1858 = vmatpush1.msra.mxu0 0.0
      %1859 = vmatprep.subr.mxu0 0.0
      %1860 = vmatpush1.msra.mxu0 0.0
      %1861 = vmatprep.subr.mxu0 0.0
      %1862 = vmatpush1.msra.mxu0 0.0
      %1863 = vmatprep.subr.mxu0 0.0
      %1864 = vmatpush1.msra.mxu0 0.0
      %1865 = vmatprep.subr.mxu0 0.0
      %1866 = vmatpush1.msra.mxu0 0.0
      %1867 = vmatprep.subr.mxu0 0.0
      %1868 = vmatpush1.msra.mxu0 0.0
      %1869 = vmatprep.subr.mxu0 %v1608
      %1870 = vmatpush1.msra.mxu0 %v1607
      %1871 = vmatprep.subr.mxu0 %v1600
      %1872 = vmatpush1.msra.mxu0 %v1599
      %1873 = vmatprep.subr.mxu0 0.0
      %1874 = vmatpush2.msra.mxu0 0.0
      %1875 = vmatprep.subr.mxu0 0.0
      %1876 = vmatpush2.msra.mxu0 0.0
      %1877 = vmatprep.subr.mxu0 0.0
      %1878 = vmatpush2.msra.mxu0 0.0
      %1879 = vmatprep.subr.mxu0 0.0
      %1880 = vmatpush2.msra.mxu0 0.0
      %1881 = vmatprep.subr.mxu0 0.0
      %1882 = vmatpush2.msra.mxu0 0.0
      %1883 = vmatprep.subr.mxu0 0.0
      %1884 = vmatpush2.msra.mxu0 0.0
      %1885 = vmatprep.subr.mxu0 0.0
      %1886 = vmatpush2.msra.mxu0 0.0
      %1887 = vmatprep.subr.mxu0 0.0
      %1888 = vmatpush2.msra.mxu0 0.0
      %1889 = vmatprep.subr.mxu0 0.0
      %1890 = vmatpush2.msra.mxu0 0.0
      %1891 = vmatprep.subr.mxu0 0.0
      %1892 = vmatpush2.msra.mxu0 0.0
      %1893 = vmatprep.subr.mxu0 0.0
      %1894 = vmatpush2.msra.mxu0 0.0
      %1895 = vmatprep.subr.mxu0 0.0
      %1896 = vmatpush2.msra.mxu0 0.0
      %1897 = vmatprep.subr.mxu0 0.0
      %1898 = vmatpush2.msra.mxu0 0.0
      %1899 = vmatprep.subr.mxu0 0.0
      %1900 = vmatpush2.msra.mxu0 0.0
      %1901 = vmatprep.subr.mxu0 0.0
      %1902 = vmatpush2.msra.mxu0 0.0
      %1903 = vmatprep.subr.mxu0 0.0
      %1904 = vmatpush2.msra.mxu0 0.0
      %1905 = vmatprep.mubr.f32.mxu0 0.0
      %1906 = vmatmul.mubr.f32.gmra.mxu0 %v1626
      %v1907 = vpop.f32.mrf.mxu0
      %v1908 = vadd.f32 0.0, %v1907
      %v1909 = vpop.f32.mrf.mxu0
      %v1910 = vadd.f32 0.0, %v1909
      %1911 = vdwg.mxu0
      %v1912 = vsel %vm754, 1, 0
      %v1913 = vsel %vm755, 1, 0
      %v1914 = vsel %vm756, 1, 0
      %v1915 = vsel %vm757, 1, 0
      %v1916 = vsel %vm758, 1, 0
      %v1917 = vsel %vm759, 1, 0
      %v1918 = vsel %vm760, 1, 0
      %v1919 = vsel %vm761, 1, 0
      %vm1920 = vcmp.eq.s32.totalorder %v1912, 1
      %vm1921 = vcmp.eq.s32.totalorder %v1913, 1
      %vm1922 = vcmp.eq.s32.totalorder %v1914, 1
      %vm1923 = vcmp.eq.s32.totalorder %v1915, 1
      %vm1924 = vcmp.eq.s32.totalorder %v1916, 1
      %vm1925 = vcmp.eq.s32.totalorder %v1917, 1
      %vm1926 = vcmp.eq.s32.totalorder %v1918, 1
      %vm1927 = vcmp.eq.s32.totalorder %v1919, 1
      %v1928 = vsel %vm1920, %v1695, 0.0
      %v1929 = vsel %vm1921, %v1697, 0.0
      %v1930 = vsel %vm1922, %v1766, 0.0
      %v1931 = vsel %vm1923, %v1768, 0.0
      %v1932 = vsel %vm1924, %v1837, 0.0
      %v1933 = vsel %vm1925, %v1839, 0.0
      %v1934 = vsel %vm1926, %v1908, 0.0
      %v1935 = vsel %vm1927, %v1910, 0.0
      %v1936 = vadd.f32 %v1546, %v1928
      %v1937 = vadd.f32 %v1547, %v1929
      %v1938 = vadd.f32 %v1548, %v1930
      %v1939 = vadd.f32 %v1549, %v1931
      %v1940 = vadd.f32 %v1550, %v1932
      %v1941 = vadd.f32 %v1551, %v1933
      %v1942 = vadd.f32 %v1552, %v1934
      %v1943 = vadd.f32 %v1553, %v1935
      %s1944 = scalar_lea.vmem %s2, 24
      %v1945 = vld [vmem:[%s1944] sm:$0xff]
      %1946 = vrot.lane.b32.xlu0 %v762, 1
      %v1947 = vpop.permute.xlu0 %1946
      %1948 = vrot.lane.b32.xlu0 %v763, 1
      %v1949 = vpop.permute.xlu0 %1948
      %1950 = vrot.lane.b32.xlu0 %v764, 1
      %v1951 = vpop.permute.xlu0 %1950
      %1952 = vrot.lane.b32.xlu0 %v765, 1
      %v1953 = vpop.permute.xlu0 %1952
      %1954 = vrot.lane.b32.xlu0 %v766, 1
      %v1955 = vpop.permute.xlu0 %1954
      %1956 = vrot.lane.b32.xlu0 %v767, 1
      %v1957 = vpop.permute.xlu0 %1956
      %1958 = vrot.lane.b32.xlu0 %v768, 1
      %v1959 = vpop.permute.xlu0 %1958
      %1960 = vrot.lane.b32.xlu0 %v769, 1
      %v1961 = vpop.permute.xlu0 %1960
      %1962 = vrot.lane.b32.xlu0 %v770, 1
      %v1963 = vpop.permute.xlu0 %1962
      %1964 = vrot.lane.b32.xlu0 %v771, 1
      %v1965 = vpop.permute.xlu0 %1964
      %1966 = vrot.lane.b32.xlu0 %v772, 1
      %v1967 = vpop.permute.xlu0 %1966
      %1968 = vrot.lane.b32.xlu0 %v773, 1
      %v1969 = vpop.permute.xlu0 %1968
      %1970 = vrot.lane.b32.xlu0 %v774, 1
      %v1971 = vpop.permute.xlu0 %1970
      %1972 = vrot.lane.b32.xlu0 %v775, 1
      %v1973 = vpop.permute.xlu0 %1972
      %1974 = vrot.lane.b32.xlu0 %v776, 1
      %v1975 = vpop.permute.xlu0 %1974
      %1976 = vrot.lane.b32.xlu0 %v777, 1
      %v1977 = vpop.permute.xlu0 %1976
      %1978 = vrot.lane.b32.xlu0 %v778, 1
      %v1979 = vpop.permute.xlu0 %1978
      %1980 = vrot.lane.b32.xlu0 %v779, 1
      %v1981 = vpop.permute.xlu0 %1980
      %vm1982 = vcmask 7168
      %v1983 = vsel %vm1982, %v1947, %v1949
      %v1984 = vsel %vm1982, %v1949, %v1951
      %v1985 = vsel %vm1982, %v1951, %v1953
      %v1986 = vsel %vm1982, %v1953, %v1955
      %v1987 = vsel %vm1982, %v1955, %v1957
      %v1988 = vsel %vm1982, %v1957, %v1959
      %v1989 = vsel %vm1982, %v1959, %v1961
      %v1990 = vsel %vm1982, %v1961, %v1963
      %v1991 = vsel %vm1982, %v1965, %v1967
      %v1992 = vsel %vm1982, %v1967, %v1969
      %v1993 = vsel %vm1982, %v1969, %v1971
      %v1994 = vsel %vm1982, %v1971, %v1973
      %v1995 = vsel %vm1982, %v1973, %v1975
      %v1996 = vsel %vm1982, %v1975, %v1977
      %v1997 = vsel %vm1982, %v1977, %v1979
      %v1998 = vsel %vm1982, %v1979, %v1981
      %v2016 = vsel %vm868, %v1945, 0
      %2018 = vmatprep.subr.mxu0 0.0
      %2019 = vmatpush1.msra.mxu0 0.0
      %2020 = vmatprep.subr.mxu0 0.0
      %2021 = vmatpush1.msra.mxu0 0.0
      %2022 = vmatprep.subr.mxu0 0.0
      %2023 = vmatpush1.msra.mxu0 0.0
      %2024 = vmatprep.subr.mxu0 0.0
      %2025 = vmatpush1.msra.mxu0 0.0
      %2026 = vmatprep.subr.mxu0 0.0
      %2027 = vmatpush1.msra.mxu0 0.0
      %2028 = vmatprep.subr.mxu0 0.0
      %2029 = vmatpush1.msra.mxu0 0.0
      %2030 = vmatprep.subr.mxu0 0.0
      %2031 = vmatpush1.msra.mxu0 0.0
      %2032 = vmatprep.subr.mxu0 0.0
      %2033 = vmatpush1.msra.mxu0 0.0
      %2034 = vmatprep.subr.mxu0 0.0
      %2035 = vmatpush1.msra.mxu0 0.0
      %2036 = vmatprep.subr.mxu0 0.0
      %2037 = vmatpush1.msra.mxu0 0.0
      %2038 = vmatprep.subr.mxu0 0.0
      %2039 = vmatpush1.msra.mxu0 0.0
      %2040 = vmatprep.subr.mxu0 0.0
      %2041 = vmatpush1.msra.mxu0 0.0
      %2042 = vmatprep.subr.mxu0 0.0
      %2043 = vmatpush1.msra.mxu0 0.0
      %2044 = vmatprep.subr.mxu0 0.0
      %2045 = vmatpush1.msra.mxu0 0.0
      %2046 = vmatprep.subr.mxu0 %v1992
      %2047 = vmatpush1.msra.mxu0 %v1991
      %2048 = vmatprep.subr.mxu0 %v1984
      %2049 = vmatpush1.msra.mxu0 %v1983
      %2050 = vmatprep.subr.mxu0 0.0
      %2051 = vmatpush2.msra.mxu0 0.0
      %2052 = vmatprep.subr.mxu0 0.0
      %2053 = vmatpush2.msra.mxu0 0.0
      %2054 = vmatprep.subr.mxu0 0.0
      %2055 = vmatpush2.msra.mxu0 0.0
      %2056 = vmatprep.subr.mxu0 0.0
      %2057 = vmatpush2.msra.mxu0 0.0
      %2058 = vmatprep.subr.mxu0 0.0
      %2059 = vmatpush2.msra.mxu0 0.0
      %2060 = vmatprep.subr.mxu0 0.0
      %2061 = vmatpush2.msra.mxu0 0.0
      %2062 = vmatprep.subr.mxu0 0.0
      %2063 = vmatpush2.msra.mxu0 0.0
      %2064 = vmatprep.subr.mxu0 0.0
      %2065 = vmatpush2.msra.mxu0 0.0
      %2066 = vmatprep.subr.mxu0 0.0
      %2067 = vmatpush2.msra.mxu0 0.0
      %2068 = vmatprep.subr.mxu0 0.0
      %2069 = vmatpush2.msra.mxu0 0.0
      %2070 = vmatprep.subr.mxu0 0.0
      %2071 = vmatpush2.msra.mxu0 0.0
      %2072 = vmatprep.subr.mxu0 0.0
      %2073 = vmatpush2.msra.mxu0 0.0
      %2074 = vmatprep.subr.mxu0 0.0
      %2075 = vmatpush2.msra.mxu0 0.0
      %2076 = vmatprep.subr.mxu0 0.0
      %2077 = vmatpush2.msra.mxu0 0.0
      %2078 = vmatprep.subr.mxu0 0.0
      %2079 = vmatpush2.msra.mxu0 0.0
      %2080 = vmatprep.subr.mxu0 0.0
      %2081 = vmatpush2.msra.mxu0 0.0
      %2082 = vmatprep.mubr.f32.mxu0 0.0
      %2083 = vmatmul.mubr.f32.gmra.mxu0 %v2016
      %v2084 = vpop.f32.mrf.mxu0
      %v2085 = vadd.f32 0.0, %v2084
      %v2086 = vpop.f32.mrf.mxu0
      %v2087 = vadd.f32 0.0, %v2086
      %2088 = vdwg.mxu0
      %2089 = vmatprep.subr.mxu0 0.0
      %2090 = vmatpush1.msra.mxu0 0.0
      %2091 = vmatprep.subr.mxu0 0.0
      %2092 = vmatpush1.msra.mxu0 0.0
      %2093 = vmatprep.subr.mxu0 0.0
      %2094 = vmatpush1.msra.mxu0 0.0
      %2095 = vmatprep.subr.mxu0 0.0
      %2096 = vmatpush1.msra.mxu0 0.0
      %2097 = vmatprep.subr.mxu0 0.0
      %2098 = vmatpush1.msra.mxu0 0.0
      %2099 = vmatprep.subr.mxu0 0.0
      %2100 = vmatpush1.msra.mxu0 0.0
      %2101 = vmatprep.subr.mxu0 0.0
      %2102 = vmatpush1.msra.mxu0 0.0
      %2103 = vmatprep.subr.mxu0 0.0
      %2104 = vmatpush1.msra.mxu0 0.0
      %2105 = vmatprep.subr.mxu0 0.0
      %2106 = vmatpush1.msra.mxu0 0.0
      %2107 = vmatprep.subr.mxu0 0.0
      %2108 = vmatpush1.msra.mxu0 0.0
      %2109 = vmatprep.subr.mxu0 0.0
      %2110 = vmatpush1.msra.mxu0 0.0
      %2111 = vmatprep.subr.mxu0 0.0
      %2112 = vmatpush1.msra.mxu0 0.0
      %2113 = vmatprep.subr.mxu0 0.0
      %2114 = vmatpush1.msra.mxu0 0.0
      %2115 = vmatprep.subr.mxu0 0.0
      %2116 = vmatpush1.msra.mxu0 0.0
      %2117 = vmatprep.subr.mxu0 %v1994
      %2118 = vmatpush1.msra.mxu0 %v1993
      %2119 = vmatprep.subr.mxu0 %v1986
      %2120 = vmatpush1.msra.mxu0 %v1985
      %2121 = vmatprep.subr.mxu0 0.0
      %2122 = vmatpush2.msra.mxu0 0.0
      %2123 = vmatprep.subr.mxu0 0.0
      %2124 = vmatpush2.msra.mxu0 0.0
      %2125 = vmatprep.subr.mxu0 0.0
      %2126 = vmatpush2.msra.mxu0 0.0
      %2127 = vmatprep.subr.mxu0 0.0
      %2128 = vmatpush2.msra.mxu0 0.0
      %2129 = vmatprep.subr.mxu0 0.0
      %2130 = vmatpush2.msra.mxu0 0.0
      %2131 = vmatprep.subr.mxu0 0.0
      %2132 = vmatpush2.msra.mxu0 0.0
      %2133 = vmatprep.subr.mxu0 0.0
      %2134 = vmatpush2.msra.mxu0 0.0
      %2135 = vmatprep.subr.mxu0 0.0
      %2136 = vmatpush2.msra.mxu0 0.0
      %2137 = vmatprep.subr.mxu0 0.0
      %2138 = vmatpush2.msra.mxu0 0.0
      %2139 = vmatprep.subr.mxu0 0.0
      %2140 = vmatpush2.msra.mxu0 0.0
      %2141 = vmatprep.subr.mxu0 0.0
      %2142 = vmatpush2.msra.mxu0 0.0
      %2143 = vmatprep.subr.mxu0 0.0
      %2144 = vmatpush2.msra.mxu0 0.0
      %2145 = vmatprep.subr.mxu0 0.0
      %2146 = vmatpush2.msra.mxu0 0.0
      %2147 = vmatprep.subr.mxu0 0.0
      %2148 = vmatpush2.msra.mxu0 0.0
      %2149 = vmatprep.subr.mxu0 0.0
      %2150 = vmatpush2.msra.mxu0 0.0
      %2151 = vmatprep.subr.mxu0 0.0
      %2152 = vmatpush2.msra.mxu0 0.0
      %2153 = vmatprep.mubr.f32.mxu0 0.0
      %2154 = vmatmul.mubr.f32.gmra.mxu0 %v2016
      %v2155 = vpop.f32.mrf.mxu0
      %v2156 = vadd.f32 0.0, %v2155
      %v2157 = vpop.f32.mrf.mxu0
      %v2158 = vadd.f32 0.0, %v2157
      %2159 = vdwg.mxu0
      %2160 = vmatprep.subr.mxu0 0.0
      %2161 = vmatpush1.msra.mxu0 0.0
      %2162 = vmatprep.subr.mxu0 0.0
      %2163 = vmatpush1.msra.mxu0 0.0
      %2164 = vmatprep.subr.mxu0 0.0
      %2165 = vmatpush1.msra.mxu0 0.0
      %2166 = vmatprep.subr.mxu0 0.0
      %2167 = vmatpush1.msra.mxu0 0.0
      %2168 = vmatprep.subr.mxu0 0.0
      %2169 = vmatpush1.msra.mxu0 0.0
      %2170 = vmatprep.subr.mxu0 0.0
      %2171 = vmatpush1.msra.mxu0 0.0
      %2172 = vmatprep.subr.mxu0 0.0
      %2173 = vmatpush1.msra.mxu0 0.0
      %2174 = vmatprep.subr.mxu0 0.0
      %2175 = vmatpush1.msra.mxu0 0.0
      %2176 = vmatprep.subr.mxu0 0.0
      %2177 = vmatpush1.msra.mxu0 0.0
      %2178 = vmatprep.subr.mxu0 0.0
      %2179 = vmatpush1.msra.mxu0 0.0
      %2180 = vmatprep.subr.mxu0 0.0
      %2181 = vmatpush1.msra.mxu0 0.0
      %2182 = vmatprep.subr.mxu0 0.0
      %2183 = vmatpush1.msra.mxu0 0.0
      %2184 = vmatprep.subr.mxu0 0.0
      %2185 = vmatpush1.msra.mxu0 0.0
      %2186 = vmatprep.subr.mxu0 0.0
      %2187 = vmatpush1.msra.mxu0 0.0
      %2188 = vmatprep.subr.mxu0 %v1996
      %2189 = vmatpush1.msra.mxu0 %v1995
      %2190 = vmatprep.subr.mxu0 %v1988
      %2191 = vmatpush1.msra.mxu0 %v1987
      %2192 = vmatprep.subr.mxu0 0.0
      %2193 = vmatpush2.msra.mxu0 0.0
      %2194 = vmatprep.subr.mxu0 0.0
      %2195 = vmatpush2.msra.mxu0 0.0
      %2196 = vmatprep.subr.mxu0 0.0
      %2197 = vmatpush2.msra.mxu0 0.0
      %2198 = vmatprep.subr.mxu0 0.0
      %2199 = vmatpush2.msra.mxu0 0.0
      %2200 = vmatprep.subr.mxu0 0.0
      %2201 = vmatpush2.msra.mxu0 0.0
      %2202 = vmatprep.subr.mxu0 0.0
      %2203 = vmatpush2.msra.mxu0 0.0
      %2204 = vmatprep.subr.mxu0 0.0
      %2205 = vmatpush2.msra.mxu0 0.0
      %2206 = vmatprep.subr.mxu0 0.0
      %2207 = vmatpush2.msra.mxu0 0.0
      %2208 = vmatprep.subr.mxu0 0.0
      %2209 = vmatpush2.msra.mxu0 0.0
      %2210 = vmatprep.subr.mxu0 0.0
      %2211 = vmatpush2.msra.mxu0 0.0
      %2212 = vmatprep.subr.mxu0 0.0
      %2213 = vmatpush2.msra.mxu0 0.0
      %2214 = vmatprep.subr.mxu0 0.0
      %2215 = vmatpush2.msra.mxu0 0.0
      %2216 = vmatprep.subr.mxu0 0.0
      %2217 = vmatpush2.msra.mxu0 0.0
      %2218 = vmatprep.subr.mxu0 0.0
      %2219 = vmatpush2.msra.mxu0 0.0
      %2220 = vmatprep.subr.mxu0 0.0
      %2221 = vmatpush2.msra.mxu0 0.0
      %2222 = vmatprep.subr.mxu0 0.0
      %2223 = vmatpush2.msra.mxu0 0.0
      %2224 = vmatprep.mubr.f32.mxu0 0.0
      %2225 = vmatmul.mubr.f32.gmra.mxu0 %v2016
      %v2226 = vpop.f32.mrf.mxu0
      %v2227 = vadd.f32 0.0, %v2226
      %v2228 = vpop.f32.mrf.mxu0
      %v2229 = vadd.f32 0.0, %v2228
      %2230 = vdwg.mxu0
      %2231 = vmatprep.subr.mxu0 0.0
      %2232 = vmatpush1.msra.mxu0 0.0
      %2233 = vmatprep.subr.mxu0 0.0
      %2234 = vmatpush1.msra.mxu0 0.0
      %2235 = vmatprep.subr.mxu0 0.0
      %2236 = vmatpush1.msra.mxu0 0.0
      %2237 = vmatprep.subr.mxu0 0.0
      %2238 = vmatpush1.msra.mxu0 0.0
      %2239 = vmatprep.subr.mxu0 0.0
      %2240 = vmatpush1.msra.mxu0 0.0
      %2241 = vmatprep.subr.mxu0 0.0
      %2242 = vmatpush1.msra.mxu0 0.0
      %2243 = vmatprep.subr.mxu0 0.0
      %2244 = vmatpush1.msra.mxu0 0.0
      %2245 = vmatprep.subr.mxu0 0.0
      %2246 = vmatpush1.msra.mxu0 0.0
      %2247 = vmatprep.subr.mxu0 0.0
      %2248 = vmatpush1.msra.mxu0 0.0
      %2249 = vmatprep.subr.mxu0 0.0
      %2250 = vmatpush1.msra.mxu0 0.0
      %2251 = vmatprep.subr.mxu0 0.0
      %2252 = vmatpush1.msra.mxu0 0.0
      %2253 = vmatprep.subr.mxu0 0.0
      %2254 = vmatpush1.msra.mxu0 0.0
      %2255 = vmatprep.subr.mxu0 0.0
      %2256 = vmatpush1.msra.mxu0 0.0
      %2257 = vmatprep.subr.mxu0 0.0
      %2258 = vmatpush1.msra.mxu0 0.0
      %2259 = vmatprep.subr.mxu0 %v1998
      %2260 = vmatpush1.msra.mxu0 %v1997
      %2261 = vmatprep.subr.mxu0 %v1990
      %2262 = vmatpush1.msra.mxu0 %v1989
      %2263 = vmatprep.subr.mxu0 0.0
      %2264 = vmatpush2.msra.mxu0 0.0
      %2265 = vmatprep.subr.mxu0 0.0
      %2266 = vmatpush2.msra.mxu0 0.0
      %2267 = vmatprep.subr.mxu0 0.0
      %2268 = vmatpush2.msra.mxu0 0.0
      %2269 = vmatprep.subr.mxu0 0.0
      %2270 = vmatpush2.msra.mxu0 0.0
      %2271 = vmatprep.subr.mxu0 0.0
      %2272 = vmatpush2.msra.mxu0 0.0
      %2273 = vmatprep.subr.mxu0 0.0
      %2274 = vmatpush2.msra.mxu0 0.0
      %2275 = vmatprep.subr.mxu0 0.0
      %2276 = vmatpush2.msra.mxu0 0.0
      %2277 = vmatprep.subr.mxu0 0.0
      %2278 = vmatpush2.msra.mxu0 0.0
      %2279 = vmatprep.subr.mxu0 0.0
      %2280 = vmatpush2.msra.mxu0 0.0
      %2281 = vmatprep.subr.mxu0 0.0
      %2282 = vmatpush2.msra.mxu0 0.0
      %2283 = vmatprep.subr.mxu0 0.0
      %2284 = vmatpush2.msra.mxu0 0.0
      %2285 = vmatprep.subr.mxu0 0.0
      %2286 = vmatpush2.msra.mxu0 0.0
      %2287 = vmatprep.subr.mxu0 0.0
      %2288 = vmatpush2.msra.mxu0 0.0
      %2289 = vmatprep.subr.mxu0 0.0
      %2290 = vmatpush2.msra.mxu0 0.0
      %2291 = vmatprep.subr.mxu0 0.0
      %2292 = vmatpush2.msra.mxu0 0.0
      %2293 = vmatprep.subr.mxu0 0.0
      %2294 = vmatpush2.msra.mxu0 0.0
      %2295 = vmatprep.mubr.f32.mxu0 0.0
      %2296 = vmatmul.mubr.f32.gmra.mxu0 %v2016
      %v2297 = vpop.f32.mrf.mxu0
      %v2298 = vadd.f32 0.0, %v2297
      %v2299 = vpop.f32.mrf.mxu0
      %v2300 = vadd.f32 0.0, %v2299
      %2301 = vdwg.mxu0
      %v2302 = vsel %vm1164, %v2085, 0.0
      %v2303 = vsel %vm1165, %v2087, 0.0
      %v2304 = vsel %vm1166, %v2156, 0.0
      %v2305 = vsel %vm1167, %v2158, 0.0
      %v2306 = vsel %vm1168, %v2227, 0.0
      %v2307 = vsel %vm1169, %v2229, 0.0
      %v2308 = vsel %vm1170, %v2298, 0.0
      %v2309 = vsel %vm1171, %v2300, 0.0
      %v2310 = vadd.f32 %v1936, %v2302
      %v2311 = vadd.f32 %v1937, %v2303
      %v2312 = vadd.f32 %v1938, %v2304
      %v2313 = vadd.f32 %v1939, %v2305
      %v2314 = vadd.f32 %v1940, %v2306
      %v2315 = vadd.f32 %v1941, %v2307
      %v2316 = vadd.f32 %v1942, %v2308
      %v2317 = vadd.f32 %v1943, %v2309
      %s2318 = scalar_lea.vmem %s2, 32
      %v2319 = vld [vmem:[%s2318] sm:$0xff]
      %v2321 = vsel %vm868, %v2319, 0
      %2323 = vmatprep.subr.mxu0 0.0
      %2324 = vmatpush1.msra.mxu0 0.0
      %2325 = vmatprep.subr.mxu0 0.0
      %2326 = vmatpush1.msra.mxu0 0.0
      %2327 = vmatprep.subr.mxu0 0.0
      %2328 = vmatpush1.msra.mxu0 0.0
      %2329 = vmatprep.subr.mxu0 0.0
      %2330 = vmatpush1.msra.mxu0 0.0
      %2331 = vmatprep.subr.mxu0 0.0
      %2332 = vmatpush1.msra.mxu0 0.0
      %2333 = vmatprep.subr.mxu0 0.0
      %2334 = vmatpush1.msra.mxu0 0.0
      %2335 = vmatprep.subr.mxu0 0.0
      %2336 = vmatpush1.msra.mxu0 0.0
      %2337 = vmatprep.subr.mxu0 0.0
      %2338 = vmatpush1.msra.mxu0 0.0
      %2339 = vmatprep.subr.mxu0 0.0
      %2340 = vmatpush1.msra.mxu0 0.0
      %2341 = vmatprep.subr.mxu0 0.0
      %2342 = vmatpush1.msra.mxu0 0.0
      %2343 = vmatprep.subr.mxu0 0.0
      %2344 = vmatpush1.msra.mxu0 0.0
      %2345 = vmatprep.subr.mxu0 0.0
      %2346 = vmatpush1.msra.mxu0 0.0
      %2347 = vmatprep.subr.mxu0 0.0
      %2348 = vmatpush1.msra.mxu0 0.0
      %2349 = vmatprep.subr.mxu0 0.0
      %2350 = vmatpush1.msra.mxu0 0.0
      %2351 = vmatprep.subr.mxu0 %v773
      %2352 = vmatpush1.msra.mxu0 %v772
      %2353 = vmatprep.subr.mxu0 %v764
      %2354 = vmatpush1.msra.mxu0 %v763
      %2355 = vmatprep.subr.mxu0 0.0
      %2356 = vmatpush2.msra.mxu0 0.0
      %2357 = vmatprep.subr.mxu0 0.0
      %2358 = vmatpush2.msra.mxu0 0.0
      %2359 = vmatprep.subr.mxu0 0.0
      %2360 = vmatpush2.msra.mxu0 0.0
      %2361 = vmatprep.subr.mxu0 0.0
      %2362 = vmatpush2.msra.mxu0 0.0
      %2363 = vmatprep.subr.mxu0 0.0
      %2364 = vmatpush2.msra.mxu0 0.0
      %2365 = vmatprep.subr.mxu0 0.0
      %2366 = vmatpush2.msra.mxu0 0.0
      %2367 = vmatprep.subr.mxu0 0.0
      %2368 = vmatpush2.msra.mxu0 0.0
      %2369 = vmatprep.subr.mxu0 0.0
      %2370 = vmatpush2.msra.mxu0 0.0
      %2371 = vmatprep.subr.mxu0 0.0
      %2372 = vmatpush2.msra.mxu0 0.0
      %2373 = vmatprep.subr.mxu0 0.0
      %2374 = vmatpush2.msra.mxu0 0.0
      %2375 = vmatprep.subr.mxu0 0.0
      %2376 = vmatpush2.msra.mxu0 0.0
      %2377 = vmatprep.subr.mxu0 0.0
      %2378 = vmatpush2.msra.mxu0 0.0
      %2379 = vmatprep.subr.mxu0 0.0
      %2380 = vmatpush2.msra.mxu0 0.0
      %2381 = vmatprep.subr.mxu0 0.0
      %2382 = vmatpush2.msra.mxu0 0.0
      %2383 = vmatprep.subr.mxu0 0.0
      %2384 = vmatpush2.msra.mxu0 0.0
      %2385 = vmatprep.subr.mxu0 0.0
      %2386 = vmatpush2.msra.mxu0 0.0
      %2387 = vmatprep.mubr.f32.mxu0 0.0
      %2388 = vmatmul.mubr.f32.gmra.mxu0 %v2321
      %v2389 = vpop.f32.mrf.mxu0
      %v2390 = vadd.f32 0.0, %v2389
      %v2391 = vpop.f32.mrf.mxu0
      %v2392 = vadd.f32 0.0, %v2391
      %2393 = vdwg.mxu0
      %2394 = vmatprep.subr.mxu0 0.0
      %2395 = vmatpush1.msra.mxu0 0.0
      %2396 = vmatprep.subr.mxu0 0.0
      %2397 = vmatpush1.msra.mxu0 0.0
      %2398 = vmatprep.subr.mxu0 0.0
      %2399 = vmatpush1.msra.mxu0 0.0
      %2400 = vmatprep.subr.mxu0 0.0
      %2401 = vmatpush1.msra.mxu0 0.0
      %2402 = vmatprep.subr.mxu0 0.0
      %2403 = vmatpush1.msra.mxu0 0.0
      %2404 = vmatprep.subr.mxu0 0.0
      %2405 = vmatpush1.msra.mxu0 0.0
      %2406 = vmatprep.subr.mxu0 0.0
      %2407 = vmatpush1.msra.mxu0 0.0
      %2408 = vmatprep.subr.mxu0 0.0
      %2409 = vmatpush1.msra.mxu0 0.0
      %2410 = vmatprep.subr.mxu0 0.0
      %2411 = vmatpush1.msra.mxu0 0.0
      %2412 = vmatprep.subr.mxu0 0.0
      %2413 = vmatpush1.msra.mxu0 0.0
      %2414 = vmatprep.subr.mxu0 0.0
      %2415 = vmatpush1.msra.mxu0 0.0
      %2416 = vmatprep.subr.mxu0 0.0
      %2417 = vmatpush1.msra.mxu0 0.0
      %2418 = vmatprep.subr.mxu0 0.0
      %2419 = vmatpush1.msra.mxu0 0.0
      %2420 = vmatprep.subr.mxu0 0.0
      %2421 = vmatpush1.msra.mxu0 0.0
      %2422 = vmatprep.subr.mxu0 %v775
      %2423 = vmatpush1.msra.mxu0 %v774
      %2424 = vmatprep.subr.mxu0 %v766
      %2425 = vmatpush1.msra.mxu0 %v765
      %2426 = vmatprep.subr.mxu0 0.0
      %2427 = vmatpush2.msra.mxu0 0.0
      %2428 = vmatprep.subr.mxu0 0.0
      %2429 = vmatpush2.msra.mxu0 0.0
      %2430 = vmatprep.subr.mxu0 0.0
      %2431 = vmatpush2.msra.mxu0 0.0
      %2432 = vmatprep.subr.mxu0 0.0
      %2433 = vmatpush2.msra.mxu0 0.0
      %2434 = vmatprep.subr.mxu0 0.0
      %2435 = vmatpush2.msra.mxu0 0.0
      %2436 = vmatprep.subr.mxu0 0.0
      %2437 = vmatpush2.msra.mxu0 0.0
      %2438 = vmatprep.subr.mxu0 0.0
      %2439 = vmatpush2.msra.mxu0 0.0
      %2440 = vmatprep.subr.mxu0 0.0
      %2441 = vmatpush2.msra.mxu0 0.0
      %2442 = vmatprep.subr.mxu0 0.0
      %2443 = vmatpush2.msra.mxu0 0.0
      %2444 = vmatprep.subr.mxu0 0.0
      %2445 = vmatpush2.msra.mxu0 0.0
      %2446 = vmatprep.subr.mxu0 0.0
      %2447 = vmatpush2.msra.mxu0 0.0
      %2448 = vmatprep.subr.mxu0 0.0
      %2449 = vmatpush2.msra.mxu0 0.0
      %2450 = vmatprep.subr.mxu0 0.0
      %2451 = vmatpush2.msra.mxu0 0.0
      %2452 = vmatprep.subr.mxu0 0.0
      %2453 = vmatpush2.msra.mxu0 0.0
      %2454 = vmatprep.subr.mxu0 0.0
      %2455 = vmatpush2.msra.mxu0 0.0
      %2456 = vmatprep.subr.mxu0 0.0
      %2457 = vmatpush2.msra.mxu0 0.0
      %2458 = vmatprep.mubr.f32.mxu0 0.0
      %2459 = vmatmul.mubr.f32.gmra.mxu0 %v2321
      %v2460 = vpop.f32.mrf.mxu0
      %v2461 = vadd.f32 0.0, %v2460
      %v2462 = vpop.f32.mrf.mxu0
      %v2463 = vadd.f32 0.0, %v2462
      %2464 = vdwg.mxu0
      %2465 = vmatprep.subr.mxu0 0.0
      %2466 = vmatpush1.msra.mxu0 0.0
      %2467 = vmatprep.subr.mxu0 0.0
      %2468 = vmatpush1.msra.mxu0 0.0
      %2469 = vmatprep.subr.mxu0 0.0
      %2470 = vmatpush1.msra.mxu0 0.0
      %2471 = vmatprep.subr.mxu0 0.0
      %2472 = vmatpush1.msra.mxu0 0.0
      %2473 = vmatprep.subr.mxu0 0.0
      %2474 = vmatpush1.msra.mxu0 0.0
      %2475 = vmatprep.subr.mxu0 0.0
      %2476 = vmatpush1.msra.mxu0 0.0
      %2477 = vmatprep.subr.mxu0 0.0
      %2478 = vmatpush1.msra.mxu0 0.0
      %2479 = vmatprep.subr.mxu0 0.0
      %2480 = vmatpush1.msra.mxu0 0.0
      %2481 = vmatprep.subr.mxu0 0.0
      %2482 = vmatpush1.msra.mxu0 0.0
      %2483 = vmatprep.subr.mxu0 0.0
      %2484 = vmatpush1.msra.mxu0 0.0
      %2485 = vmatprep.subr.mxu0 0.0
      %2486 = vmatpush1.msra.mxu0 0.0
      %2487 = vmatprep.subr.mxu0 0.0
      %2488 = vmatpush1.msra.mxu0 0.0
      %2489 = vmatprep.subr.mxu0 0.0
      %2490 = vmatpush1.msra.mxu0 0.0
      %2491 = vmatprep.subr.mxu0 0.0
      %2492 = vmatpush1.msra.mxu0 0.0
      %2493 = vmatprep.subr.mxu0 %v777
      %2494 = vmatpush1.msra.mxu0 %v776
      %2495 = vmatprep.subr.mxu0 %v768
      %2496 = vmatpush1.msra.mxu0 %v767
      %2497 = vmatprep.subr.mxu0 0.0
      %2498 = vmatpush2.msra.mxu0 0.0
      %2499 = vmatprep.subr.mxu0 0.0
      %2500 = vmatpush2.msra.mxu0 0.0
      %2501 = vmatprep.subr.mxu0 0.0
      %2502 = vmatpush2.msra.mxu0 0.0
      %2503 = vmatprep.subr.mxu0 0.0
      %2504 = vmatpush2.msra.mxu0 0.0
      %2505 = vmatprep.subr.mxu0 0.0
      %2506 = vmatpush2.msra.mxu0 0.0
      %2507 = vmatprep.subr.mxu0 0.0
      %2508 = vmatpush2.msra.mxu0 0.0
      %2509 = vmatprep.subr.mxu0 0.0
      %2510 = vmatpush2.msra.mxu0 0.0
      %2511 = vmatprep.subr.mxu0 0.0
      %2512 = vmatpush2.msra.mxu0 0.0
      %2513 = vmatprep.subr.mxu0 0.0
      %2514 = vmatpush2.msra.mxu0 0.0
      %2515 = vmatprep.subr.mxu0 0.0
      %2516 = vmatpush2.msra.mxu0 0.0
      %2517 = vmatprep.subr.mxu0 0.0
      %2518 = vmatpush2.msra.mxu0 0.0
      %2519 = vmatprep.subr.mxu0 0.0
      %2520 = vmatpush2.msra.mxu0 0.0
      %2521 = vmatprep.subr.mxu0 0.0
      %2522 = vmatpush2.msra.mxu0 0.0
      %2523 = vmatprep.subr.mxu0 0.0
      %2524 = vmatpush2.msra.mxu0 0.0
      %2525 = vmatprep.subr.mxu0 0.0
      %2526 = vmatpush2.msra.mxu0 0.0
      %2527 = vmatprep.subr.mxu0 0.0
      %2528 = vmatpush2.msra.mxu0 0.0
      %2529 = vmatprep.mubr.f32.mxu0 0.0
      %2530 = vmatmul.mubr.f32.gmra.mxu0 %v2321
      %v2531 = vpop.f32.mrf.mxu0
      %v2532 = vadd.f32 0.0, %v2531
      %v2533 = vpop.f32.mrf.mxu0
      %v2534 = vadd.f32 0.0, %v2533
      %2535 = vdwg.mxu0
      %2536 = vmatprep.subr.mxu0 0.0
      %2537 = vmatpush1.msra.mxu0 0.0
      %2538 = vmatprep.subr.mxu0 0.0
      %2539 = vmatpush1.msra.mxu0 0.0
      %2540 = vmatprep.subr.mxu0 0.0
      %2541 = vmatpush1.msra.mxu0 0.0
      %2542 = vmatprep.subr.mxu0 0.0
      %2543 = vmatpush1.msra.mxu0 0.0
      %2544 = vmatprep.subr.mxu0 0.0
      %2545 = vmatpush1.msra.mxu0 0.0
      %2546 = vmatprep.subr.mxu0 0.0
      %2547 = vmatpush1.msra.mxu0 0.0
      %2548 = vmatprep.subr.mxu0 0.0
      %2549 = vmatpush1.msra.mxu0 0.0
      %2550 = vmatprep.subr.mxu0 0.0
      %2551 = vmatpush1.msra.mxu0 0.0
      %2552 = vmatprep.subr.mxu0 0.0
      %2553 = vmatpush1.msra.mxu0 0.0
      %2554 = vmatprep.subr.mxu0 0.0
      %2555 = vmatpush1.msra.mxu0 0.0
      %2556 = vmatprep.subr.mxu0 0.0
      %2557 = vmatpush1.msra.mxu0 0.0
      %2558 = vmatprep.subr.mxu0 0.0
      %2559 = vmatpush1.msra.mxu0 0.0
      %2560 = vmatprep.subr.mxu0 0.0
      %2561 = vmatpush1.msra.mxu0 0.0
      %2562 = vmatprep.subr.mxu0 0.0
      %2563 = vmatpush1.msra.mxu0 0.0
      %2564 = vmatprep.subr.mxu0 %v779
      %2565 = vmatpush1.msra.mxu0 %v778
      %2566 = vmatprep.subr.mxu0 %v770
      %2567 = vmatpush1.msra.mxu0 %v769
      %2568 = vmatprep.subr.mxu0 0.0
      %2569 = vmatpush2.msra.mxu0 0.0
      %2570 = vmatprep.subr.mxu0 0.0
      %2571 = vmatpush2.msra.mxu0 0.0
      %2572 = vmatprep.subr.mxu0 0.0
      %2573 = vmatpush2.msra.mxu0 0.0
      %2574 = vmatprep.subr.mxu0 0.0
      %2575 = vmatpush2.msra.mxu0 0.0
      %2576 = vmatprep.subr.mxu0 0.0
      %2577 = vmatpush2.msra.mxu0 0.0
      %2578 = vmatprep.subr.mxu0 0.0
      %2579 = vmatpush2.msra.mxu0 0.0
      %2580 = vmatprep.subr.mxu0 0.0
      %2581 = vmatpush2.msra.mxu0 0.0
      %2582 = vmatprep.subr.mxu0 0.0
      %2583 = vmatpush2.msra.mxu0 0.0
      %2584 = vmatprep.subr.mxu0 0.0
      %2585 = vmatpush2.msra.mxu0 0.0
      %2586 = vmatprep.subr.mxu0 0.0
      %2587 = vmatpush2.msra.mxu0 0.0
      %2588 = vmatprep.subr.mxu0 0.0
      %2589 = vmatpush2.msra.mxu0 0.0
      %2590 = vmatprep.subr.mxu0 0.0
      %2591 = vmatpush2.msra.mxu0 0.0
      %2592 = vmatprep.subr.mxu0 0.0
      %2593 = vmatpush2.msra.mxu0 0.0
      %2594 = vmatprep.subr.mxu0 0.0
      %2595 = vmatpush2.msra.mxu0 0.0
      %2596 = vmatprep.subr.mxu0 0.0
      %2597 = vmatpush2.msra.mxu0 0.0
      %2598 = vmatprep.subr.mxu0 0.0
      %2599 = vmatpush2.msra.mxu0 0.0
      %2600 = vmatprep.mubr.f32.mxu0 0.0
      %2601 = vmatmul.mubr.f32.gmra.mxu0 %v2321
      %v2602 = vpop.f32.mrf.mxu0
      %v2603 = vadd.f32 0.0, %v2602
      %v2604 = vpop.f32.mrf.mxu0
      %v2605 = vadd.f32 0.0, %v2604
      %2606 = vdwg.mxu0
      %v2607 = vadd.f32 %v2310, %v2390
      %v2608 = vadd.f32 %v2311, %v2392
      %v2609 = vadd.f32 %v2312, %v2461
      %v2610 = vadd.f32 %v2313, %v2463
      %v2611 = vadd.f32 %v2314, %v2532
      %v2612 = vadd.f32 %v2315, %v2534
      %v2613 = vadd.f32 %v2316, %v2603
      %v2614 = vadd.f32 %v2317, %v2605
      %v2615 = vld [vmem:[#allocation2 + $0x8] sm:$0xff]
      %v2616 = vld [vmem:[#allocation2 + $0x10] sm:$0xff]
      %v2617 = vld [vmem:[#allocation2 + $0x18] sm:$0xff]
      %v2618 = vld [vmem:[#allocation2 + $0x20] sm:$0xff]
      %v2619 = vld [vmem:[#allocation2 + $0x28] sm:$0xff]
      %v2620 = vld [vmem:[#allocation2 + $0x30] sm:$0xff]
      %v2621 = vld [vmem:[#allocation2 + $0x38] sm:$0xff]
      %v2622 = vld [vmem:[#allocation2 + $0x40] sm:$0xff]
      %v2623 = vld [vmem:[#allocation2 + $0x48] sm:$0xff]
      %v2624 = vld [vmem:[#allocation2 + $0x58] sm:$0xff]
      %v2625 = vld [vmem:[#allocation2 + $0x60] sm:$0xff]
      %v2626 = vld [vmem:[#allocation2 + $0x68] sm:$0xff]
      %v2627 = vld [vmem:[#allocation2 + $0x70] sm:$0xff]
      %v2628 = vld [vmem:[#allocation2 + $0x78] sm:$0xff]
      %v2629 = vld [vmem:[#allocation2 + $0x80] sm:$0xff]
      %v2630 = vld [vmem:[#allocation2 + $0x88] sm:$0xff]
      %v2631 = vld [vmem:[#allocation2 + $0x90] sm:$0xff]
      %v2632 = vld [vmem:[#allocation2 + $0x98] sm:$0xff]
      %s2633 = scalar_lea.vmem %s2, 40
      %v2634 = vld [vmem:[%s2633] sm:$0xff]
      %2653 = vrot.lane.b32.xlu0 %v2615, 127
      %v2654 = vpop.permute.xlu0 %2653
      %2655 = vrot.lane.b32.xlu0 %v2616, 127
      %v2656 = vpop.permute.xlu0 %2655
      %2657 = vrot.lane.b32.xlu0 %v2617, 127
      %v2658 = vpop.permute.xlu0 %2657
      %2659 = vrot.lane.b32.xlu0 %v2618, 127
      %v2660 = vpop.permute.xlu0 %2659
      %2661 = vrot.lane.b32.xlu0 %v2619, 127
      %v2662 = vpop.permute.xlu0 %2661
      %2663 = vrot.lane.b32.xlu0 %v2620, 127
      %v2664 = vpop.permute.xlu0 %2663
      %2665 = vrot.lane.b32.xlu0 %v2621, 127
      %v2666 = vpop.permute.xlu0 %2665
      %2667 = vrot.lane.b32.xlu0 %v2622, 127
      %v2668 = vpop.permute.xlu0 %2667
      %2669 = vrot.lane.b32.xlu0 %v2623, 127
      %v2670 = vpop.permute.xlu0 %2669
      %2671 = vrot.lane.b32.xlu0 %v2624, 127
      %v2672 = vpop.permute.xlu0 %2671
      %2673 = vrot.lane.b32.xlu0 %v2625, 127
      %v2674 = vpop.permute.xlu0 %2673
      %2675 = vrot.lane.b32.xlu0 %v2626, 127
      %v2676 = vpop.permute.xlu0 %2675
      %2677 = vrot.lane.b32.xlu0 %v2627, 127
      %v2678 = vpop.permute.xlu0 %2677
      %2679 = vrot.lane.b32.xlu0 %v2628, 127
      %v2680 = vpop.permute.xlu0 %2679
      %2681 = vrot.lane.b32.xlu0 %v2629, 127
      %v2682 = vpop.permute.xlu0 %2681
      %2683 = vrot.lane.b32.xlu0 %v2630, 127
      %v2684 = vpop.permute.xlu0 %2683
      %2685 = vrot.lane.b32.xlu0 %v2631, 127
      %v2686 = vpop.permute.xlu0 %2685
      %2687 = vrot.lane.b32.xlu0 %v2632, 127
      %v2688 = vpop.permute.xlu0 %2687
      %vm2689 = vcmask 1039360
      %v2690 = vsel %vm2689, %v2654, %v2656
      %v2691 = vsel %vm2689, %v2656, %v2658
      %v2692 = vsel %vm2689, %v2658, %v2660
      %v2693 = vsel %vm2689, %v2660, %v2662
      %v2694 = vsel %vm2689, %v2662, %v2664
      %v2695 = vsel %vm2689, %v2664, %v2666
      %v2696 = vsel %vm2689, %v2666, %v2668
      %v2697 = vsel %vm2689, %v2668, %v2670
      %v2698 = vsel %vm2689, %v2672, %v2674
      %v2699 = vsel %vm2689, %v2674, %v2676
      %v2700 = vsel %vm2689, %v2676, %v2678
      %v2701 = vsel %vm2689, %v2678, %v2680
      %v2702 = vsel %vm2689, %v2680, %v2682
      %v2703 = vsel %vm2689, %v2682, %v2684
      %v2704 = vsel %vm2689, %v2684, %v2686
      %v2705 = vsel %vm2689, %v2686, %v2688
      %v2723 = vsel %vm868, %v2634, 0
      %2725 = vmatprep.subr.mxu0 0.0
      %2726 = vmatpush1.msra.mxu0 0.0
      %2727 = vmatprep.subr.mxu0 0.0
      %2728 = vmatpush1.msra.mxu0 0.0
      %2729 = vmatprep.subr.mxu0 0.0
      %2730 = vmatpush1.msra.mxu0 0.0
      %2731 = vmatprep.subr.mxu0 0.0
      %2732 = vmatpush1.msra.mxu0 0.0
      %2733 = vmatprep.subr.mxu0 0.0
      %2734 = vmatpush1.msra.mxu0 0.0
      %2735 = vmatprep.subr.mxu0 0.0
      %2736 = vmatpush1.msra.mxu0 0.0
      %2737 = vmatprep.subr.mxu0 0.0
      %2738 = vmatpush1.msra.mxu0 0.0
      %2739 = vmatprep.subr.mxu0 0.0
      %2740 = vmatpush1.msra.mxu0 0.0
      %2741 = vmatprep.subr.mxu0 0.0
      %2742 = vmatpush1.msra.mxu0 0.0
      %2743 = vmatprep.subr.mxu0 0.0
      %2744 = vmatpush1.msra.mxu0 0.0
      %2745 = vmatprep.subr.mxu0 0.0
      %2746 = vmatpush1.msra.mxu0 0.0
      %2747 = vmatprep.subr.mxu0 0.0
      %2748 = vmatpush1.msra.mxu0 0.0
      %2749 = vmatprep.subr.mxu0 0.0
      %2750 = vmatpush1.msra.mxu0 0.0
      %2751 = vmatprep.subr.mxu0 0.0
      %2752 = vmatpush1.msra.mxu0 0.0
      %2753 = vmatprep.subr.mxu0 %v2699
      %2754 = vmatpush1.msra.mxu0 %v2698
      %2755 = vmatprep.subr.mxu0 %v2691
      %2756 = vmatpush1.msra.mxu0 %v2690
      %2757 = vmatprep.subr.mxu0 0.0
      %2758 = vmatpush2.msra.mxu0 0.0
      %2759 = vmatprep.subr.mxu0 0.0
      %2760 = vmatpush2.msra.mxu0 0.0
      %2761 = vmatprep.subr.mxu0 0.0
      %2762 = vmatpush2.msra.mxu0 0.0
      %2763 = vmatprep.subr.mxu0 0.0
      %2764 = vmatpush2.msra.mxu0 0.0
      %2765 = vmatprep.subr.mxu0 0.0
      %2766 = vmatpush2.msra.mxu0 0.0
      %2767 = vmatprep.subr.mxu0 0.0
      %2768 = vmatpush2.msra.mxu0 0.0
      %2769 = vmatprep.subr.mxu0 0.0
      %2770 = vmatpush2.msra.mxu0 0.0
      %2771 = vmatprep.subr.mxu0 0.0
      %2772 = vmatpush2.msra.mxu0 0.0
      %2773 = vmatprep.subr.mxu0 0.0
      %2774 = vmatpush2.msra.mxu0 0.0
      %2775 = vmatprep.subr.mxu0 0.0
      %2776 = vmatpush2.msra.mxu0 0.0
      %2777 = vmatprep.subr.mxu0 0.0
      %2778 = vmatpush2.msra.mxu0 0.0
      %2779 = vmatprep.subr.mxu0 0.0
      %2780 = vmatpush2.msra.mxu0 0.0
      %2781 = vmatprep.subr.mxu0 0.0
      %2782 = vmatpush2.msra.mxu0 0.0
      %2783 = vmatprep.subr.mxu0 0.0
      %2784 = vmatpush2.msra.mxu0 0.0
      %2785 = vmatprep.subr.mxu0 0.0
      %2786 = vmatpush2.msra.mxu0 0.0
      %2787 = vmatprep.subr.mxu0 0.0
      %2788 = vmatpush2.msra.mxu0 0.0
      %2789 = vmatprep.mubr.f32.mxu0 0.0
      %2790 = vmatmul.mubr.f32.gmra.mxu0 %v2723
      %v2791 = vpop.f32.mrf.mxu0
      %v2792 = vadd.f32 0.0, %v2791
      %v2793 = vpop.f32.mrf.mxu0
      %v2794 = vadd.f32 0.0, %v2793
      %2795 = vdwg.mxu0
      %2796 = vmatprep.subr.mxu0 0.0
      %2797 = vmatpush1.msra.mxu0 0.0
      %2798 = vmatprep.subr.mxu0 0.0
      %2799 = vmatpush1.msra.mxu0 0.0
      %2800 = vmatprep.subr.mxu0 0.0
      %2801 = vmatpush1.msra.mxu0 0.0
      %2802 = vmatprep.subr.mxu0 0.0
      %2803 = vmatpush1.msra.mxu0 0.0
      %2804 = vmatprep.subr.mxu0 0.0
      %2805 = vmatpush1.msra.mxu0 0.0
      %2806 = vmatprep.subr.mxu0 0.0
      %2807 = vmatpush1.msra.mxu0 0.0
      %2808 = vmatprep.subr.mxu0 0.0
      %2809 = vmatpush1.msra.mxu0 0.0
      %2810 = vmatprep.subr.mxu0 0.0
      %2811 = vmatpush1.msra.mxu0 0.0
      %2812 = vmatprep.subr.mxu0 0.0
      %2813 = vmatpush1.msra.mxu0 0.0
      %2814 = vmatprep.subr.mxu0 0.0
      %2815 = vmatpush1.msra.mxu0 0.0
      %2816 = vmatprep.subr.mxu0 0.0
      %2817 = vmatpush1.msra.mxu0 0.0
      %2818 = vmatprep.subr.mxu0 0.0
      %2819 = vmatpush1.msra.mxu0 0.0
      %2820 = vmatprep.subr.mxu0 0.0
      %2821 = vmatpush1.msra.mxu0 0.0
      %2822 = vmatprep.subr.mxu0 0.0
      %2823 = vmatpush1.msra.mxu0 0.0
      %2824 = vmatprep.subr.mxu0 %v2701
      %2825 = vmatpush1.msra.mxu0 %v2700
      %2826 = vmatprep.subr.mxu0 %v2693
      %2827 = vmatpush1.msra.mxu0 %v2692
      %2828 = vmatprep.subr.mxu0 0.0
      %2829 = vmatpush2.msra.mxu0 0.0
      %2830 = vmatprep.subr.mxu0 0.0
      %2831 = vmatpush2.msra.mxu0 0.0
      %2832 = vmatprep.subr.mxu0 0.0
      %2833 = vmatpush2.msra.mxu0 0.0
      %2834 = vmatprep.subr.mxu0 0.0
      %2835 = vmatpush2.msra.mxu0 0.0
      %2836 = vmatprep.subr.mxu0 0.0
      %2837 = vmatpush2.msra.mxu0 0.0
      %2838 = vmatprep.subr.mxu0 0.0
      %2839 = vmatpush2.msra.mxu0 0.0
      %2840 = vmatprep.subr.mxu0 0.0
      %2841 = vmatpush2.msra.mxu0 0.0
      %2842 = vmatprep.subr.mxu0 0.0
      %2843 = vmatpush2.msra.mxu0 0.0
      %2844 = vmatprep.subr.mxu0 0.0
      %2845 = vmatpush2.msra.mxu0 0.0
      %2846 = vmatprep.subr.mxu0 0.0
      %2847 = vmatpush2.msra.mxu0 0.0
      %2848 = vmatprep.subr.mxu0 0.0
      %2849 = vmatpush2.msra.mxu0 0.0
      %2850 = vmatprep.subr.mxu0 0.0
      %2851 = vmatpush2.msra.mxu0 0.0
      %2852 = vmatprep.subr.mxu0 0.0
      %2853 = vmatpush2.msra.mxu0 0.0
      %2854 = vmatprep.subr.mxu0 0.0
      %2855 = vmatpush2.msra.mxu0 0.0
      %2856 = vmatprep.subr.mxu0 0.0
      %2857 = vmatpush2.msra.mxu0 0.0
      %2858 = vmatprep.subr.mxu0 0.0
      %2859 = vmatpush2.msra.mxu0 0.0
      %2860 = vmatprep.mubr.f32.mxu0 0.0
      %2861 = vmatmul.mubr.f32.gmra.mxu0 %v2723
      %v2862 = vpop.f32.mrf.mxu0
      %v2863 = vadd.f32 0.0, %v2862
      %v2864 = vpop.f32.mrf.mxu0
      %v2865 = vadd.f32 0.0, %v2864
      %2866 = vdwg.mxu0
      %2867 = vmatprep.subr.mxu0 0.0
      %2868 = vmatpush1.msra.mxu0 0.0
      %2869 = vmatprep.subr.mxu0 0.0
      %2870 = vmatpush1.msra.mxu0 0.0
      %2871 = vmatprep.subr.mxu0 0.0
      %2872 = vmatpush1.msra.mxu0 0.0
      %2873 = vmatprep.subr.mxu0 0.0
      %2874 = vmatpush1.msra.mxu0 0.0
      %2875 = vmatprep.subr.mxu0 0.0
      %2876 = vmatpush1.msra.mxu0 0.0
      %2877 = vmatprep.subr.mxu0 0.0
      %2878 = vmatpush1.msra.mxu0 0.0
      %2879 = vmatprep.subr.mxu0 0.0
      %2880 = vmatpush1.msra.mxu0 0.0
      %2881 = vmatprep.subr.mxu0 0.0
      %2882 = vmatpush1.msra.mxu0 0.0
      %2883 = vmatprep.subr.mxu0 0.0
      %2884 = vmatpush1.msra.mxu0 0.0
      %2885 = vmatprep.subr.mxu0 0.0
      %2886 = vmatpush1.msra.mxu0 0.0
      %2887 = vmatprep.subr.mxu0 0.0
      %2888 = vmatpush1.msra.mxu0 0.0
      %2889 = vmatprep.subr.mxu0 0.0
      %2890 = vmatpush1.msra.mxu0 0.0
      %2891 = vmatprep.subr.mxu0 0.0
      %2892 = vmatpush1.msra.mxu0 0.0
      %2893 = vmatprep.subr.mxu0 0.0
      %2894 = vmatpush1.msra.mxu0 0.0
      %2895 = vmatprep.subr.mxu0 %v2703
      %2896 = vmatpush1.msra.mxu0 %v2702
      %2897 = vmatprep.subr.mxu0 %v2695
      %2898 = vmatpush1.msra.mxu0 %v2694
      %2899 = vmatprep.subr.mxu0 0.0
      %2900 = vmatpush2.msra.mxu0 0.0
      %2901 = vmatprep.subr.mxu0 0.0
      %2902 = vmatpush2.msra.mxu0 0.0
      %2903 = vmatprep.subr.mxu0 0.0
      %2904 = vmatpush2.msra.mxu0 0.0
      %2905 = vmatprep.subr.mxu0 0.0
      %2906 = vmatpush2.msra.mxu0 0.0
      %2907 = vmatprep.subr.mxu0 0.0
      %2908 = vmatpush2.msra.mxu0 0.0
      %2909 = vmatprep.subr.mxu0 0.0
      %2910 = vmatpush2.msra.mxu0 0.0
      %2911 = vmatprep.subr.mxu0 0.0
      %2912 = vmatpush2.msra.mxu0 0.0
      %2913 = vmatprep.subr.mxu0 0.0
      %2914 = vmatpush2.msra.mxu0 0.0
      %2915 = vmatprep.subr.mxu0 0.0
      %2916 = vmatpush2.msra.mxu0 0.0
      %2917 = vmatprep.subr.mxu0 0.0
      %2918 = vmatpush2.msra.mxu0 0.0
      %2919 = vmatprep.subr.mxu0 0.0
      %2920 = vmatpush2.msra.mxu0 0.0
      %2921 = vmatprep.subr.mxu0 0.0
      %2922 = vmatpush2.msra.mxu0 0.0
      %2923 = vmatprep.subr.mxu0 0.0
      %2924 = vmatpush2.msra.mxu0 0.0
      %2925 = vmatprep.subr.mxu0 0.0
      %2926 = vmatpush2.msra.mxu0 0.0
      %2927 = vmatprep.subr.mxu0 0.0
      %2928 = vmatpush2.msra.mxu0 0.0
      %2929 = vmatprep.subr.mxu0 0.0
      %2930 = vmatpush2.msra.mxu0 0.0
      %2931 = vmatprep.mubr.f32.mxu0 0.0
      %2932 = vmatmul.mubr.f32.gmra.mxu0 %v2723
      %v2933 = vpop.f32.mrf.mxu0
      %v2934 = vadd.f32 0.0, %v2933
      %v2935 = vpop.f32.mrf.mxu0
      %v2936 = vadd.f32 0.0, %v2935
      %2937 = vdwg.mxu0
      %2938 = vmatprep.subr.mxu0 0.0
      %2939 = vmatpush1.msra.mxu0 0.0
      %2940 = vmatprep.subr.mxu0 0.0
      %2941 = vmatpush1.msra.mxu0 0.0
      %2942 = vmatprep.subr.mxu0 0.0
      %2943 = vmatpush1.msra.mxu0 0.0
      %2944 = vmatprep.subr.mxu0 0.0
      %2945 = vmatpush1.msra.mxu0 0.0
      %2946 = vmatprep.subr.mxu0 0.0
      %2947 = vmatpush1.msra.mxu0 0.0
      %2948 = vmatprep.subr.mxu0 0.0
      %2949 = vmatpush1.msra.mxu0 0.0
      %2950 = vmatprep.subr.mxu0 0.0
      %2951 = vmatpush1.msra.mxu0 0.0
      %2952 = vmatprep.subr.mxu0 0.0
      %2953 = vmatpush1.msra.mxu0 0.0
      %2954 = vmatprep.subr.mxu0 0.0
      %2955 = vmatpush1.msra.mxu0 0.0
      %2956 = vmatprep.subr.mxu0 0.0
      %2957 = vmatpush1.msra.mxu0 0.0
      %2958 = vmatprep.subr.mxu0 0.0
      %2959 = vmatpush1.msra.mxu0 0.0
      %2960 = vmatprep.subr.mxu0 0.0
      %2961 = vmatpush1.msra.mxu0 0.0
      %2962 = vmatprep.subr.mxu0 0.0
      %2963 = vmatpush1.msra.mxu0 0.0
      %2964 = vmatprep.subr.mxu0 0.0
      %2965 = vmatpush1.msra.mxu0 0.0
      %2966 = vmatprep.subr.mxu0 %v2705
      %2967 = vmatpush1.msra.mxu0 %v2704
      %2968 = vmatprep.subr.mxu0 %v2697
      %2969 = vmatpush1.msra.mxu0 %v2696
      %2970 = vmatprep.subr.mxu0 0.0
      %2971 = vmatpush2.msra.mxu0 0.0
      %2972 = vmatprep.subr.mxu0 0.0
      %2973 = vmatpush2.msra.mxu0 0.0
      %2974 = vmatprep.subr.mxu0 0.0
      %2975 = vmatpush2.msra.mxu0 0.0
      %2976 = vmatprep.subr.mxu0 0.0
      %2977 = vmatpush2.msra.mxu0 0.0
      %2978 = vmatprep.subr.mxu0 0.0
      %2979 = vmatpush2.msra.mxu0 0.0
      %2980 = vmatprep.subr.mxu0 0.0
      %2981 = vmatpush2.msra.mxu0 0.0
      %2982 = vmatprep.subr.mxu0 0.0
      %2983 = vmatpush2.msra.mxu0 0.0
      %2984 = vmatprep.subr.mxu0 0.0
      %2985 = vmatpush2.msra.mxu0 0.0
      %2986 = vmatprep.subr.mxu0 0.0
      %2987 = vmatpush2.msra.mxu0 0.0
      %2988 = vmatprep.subr.mxu0 0.0
      %2989 = vmatpush2.msra.mxu0 0.0
      %2990 = vmatprep.subr.mxu0 0.0
      %2991 = vmatpush2.msra.mxu0 0.0
      %2992 = vmatprep.subr.mxu0 0.0
      %2993 = vmatpush2.msra.mxu0 0.0
      %2994 = vmatprep.subr.mxu0 0.0
      %2995 = vmatpush2.msra.mxu0 0.0
      %2996 = vmatprep.subr.mxu0 0.0
      %2997 = vmatpush2.msra.mxu0 0.0
      %2998 = vmatprep.subr.mxu0 0.0
      %2999 = vmatpush2.msra.mxu0 0.0
      %3000 = vmatprep.subr.mxu0 0.0
      %3001 = vmatpush2.msra.mxu0 0.0
      %3002 = vmatprep.mubr.f32.mxu0 0.0
      %3003 = vmatmul.mubr.f32.gmra.mxu0 %v2723
      %v3004 = vpop.f32.mrf.mxu0
      %v3005 = vadd.f32 0.0, %v3004
      %v3006 = vpop.f32.mrf.mxu0
      %v3007 = vadd.f32 0.0, %v3006
      %3008 = vdwg.mxu0
      %v3009 = vsel %vm1920, %v2792, 0.0
      %v3010 = vsel %vm1921, %v2794, 0.0
      %v3011 = vsel %vm1922, %v2863, 0.0
      %v3012 = vsel %vm1923, %v2865, 0.0
      %v3013 = vsel %vm1924, %v2934, 0.0
      %v3014 = vsel %vm1925, %v2936, 0.0
      %v3015 = vsel %vm1926, %v3005, 0.0
      %v3016 = vsel %vm1927, %v3007, 0.0
      %v3017 = vadd.f32 %v2607, %v3009
      %v3018 = vadd.f32 %v2608, %v3010
      %v3019 = vadd.f32 %v2609, %v3011
      %v3020 = vadd.f32 %v2610, %v3012
      %v3021 = vadd.f32 %v2611, %v3013
      %v3022 = vadd.f32 %v2612, %v3014
      %v3023 = vadd.f32 %v2613, %v3015
      %v3024 = vadd.f32 %v2614, %v3016
      %s3025 = scalar_lea.vmem %s2, 48
      %v3026 = vld [vmem:[%s3025] sm:$0xff]
      %3027 = vrot.lane.b32.xlu0 %v2615, 97
      %v3028 = vpop.permute.xlu0 %3027
      %3029 = vrot.lane.b32.xlu0 %v2616, 97
      %v3030 = vpop.permute.xlu0 %3029
      %3031 = vrot.lane.b32.xlu0 %v2617, 97
      %v3032 = vpop.permute.xlu0 %3031
      %3033 = vrot.lane.b32.xlu0 %v2618, 97
      %v3034 = vpop.permute.xlu0 %3033
      %3035 = vrot.lane.b32.xlu0 %v2619, 97
      %v3036 = vpop.permute.xlu0 %3035
      %3037 = vrot.lane.b32.xlu0 %v2620, 97
      %v3038 = vpop.permute.xlu0 %3037
      %3039 = vrot.lane.b32.xlu0 %v2621, 97
      %v3040 = vpop.permute.xlu0 %3039
      %3041 = vrot.lane.b32.xlu0 %v2622, 97
      %v3042 = vpop.permute.xlu0 %3041
      %3043 = vrot.lane.b32.xlu0 %v2623, 97
      %v3044 = vpop.permute.xlu0 %3043
      %3045 = vrot.lane.b32.xlu0 %v2624, 97
      %v3046 = vpop.permute.xlu0 %3045
      %3047 = vrot.lane.b32.xlu0 %v2625, 97
      %v3048 = vpop.permute.xlu0 %3047
      %3049 = vrot.lane.b32.xlu0 %v2626, 97
      %v3050 = vpop.permute.xlu0 %3049
      %3051 = vrot.lane.b32.xlu0 %v2627, 97
      %v3052 = vpop.permute.xlu0 %3051
      %3053 = vrot.lane.b32.xlu0 %v2628, 97
      %v3054 = vpop.permute.xlu0 %3053
      %3055 = vrot.lane.b32.xlu0 %v2629, 97
      %v3056 = vpop.permute.xlu0 %3055
      %3057 = vrot.lane.b32.xlu0 %v2630, 97
      %v3058 = vpop.permute.xlu0 %3057
      %3059 = vrot.lane.b32.xlu0 %v2631, 97
      %v3060 = vpop.permute.xlu0 %3059
      %3061 = vrot.lane.b32.xlu0 %v2632, 97
      %v3062 = vpop.permute.xlu0 %3061
      %vm3063 = vcmask 793600
      %v3064 = vsel %vm3063, %v3028, %v3030
      %v3065 = vsel %vm3063, %v3030, %v3032
      %v3066 = vsel %vm3063, %v3032, %v3034
      %v3067 = vsel %vm3063, %v3034, %v3036
      %v3068 = vsel %vm3063, %v3036, %v3038
      %v3069 = vsel %vm3063, %v3038, %v3040
      %v3070 = vsel %vm3063, %v3040, %v3042
      %v3071 = vsel %vm3063, %v3042, %v3044
      %v3072 = vsel %vm3063, %v3046, %v3048
      %v3073 = vsel %vm3063, %v3048, %v3050
      %v3074 = vsel %vm3063, %v3050, %v3052
      %v3075 = vsel %vm3063, %v3052, %v3054
      %v3076 = vsel %vm3063, %v3054, %v3056
      %v3077 = vsel %vm3063, %v3056, %v3058
      %v3078 = vsel %vm3063, %v3058, %v3060
      %v3079 = vsel %vm3063, %v3060, %v3062
      %v3097 = vsel %vm868, %v3026, 0
      %3099 = vmatprep.subr.mxu0 0.0
      %3100 = vmatpush1.msra.mxu0 0.0
      %3101 = vmatprep.subr.mxu0 0.0
      %3102 = vmatpush1.msra.mxu0 0.0
      %3103 = vmatprep.subr.mxu0 0.0
      %3104 = vmatpush1.msra.mxu0 0.0
      %3105 = vmatprep.subr.mxu0 0.0
      %3106 = vmatpush1.msra.mxu0 0.0
      %3107 = vmatprep.subr.mxu0 0.0
      %3108 = vmatpush1.msra.mxu0 0.0
      %3109 = vmatprep.subr.mxu0 0.0
      %3110 = vmatpush1.msra.mxu0 0.0
      %3111 = vmatprep.subr.mxu0 0.0
      %3112 = vmatpush1.msra.mxu0 0.0
      %3113 = vmatprep.subr.mxu0 0.0
      %3114 = vmatpush1.msra.mxu0 0.0
      %3115 = vmatprep.subr.mxu0 0.0
      %3116 = vmatpush1.msra.mxu0 0.0
      %3117 = vmatprep.subr.mxu0 0.0
      %3118 = vmatpush1.msra.mxu0 0.0
      %3119 = vmatprep.subr.mxu0 0.0
      %3120 = vmatpush1.msra.mxu0 0.0
      %3121 = vmatprep.subr.mxu0 0.0
      %3122 = vmatpush1.msra.mxu0 0.0
      %3123 = vmatprep.subr.mxu0 0.0
      %3124 = vmatpush1.msra.mxu0 0.0
      %3125 = vmatprep.subr.mxu0 0.0
      %3126 = vmatpush1.msra.mxu0 0.0
      %3127 = vmatprep.subr.mxu0 %v3073
      %3128 = vmatpush1.msra.mxu0 %v3072
      %3129 = vmatprep.subr.mxu0 %v3065
      %3130 = vmatpush1.msra.mxu0 %v3064
      %3131 = vmatprep.subr.mxu0 0.0
      %3132 = vmatpush2.msra.mxu0 0.0
      %3133 = vmatprep.subr.mxu0 0.0
      %3134 = vmatpush2.msra.mxu0 0.0
      %3135 = vmatprep.subr.mxu0 0.0
      %3136 = vmatpush2.msra.mxu0 0.0
      %3137 = vmatprep.subr.mxu0 0.0
      %3138 = vmatpush2.msra.mxu0 0.0
      %3139 = vmatprep.subr.mxu0 0.0
      %3140 = vmatpush2.msra.mxu0 0.0
      %3141 = vmatprep.subr.mxu0 0.0
      %3142 = vmatpush2.msra.mxu0 0.0
      %3143 = vmatprep.subr.mxu0 0.0
      %3144 = vmatpush2.msra.mxu0 0.0
      %3145 = vmatprep.subr.mxu0 0.0
      %3146 = vmatpush2.msra.mxu0 0.0
      %3147 = vmatprep.subr.mxu0 0.0
      %3148 = vmatpush2.msra.mxu0 0.0
      %3149 = vmatprep.subr.mxu0 0.0
      %3150 = vmatpush2.msra.mxu0 0.0
      %3151 = vmatprep.subr.mxu0 0.0
      %3152 = vmatpush2.msra.mxu0 0.0
      %3153 = vmatprep.subr.mxu0 0.0
      %3154 = vmatpush2.msra.mxu0 0.0
      %3155 = vmatprep.subr.mxu0 0.0
      %3156 = vmatpush2.msra.mxu0 0.0
      %3157 = vmatprep.subr.mxu0 0.0
      %3158 = vmatpush2.msra.mxu0 0.0
      %3159 = vmatprep.subr.mxu0 0.0
      %3160 = vmatpush2.msra.mxu0 0.0
      %3161 = vmatprep.subr.mxu0 0.0
      %3162 = vmatpush2.msra.mxu0 0.0
      %3163 = vmatprep.mubr.f32.mxu0 0.0
      %3164 = vmatmul.mubr.f32.gmra.mxu0 %v3097
      %v3165 = vpop.f32.mrf.mxu0
      %v3166 = vadd.f32 0.0, %v3165
      %v3167 = vpop.f32.mrf.mxu0
      %v3168 = vadd.f32 0.0, %v3167
      %3169 = vdwg.mxu0
      %3170 = vmatprep.subr.mxu0 0.0
      %3171 = vmatpush1.msra.mxu0 0.0
      %3172 = vmatprep.subr.mxu0 0.0
      %3173 = vmatpush1.msra.mxu0 0.0
      %3174 = vmatprep.subr.mxu0 0.0
      %3175 = vmatpush1.msra.mxu0 0.0
      %3176 = vmatprep.subr.mxu0 0.0
      %3177 = vmatpush1.msra.mxu0 0.0
      %3178 = vmatprep.subr.mxu0 0.0
      %3179 = vmatpush1.msra.mxu0 0.0
      %3180 = vmatprep.subr.mxu0 0.0
      %3181 = vmatpush1.msra.mxu0 0.0
      %3182 = vmatprep.subr.mxu0 0.0
      %3183 = vmatpush1.msra.mxu0 0.0
      %3184 = vmatprep.subr.mxu0 0.0
      %3185 = vmatpush1.msra.mxu0 0.0
      %3186 = vmatprep.subr.mxu0 0.0
      %3187 = vmatpush1.msra.mxu0 0.0
      %3188 = vmatprep.subr.mxu0 0.0
      %3189 = vmatpush1.msra.mxu0 0.0
      %3190 = vmatprep.subr.mxu0 0.0
      %3191 = vmatpush1.msra.mxu0 0.0
      %3192 = vmatprep.subr.mxu0 0.0
      %3193 = vmatpush1.msra.mxu0 0.0
      %3194 = vmatprep.subr.mxu0 0.0
      %3195 = vmatpush1.msra.mxu0 0.0
      %3196 = vmatprep.subr.mxu0 0.0
      %3197 = vmatpush1.msra.mxu0 0.0
      %3198 = vmatprep.subr.mxu0 %v3075
      %3199 = vmatpush1.msra.mxu0 %v3074
      %3200 = vmatprep.subr.mxu0 %v3067
      %3201 = vmatpush1.msra.mxu0 %v3066
      %3202 = vmatprep.subr.mxu0 0.0
      %3203 = vmatpush2.msra.mxu0 0.0
      %3204 = vmatprep.subr.mxu0 0.0
      %3205 = vmatpush2.msra.mxu0 0.0
      %3206 = vmatprep.subr.mxu0 0.0
      %3207 = vmatpush2.msra.mxu0 0.0
      %3208 = vmatprep.subr.mxu0 0.0
      %3209 = vmatpush2.msra.mxu0 0.0
      %3210 = vmatprep.subr.mxu0 0.0
      %3211 = vmatpush2.msra.mxu0 0.0
      %3212 = vmatprep.subr.mxu0 0.0
      %3213 = vmatpush2.msra.mxu0 0.0
      %3214 = vmatprep.subr.mxu0 0.0
      %3215 = vmatpush2.msra.mxu0 0.0
      %3216 = vmatprep.subr.mxu0 0.0
      %3217 = vmatpush2.msra.mxu0 0.0
      %3218 = vmatprep.subr.mxu0 0.0
      %3219 = vmatpush2.msra.mxu0 0.0
      %3220 = vmatprep.subr.mxu0 0.0
      %3221 = vmatpush2.msra.mxu0 0.0
      %3222 = vmatprep.subr.mxu0 0.0
      %3223 = vmatpush2.msra.mxu0 0.0
      %3224 = vmatprep.subr.mxu0 0.0
      %3225 = vmatpush2.msra.mxu0 0.0
      %3226 = vmatprep.subr.mxu0 0.0
      %3227 = vmatpush2.msra.mxu0 0.0
      %3228 = vmatprep.subr.mxu0 0.0
      %3229 = vmatpush2.msra.mxu0 0.0
      %3230 = vmatprep.subr.mxu0 0.0
      %3231 = vmatpush2.msra.mxu0 0.0
      %3232 = vmatprep.subr.mxu0 0.0
      %3233 = vmatpush2.msra.mxu0 0.0
      %3234 = vmatprep.mubr.f32.mxu0 0.0
      %3235 = vmatmul.mubr.f32.gmra.mxu0 %v3097
      %v3236 = vpop.f32.mrf.mxu0
      %v3237 = vadd.f32 0.0, %v3236
      %v3238 = vpop.f32.mrf.mxu0
      %v3239 = vadd.f32 0.0, %v3238
      %3240 = vdwg.mxu0
      %3241 = vmatprep.subr.mxu0 0.0
      %3242 = vmatpush1.msra.mxu0 0.0
      %3243 = vmatprep.subr.mxu0 0.0
      %3244 = vmatpush1.msra.mxu0 0.0
      %3245 = vmatprep.subr.mxu0 0.0
      %3246 = vmatpush1.msra.mxu0 0.0
      %3247 = vmatprep.subr.mxu0 0.0
      %3248 = vmatpush1.msra.mxu0 0.0
      %3249 = vmatprep.subr.mxu0 0.0
      %3250 = vmatpush1.msra.mxu0 0.0
      %3251 = vmatprep.subr.mxu0 0.0
      %3252 = vmatpush1.msra.mxu0 0.0
      %3253 = vmatprep.subr.mxu0 0.0
      %3254 = vmatpush1.msra.mxu0 0.0
      %3255 = vmatprep.subr.mxu0 0.0
      %3256 = vmatpush1.msra.mxu0 0.0
      %3257 = vmatprep.subr.mxu0 0.0
      %3258 = vmatpush1.msra.mxu0 0.0
      %3259 = vmatprep.subr.mxu0 0.0
      %3260 = vmatpush1.msra.mxu0 0.0
      %3261 = vmatprep.subr.mxu0 0.0
      %3262 = vmatpush1.msra.mxu0 0.0
      %3263 = vmatprep.subr.mxu0 0.0
      %3264 = vmatpush1.msra.mxu0 0.0
      %3265 = vmatprep.subr.mxu0 0.0
      %3266 = vmatpush1.msra.mxu0 0.0
      %3267 = vmatprep.subr.mxu0 0.0
      %3268 = vmatpush1.msra.mxu0 0.0
      %3269 = vmatprep.subr.mxu0 %v3077
      %3270 = vmatpush1.msra.mxu0 %v3076
      %3271 = vmatprep.subr.mxu0 %v3069
      %3272 = vmatpush1.msra.mxu0 %v3068
      %3273 = vmatprep.subr.mxu0 0.0
      %3274 = vmatpush2.msra.mxu0 0.0
      %3275 = vmatprep.subr.mxu0 0.0
      %3276 = vmatpush2.msra.mxu0 0.0
      %3277 = vmatprep.subr.mxu0 0.0
      %3278 = vmatpush2.msra.mxu0 0.0
      %3279 = vmatprep.subr.mxu0 0.0
      %3280 = vmatpush2.msra.mxu0 0.0
      %3281 = vmatprep.subr.mxu0 0.0
      %3282 = vmatpush2.msra.mxu0 0.0
      %3283 = vmatprep.subr.mxu0 0.0
      %3284 = vmatpush2.msra.mxu0 0.0
      %3285 = vmatprep.subr.mxu0 0.0
      %3286 = vmatpush2.msra.mxu0 0.0
      %3287 = vmatprep.subr.mxu0 0.0
      %3288 = vmatpush2.msra.mxu0 0.0
      %3289 = vmatprep.subr.mxu0 0.0
      %3290 = vmatpush2.msra.mxu0 0.0
      %3291 = vmatprep.subr.mxu0 0.0
      %3292 = vmatpush2.msra.mxu0 0.0
      %3293 = vmatprep.subr.mxu0 0.0
      %3294 = vmatpush2.msra.mxu0 0.0
      %3295 = vmatprep.subr.mxu0 0.0
      %3296 = vmatpush2.msra.mxu0 0.0
      %3297 = vmatprep.subr.mxu0 0.0
      %3298 = vmatpush2.msra.mxu0 0.0
      %3299 = vmatprep.subr.mxu0 0.0
      %3300 = vmatpush2.msra.mxu0 0.0
      %3301 = vmatprep.subr.mxu0 0.0
      %3302 = vmatpush2.msra.mxu0 0.0
      %3303 = vmatprep.subr.mxu0 0.0
      %3304 = vmatpush2.msra.mxu0 0.0
      %3305 = vmatprep.mubr.f32.mxu0 0.0
      %3306 = vmatmul.mubr.f32.gmra.mxu0 %v3097
      %v3307 = vpop.f32.mrf.mxu0
      %v3308 = vadd.f32 0.0, %v3307
      %v3309 = vpop.f32.mrf.mxu0
      %v3310 = vadd.f32 0.0, %v3309
      %3311 = vdwg.mxu0
      %3312 = vmatprep.subr.mxu0 0.0
      %3313 = vmatpush1.msra.mxu0 0.0
      %3314 = vmatprep.subr.mxu0 0.0
      %3315 = vmatpush1.msra.mxu0 0.0
      %3316 = vmatprep.subr.mxu0 0.0
      %3317 = vmatpush1.msra.mxu0 0.0
      %3318 = vmatprep.subr.mxu0 0.0
      %3319 = vmatpush1.msra.mxu0 0.0
      %3320 = vmatprep.subr.mxu0 0.0
      %3321 = vmatpush1.msra.mxu0 0.0
      %3322 = vmatprep.subr.mxu0 0.0
      %3323 = vmatpush1.msra.mxu0 0.0
      %3324 = vmatprep.subr.mxu0 0.0
      %3325 = vmatpush1.msra.mxu0 0.0
      %3326 = vmatprep.subr.mxu0 0.0
      %3327 = vmatpush1.msra.mxu0 0.0
      %3328 = vmatprep.subr.mxu0 0.0
      %3329 = vmatpush1.msra.mxu0 0.0
      %3330 = vmatprep.subr.mxu0 0.0
      %3331 = vmatpush1.msra.mxu0 0.0
      %3332 = vmatprep.subr.mxu0 0.0
      %3333 = vmatpush1.msra.mxu0 0.0
      %3334 = vmatprep.subr.mxu0 0.0
      %3335 = vmatpush1.msra.mxu0 0.0
      %3336 = vmatprep.subr.mxu0 0.0
      %3337 = vmatpush1.msra.mxu0 0.0
      %3338 = vmatprep.subr.mxu0 0.0
      %3339 = vmatpush1.msra.mxu0 0.0
      %3340 = vmatprep.subr.mxu0 %v3079
      %3341 = vmatpush1.msra.mxu0 %v3078
      %3342 = vmatprep.subr.mxu0 %v3071
      %3343 = vmatpush1.msra.mxu0 %v3070
      %3344 = vmatprep.subr.mxu0 0.0
      %3345 = vmatpush2.msra.mxu0 0.0
      %3346 = vmatprep.subr.mxu0 0.0
      %3347 = vmatpush2.msra.mxu0 0.0
      %3348 = vmatprep.subr.mxu0 0.0
      %3349 = vmatpush2.msra.mxu0 0.0
      %3350 = vmatprep.subr.mxu0 0.0
      %3351 = vmatpush2.msra.mxu0 0.0
      %3352 = vmatprep.subr.mxu0 0.0
      %3353 = vmatpush2.msra.mxu0 0.0
      %3354 = vmatprep.subr.mxu0 0.0
      %3355 = vmatpush2.msra.mxu0 0.0
      %3356 = vmatprep.subr.mxu0 0.0
      %3357 = vmatpush2.msra.mxu0 0.0
      %3358 = vmatprep.subr.mxu0 0.0
      %3359 = vmatpush2.msra.mxu0 0.0
      %3360 = vmatprep.subr.mxu0 0.0
      %3361 = vmatpush2.msra.mxu0 0.0
      %3362 = vmatprep.subr.mxu0 0.0
      %3363 = vmatpush2.msra.mxu0 0.0
      %3364 = vmatprep.subr.mxu0 0.0
      %3365 = vmatpush2.msra.mxu0 0.0
      %3366 = vmatprep.subr.mxu0 0.0
      %3367 = vmatpush2.msra.mxu0 0.0
      %3368 = vmatprep.subr.mxu0 0.0
      %3369 = vmatpush2.msra.mxu0 0.0
      %3370 = vmatprep.subr.mxu0 0.0
      %3371 = vmatpush2.msra.mxu0 0.0
      %3372 = vmatprep.subr.mxu0 0.0
      %3373 = vmatpush2.msra.mxu0 0.0
      %3374 = vmatprep.subr.mxu0 0.0
      %3375 = vmatpush2.msra.mxu0 0.0
      %3376 = vmatprep.mubr.f32.mxu0 0.0
      %3377 = vmatmul.mubr.f32.gmra.mxu0 %v3097
      %v3378 = vpop.f32.mrf.mxu0
      %v3379 = vadd.f32 0.0, %v3378
      %v3380 = vpop.f32.mrf.mxu0
      %v3381 = vadd.f32 0.0, %v3380
      %3382 = vdwg.mxu0
      %v3383 = vsel %vm1164, %v3166, 0.0
      %v3384 = vsel %vm1165, %v3168, 0.0
      %v3385 = vsel %vm1166, %v3237, 0.0
      %v3386 = vsel %vm1167, %v3239, 0.0
      %v3387 = vsel %vm1168, %v3308, 0.0
      %v3388 = vsel %vm1169, %v3310, 0.0
      %v3389 = vsel %vm1170, %v3379, 0.0
      %v3390 = vsel %vm1171, %v3381, 0.0
      %v3391 = vadd.f32 %v3017, %v3383
      %v3392 = vadd.f32 %v3018, %v3384
      %v3393 = vadd.f32 %v3019, %v3385
      %v3394 = vadd.f32 %v3020, %v3386
      %v3395 = vadd.f32 %v3021, %v3387
      %v3396 = vadd.f32 %v3022, %v3388
      %v3397 = vadd.f32 %v3023, %v3389
      %v3398 = vadd.f32 %v3024, %v3390
      %s3399 = scalar_lea.vmem %s2, 56
      %v3400 = vld [vmem:[%s3399] sm:$0xff]
      %3401 = vrot.lane.b32.xlu0 %v2615, 96
      %v3402 = vpop.permute.xlu0 %3401
      %3403 = vrot.lane.b32.xlu0 %v2616, 96
      %v3404 = vpop.permute.xlu0 %3403
      %3405 = vrot.lane.b32.xlu0 %v2617, 96
      %v3406 = vpop.permute.xlu0 %3405
      %3407 = vrot.lane.b32.xlu0 %v2618, 96
      %v3408 = vpop.permute.xlu0 %3407
      %3409 = vrot.lane.b32.xlu0 %v2619, 96
      %v3410 = vpop.permute.xlu0 %3409
      %3411 = vrot.lane.b32.xlu0 %v2620, 96
      %v3412 = vpop.permute.xlu0 %3411
      %3413 = vrot.lane.b32.xlu0 %v2621, 96
      %v3414 = vpop.permute.xlu0 %3413
      %3415 = vrot.lane.b32.xlu0 %v2622, 96
      %v3416 = vpop.permute.xlu0 %3415
      %3417 = vrot.lane.b32.xlu0 %v2623, 96
      %v3418 = vpop.permute.xlu0 %3417
      %3419 = vrot.lane.b32.xlu0 %v2624, 96
      %v3420 = vpop.permute.xlu0 %3419
      %3421 = vrot.lane.b32.xlu0 %v2625, 96
      %v3422 = vpop.permute.xlu0 %3421
      %3423 = vrot.lane.b32.xlu0 %v2626, 96
      %v3424 = vpop.permute.xlu0 %3423
      %3425 = vrot.lane.b32.xlu0 %v2627, 96
      %v3426 = vpop.permute.xlu0 %3425
      %3427 = vrot.lane.b32.xlu0 %v2628, 96
      %v3428 = vpop.permute.xlu0 %3427
      %3429 = vrot.lane.b32.xlu0 %v2629, 96
      %v3430 = vpop.permute.xlu0 %3429
      %3431 = vrot.lane.b32.xlu0 %v2630, 96
      %v3432 = vpop.permute.xlu0 %3431
      %3433 = vrot.lane.b32.xlu0 %v2631, 96
      %v3434 = vpop.permute.xlu0 %3433
      %3435 = vrot.lane.b32.xlu0 %v2632, 96
      %v3436 = vpop.permute.xlu0 %3435
      %vm3437 = vcmask 785408
      %v3438 = vsel %vm3437, %v3402, %v3404
      %v3439 = vsel %vm3437, %v3404, %v3406
      %v3440 = vsel %vm3437, %v3406, %v3408
      %v3441 = vsel %vm3437, %v3408, %v3410
      %v3442 = vsel %vm3437, %v3410, %v3412
      %v3443 = vsel %vm3437, %v3412, %v3414
      %v3444 = vsel %vm3437, %v3414, %v3416
      %v3445 = vsel %vm3437, %v3416, %v3418
      %v3446 = vsel %vm3437, %v3420, %v3422
      %v3447 = vsel %vm3437, %v3422, %v3424
      %v3448 = vsel %vm3437, %v3424, %v3426
      %v3449 = vsel %vm3437, %v3426, %v3428
      %v3450 = vsel %vm3437, %v3428, %v3430
      %v3451 = vsel %vm3437, %v3430, %v3432
      %v3452 = vsel %vm3437, %v3432, %v3434
      %v3453 = vsel %vm3437, %v3434, %v3436
      %v3471 = vsel %vm868, %v3400, 0
      %3473 = vmatprep.subr.mxu0 0.0
      %3474 = vmatpush1.msra.mxu0 0.0
      %3475 = vmatprep.subr.mxu0 0.0
      %3476 = vmatpush1.msra.mxu0 0.0
      %3477 = vmatprep.subr.mxu0 0.0
      %3478 = vmatpush1.msra.mxu0 0.0
      %3479 = vmatprep.subr.mxu0 0.0
      %3480 = vmatpush1.msra.mxu0 0.0
      %3481 = vmatprep.subr.mxu0 0.0
      %3482 = vmatpush1.msra.mxu0 0.0
      %3483 = vmatprep.subr.mxu0 0.0
      %3484 = vmatpush1.msra.mxu0 0.0
      %3485 = vmatprep.subr.mxu0 0.0
      %3486 = vmatpush1.msra.mxu0 0.0
      %3487 = vmatprep.subr.mxu0 0.0
      %3488 = vmatpush1.msra.mxu0 0.0
      %3489 = vmatprep.subr.mxu0 0.0
      %3490 = vmatpush1.msra.mxu0 0.0
      %3491 = vmatprep.subr.mxu0 0.0
      %3492 = vmatpush1.msra.mxu0 0.0
      %3493 = vmatprep.subr.mxu0 0.0
      %3494 = vmatpush1.msra.mxu0 0.0
      %3495 = vmatprep.subr.mxu0 0.0
      %3496 = vmatpush1.msra.mxu0 0.0
      %3497 = vmatprep.subr.mxu0 0.0
      %3498 = vmatpush1.msra.mxu0 0.0
      %3499 = vmatprep.subr.mxu0 0.0
      %3500 = vmatpush1.msra.mxu0 0.0
      %3501 = vmatprep.subr.mxu0 %v3447
      %3502 = vmatpush1.msra.mxu0 %v3446
      %3503 = vmatprep.subr.mxu0 %v3439
      %3504 = vmatpush1.msra.mxu0 %v3438
      %3505 = vmatprep.subr.mxu0 0.0
      %3506 = vmatpush2.msra.mxu0 0.0
      %3507 = vmatprep.subr.mxu0 0.0
      %3508 = vmatpush2.msra.mxu0 0.0
      %3509 = vmatprep.subr.mxu0 0.0
      %3510 = vmatpush2.msra.mxu0 0.0
      %3511 = vmatprep.subr.mxu0 0.0
      %3512 = vmatpush2.msra.mxu0 0.0
      %3513 = vmatprep.subr.mxu0 0.0
      %3514 = vmatpush2.msra.mxu0 0.0
      %3515 = vmatprep.subr.mxu0 0.0
      %3516 = vmatpush2.msra.mxu0 0.0
      %3517 = vmatprep.subr.mxu0 0.0
      %3518 = vmatpush2.msra.mxu0 0.0
      %3519 = vmatprep.subr.mxu0 0.0
      %3520 = vmatpush2.msra.mxu0 0.0
      %3521 = vmatprep.subr.mxu0 0.0
      %3522 = vmatpush2.msra.mxu0 0.0
      %3523 = vmatprep.subr.mxu0 0.0
      %3524 = vmatpush2.msra.mxu0 0.0
      %3525 = vmatprep.subr.mxu0 0.0
      %3526 = vmatpush2.msra.mxu0 0.0
      %3527 = vmatprep.subr.mxu0 0.0
      %3528 = vmatpush2.msra.mxu0 0.0
      %3529 = vmatprep.subr.mxu0 0.0
      %3530 = vmatpush2.msra.mxu0 0.0
      %3531 = vmatprep.subr.mxu0 0.0
      %3532 = vmatpush2.msra.mxu0 0.0
      %3533 = vmatprep.subr.mxu0 0.0
      %3534 = vmatpush2.msra.mxu0 0.0
      %3535 = vmatprep.subr.mxu0 0.0
      %3536 = vmatpush2.msra.mxu0 0.0
      %3537 = vmatprep.mubr.f32.mxu0 0.0
      %3538 = vmatmul.mubr.f32.gmra.mxu0 %v3471
      %v3539 = vpop.f32.mrf.mxu0
      %v3540 = vadd.f32 0.0, %v3539
      %v3541 = vpop.f32.mrf.mxu0
      %v3542 = vadd.f32 0.0, %v3541
      %3543 = vdwg.mxu0
      %3544 = vmatprep.subr.mxu0 0.0
      %3545 = vmatpush1.msra.mxu0 0.0
      %3546 = vmatprep.subr.mxu0 0.0
      %3547 = vmatpush1.msra.mxu0 0.0
      %3548 = vmatprep.subr.mxu0 0.0
      %3549 = vmatpush1.msra.mxu0 0.0
      %3550 = vmatprep.subr.mxu0 0.0
      %3551 = vmatpush1.msra.mxu0 0.0
      %3552 = vmatprep.subr.mxu0 0.0
      %3553 = vmatpush1.msra.mxu0 0.0
      %3554 = vmatprep.subr.mxu0 0.0
      %3555 = vmatpush1.msra.mxu0 0.0
      %3556 = vmatprep.subr.mxu0 0.0
      %3557 = vmatpush1.msra.mxu0 0.0
      %3558 = vmatprep.subr.mxu0 0.0
      %3559 = vmatpush1.msra.mxu0 0.0
      %3560 = vmatprep.subr.mxu0 0.0
      %3561 = vmatpush1.msra.mxu0 0.0
      %3562 = vmatprep.subr.mxu0 0.0
      %3563 = vmatpush1.msra.mxu0 0.0
      %3564 = vmatprep.subr.mxu0 0.0
      %3565 = vmatpush1.msra.mxu0 0.0
      %3566 = vmatprep.subr.mxu0 0.0
      %3567 = vmatpush1.msra.mxu0 0.0
      %3568 = vmatprep.subr.mxu0 0.0
      %3569 = vmatpush1.msra.mxu0 0.0
      %3570 = vmatprep.subr.mxu0 0.0
      %3571 = vmatpush1.msra.mxu0 0.0
      %3572 = vmatprep.subr.mxu0 %v3449
      %3573 = vmatpush1.msra.mxu0 %v3448
      %3574 = vmatprep.subr.mxu0 %v3441
      %3575 = vmatpush1.msra.mxu0 %v3440
      %3576 = vmatprep.subr.mxu0 0.0
      %3577 = vmatpush2.msra.mxu0 0.0
      %3578 = vmatprep.subr.mxu0 0.0
      %3579 = vmatpush2.msra.mxu0 0.0
      %3580 = vmatprep.subr.mxu0 0.0
      %3581 = vmatpush2.msra.mxu0 0.0
      %3582 = vmatprep.subr.mxu0 0.0
      %3583 = vmatpush2.msra.mxu0 0.0
      %3584 = vmatprep.subr.mxu0 0.0
      %3585 = vmatpush2.msra.mxu0 0.0
      %3586 = vmatprep.subr.mxu0 0.0
      %3587 = vmatpush2.msra.mxu0 0.0
      %3588 = vmatprep.subr.mxu0 0.0
      %3589 = vmatpush2.msra.mxu0 0.0
      %3590 = vmatprep.subr.mxu0 0.0
      %3591 = vmatpush2.msra.mxu0 0.0
      %3592 = vmatprep.subr.mxu0 0.0
      %3593 = vmatpush2.msra.mxu0 0.0
      %3594 = vmatprep.subr.mxu0 0.0
      %3595 = vmatpush2.msra.mxu0 0.0
      %3596 = vmatprep.subr.mxu0 0.0
      %3597 = vmatpush2.msra.mxu0 0.0
      %3598 = vmatprep.subr.mxu0 0.0
      %3599 = vmatpush2.msra.mxu0 0.0
      %3600 = vmatprep.subr.mxu0 0.0
      %3601 = vmatpush2.msra.mxu0 0.0
      %3602 = vmatprep.subr.mxu0 0.0
      %3603 = vmatpush2.msra.mxu0 0.0
      %3604 = vmatprep.subr.mxu0 0.0
      %3605 = vmatpush2.msra.mxu0 0.0
      %3606 = vmatprep.subr.mxu0 0.0
      %3607 = vmatpush2.msra.mxu0 0.0
      %3608 = vmatprep.mubr.f32.mxu0 0.0
      %3609 = vmatmul.mubr.f32.gmra.mxu0 %v3471
      %v3610 = vpop.f32.mrf.mxu0
      %v3611 = vadd.f32 0.0, %v3610
      %v3612 = vpop.f32.mrf.mxu0
      %v3613 = vadd.f32 0.0, %v3612
      %3614 = vdwg.mxu0
      %3615 = vmatprep.subr.mxu0 0.0
      %3616 = vmatpush1.msra.mxu0 0.0
      %3617 = vmatprep.subr.mxu0 0.0
      %3618 = vmatpush1.msra.mxu0 0.0
      %3619 = vmatprep.subr.mxu0 0.0
      %3620 = vmatpush1.msra.mxu0 0.0
      %3621 = vmatprep.subr.mxu0 0.0
      %3622 = vmatpush1.msra.mxu0 0.0
      %3623 = vmatprep.subr.mxu0 0.0
      %3624 = vmatpush1.msra.mxu0 0.0
      %3625 = vmatprep.subr.mxu0 0.0
      %3626 = vmatpush1.msra.mxu0 0.0
      %3627 = vmatprep.subr.mxu0 0.0
      %3628 = vmatpush1.msra.mxu0 0.0
      %3629 = vmatprep.subr.mxu0 0.0
      %3630 = vmatpush1.msra.mxu0 0.0
      %3631 = vmatprep.subr.mxu0 0.0
      %3632 = vmatpush1.msra.mxu0 0.0
      %3633 = vmatprep.subr.mxu0 0.0
      %3634 = vmatpush1.msra.mxu0 0.0
      %3635 = vmatprep.subr.mxu0 0.0
      %3636 = vmatpush1.msra.mxu0 0.0
      %3637 = vmatprep.subr.mxu0 0.0
      %3638 = vmatpush1.msra.mxu0 0.0
      %3639 = vmatprep.subr.mxu0 0.0
      %3640 = vmatpush1.msra.mxu0 0.0
      %3641 = vmatprep.subr.mxu0 0.0
      %3642 = vmatpush1.msra.mxu0 0.0
      %3643 = vmatprep.subr.mxu0 %v3451
      %3644 = vmatpush1.msra.mxu0 %v3450
      %3645 = vmatprep.subr.mxu0 %v3443
      %3646 = vmatpush1.msra.mxu0 %v3442
      %3647 = vmatprep.subr.mxu0 0.0
      %3648 = vmatpush2.msra.mxu0 0.0
      %3649 = vmatprep.subr.mxu0 0.0
      %3650 = vmatpush2.msra.mxu0 0.0
      %3651 = vmatprep.subr.mxu0 0.0
      %3652 = vmatpush2.msra.mxu0 0.0
      %3653 = vmatprep.subr.mxu0 0.0
      %3654 = vmatpush2.msra.mxu0 0.0
      %3655 = vmatprep.subr.mxu0 0.0
      %3656 = vmatpush2.msra.mxu0 0.0
      %3657 = vmatprep.subr.mxu0 0.0
      %3658 = vmatpush2.msra.mxu0 0.0
      %3659 = vmatprep.subr.mxu0 0.0
      %3660 = vmatpush2.msra.mxu0 0.0
      %3661 = vmatprep.subr.mxu0 0.0
      %3662 = vmatpush2.msra.mxu0 0.0
      %3663 = vmatprep.subr.mxu0 0.0
      %3664 = vmatpush2.msra.mxu0 0.0
      %3665 = vmatprep.subr.mxu0 0.0
      %3666 = vmatpush2.msra.mxu0 0.0
      %3667 = vmatprep.subr.mxu0 0.0
      %3668 = vmatpush2.msra.mxu0 0.0
      %3669 = vmatprep.subr.mxu0 0.0
      %3670 = vmatpush2.msra.mxu0 0.0
      %3671 = vmatprep.subr.mxu0 0.0
      %3672 = vmatpush2.msra.mxu0 0.0
      %3673 = vmatprep.subr.mxu0 0.0
      %3674 = vmatpush2.msra.mxu0 0.0
      %3675 = vmatprep.subr.mxu0 0.0
      %3676 = vmatpush2.msra.mxu0 0.0
      %3677 = vmatprep.subr.mxu0 0.0
      %3678 = vmatpush2.msra.mxu0 0.0
      %3679 = vmatprep.mubr.f32.mxu0 0.0
      %3680 = vmatmul.mubr.f32.gmra.mxu0 %v3471
      %v3681 = vpop.f32.mrf.mxu0
      %v3682 = vadd.f32 0.0, %v3681
      %v3683 = vpop.f32.mrf.mxu0
      %v3684 = vadd.f32 0.0, %v3683
      %3685 = vdwg.mxu0
      %3686 = vmatprep.subr.mxu0 0.0
      %3687 = vmatpush1.msra.mxu0 0.0
      %3688 = vmatprep.subr.mxu0 0.0
      %3689 = vmatpush1.msra.mxu0 0.0
      %3690 = vmatprep.subr.mxu0 0.0
      %3691 = vmatpush1.msra.mxu0 0.0
      %3692 = vmatprep.subr.mxu0 0.0
      %3693 = vmatpush1.msra.mxu0 0.0
      %3694 = vmatprep.subr.mxu0 0.0
      %3695 = vmatpush1.msra.mxu0 0.0
      %3696 = vmatprep.subr.mxu0 0.0
      %3697 = vmatpush1.msra.mxu0 0.0
      %3698 = vmatprep.subr.mxu0 0.0
      %3699 = vmatpush1.msra.mxu0 0.0
      %3700 = vmatprep.subr.mxu0 0.0
      %3701 = vmatpush1.msra.mxu0 0.0
      %3702 = vmatprep.subr.mxu0 0.0
      %3703 = vmatpush1.msra.mxu0 0.0
      %3704 = vmatprep.subr.mxu0 0.0
      %3705 = vmatpush1.msra.mxu0 0.0
      %3706 = vmatprep.subr.mxu0 0.0
      %3707 = vmatpush1.msra.mxu0 0.0
      %3708 = vmatprep.subr.mxu0 0.0
      %3709 = vmatpush1.msra.mxu0 0.0
      %3710 = vmatprep.subr.mxu0 0.0
      %3711 = vmatpush1.msra.mxu0 0.0
      %3712 = vmatprep.subr.mxu0 0.0
      %3713 = vmatpush1.msra.mxu0 0.0
      %3714 = vmatprep.subr.mxu0 %v3453
      %3715 = vmatpush1.msra.mxu0 %v3452
      %3716 = vmatprep.subr.mxu0 %v3445
      %3717 = vmatpush1.msra.mxu0 %v3444
      %3718 = vmatprep.subr.mxu0 0.0
      %3719 = vmatpush2.msra.mxu0 0.0
      %3720 = vmatprep.subr.mxu0 0.0
      %3721 = vmatpush2.msra.mxu0 0.0
      %3722 = vmatprep.subr.mxu0 0.0
      %3723 = vmatpush2.msra.mxu0 0.0
      %3724 = vmatprep.subr.mxu0 0.0
      %3725 = vmatpush2.msra.mxu0 0.0
      %3726 = vmatprep.subr.mxu0 0.0
      %3727 = vmatpush2.msra.mxu0 0.0
      %3728 = vmatprep.subr.mxu0 0.0
      %3729 = vmatpush2.msra.mxu0 0.0
      %3730 = vmatprep.subr.mxu0 0.0
      %3731 = vmatpush2.msra.mxu0 0.0
      %3732 = vmatprep.subr.mxu0 0.0
      %3733 = vmatpush2.msra.mxu0 0.0
      %3734 = vmatprep.subr.mxu0 0.0
      %3735 = vmatpush2.msra.mxu0 0.0
      %3736 = vmatprep.subr.mxu0 0.0
      %3737 = vmatpush2.msra.mxu0 0.0
      %3738 = vmatprep.subr.mxu0 0.0
      %3739 = vmatpush2.msra.mxu0 0.0
      %3740 = vmatprep.subr.mxu0 0.0
      %3741 = vmatpush2.msra.mxu0 0.0
      %3742 = vmatprep.subr.mxu0 0.0
      %3743 = vmatpush2.msra.mxu0 0.0
      %3744 = vmatprep.subr.mxu0 0.0
      %3745 = vmatpush2.msra.mxu0 0.0
      %3746 = vmatprep.subr.mxu0 0.0
      %3747 = vmatpush2.msra.mxu0 0.0
      %3748 = vmatprep.subr.mxu0 0.0
      %3749 = vmatpush2.msra.mxu0 0.0
      %3750 = vmatprep.mubr.f32.mxu0 0.0
      %3751 = vmatmul.mubr.f32.gmra.mxu0 %v3471
      %v3752 = vpop.f32.mrf.mxu0
      %v3753 = vadd.f32 0.0, %v3752
      %v3754 = vpop.f32.mrf.mxu0
      %v3755 = vadd.f32 0.0, %v3754
      %3756 = vdwg.mxu0
      %v3757 = vadd.f32 %v3391, %v3540
      %v3758 = vadd.f32 %v3392, %v3542
      %v3759 = vadd.f32 %v3393, %v3611
      %v3760 = vadd.f32 %v3394, %v3613
      %v3761 = vadd.f32 %v3395, %v3682
      %v3762 = vadd.f32 %v3396, %v3684
      %v3763 = vadd.f32 %v3397, %v3753
      %v3764 = vadd.f32 %v3398, %v3755
      %s3765 = scalar_lea.vmem %s2, 64
      %v3766 = vld [vmem:[%s3765] sm:$0xff]
      %3767 = vrot.lane.b32.xlu0 %v2615, 95
      %v3768 = vpop.permute.xlu0 %3767
      %3769 = vrot.lane.b32.xlu0 %v2616, 95
      %v3770 = vpop.permute.xlu0 %3769
      %3771 = vrot.lane.b32.xlu0 %v2617, 95
      %v3772 = vpop.permute.xlu0 %3771
      %3773 = vrot.lane.b32.xlu0 %v2618, 95
      %v3774 = vpop.permute.xlu0 %3773
      %3775 = vrot.lane.b32.xlu0 %v2619, 95
      %v3776 = vpop.permute.xlu0 %3775
      %3777 = vrot.lane.b32.xlu0 %v2620, 95
      %v3778 = vpop.permute.xlu0 %3777
      %3779 = vrot.lane.b32.xlu0 %v2621, 95
      %v3780 = vpop.permute.xlu0 %3779
      %3781 = vrot.lane.b32.xlu0 %v2622, 95
      %v3782 = vpop.permute.xlu0 %3781
      %3783 = vrot.lane.b32.xlu0 %v2623, 95
      %v3784 = vpop.permute.xlu0 %3783
      %3785 = vrot.lane.b32.xlu0 %v2624, 95
      %v3786 = vpop.permute.xlu0 %3785
      %3787 = vrot.lane.b32.xlu0 %v2625, 95
      %v3788 = vpop.permute.xlu0 %3787
      %3789 = vrot.lane.b32.xlu0 %v2626, 95
      %v3790 = vpop.permute.xlu0 %3789
      %3791 = vrot.lane.b32.xlu0 %v2627, 95
      %v3792 = vpop.permute.xlu0 %3791
      %3793 = vrot.lane.b32.xlu0 %v2628, 95
      %v3794 = vpop.permute.xlu0 %3793
      %3795 = vrot.lane.b32.xlu0 %v2629, 95
      %v3796 = vpop.permute.xlu0 %3795
      %3797 = vrot.lane.b32.xlu0 %v2630, 95
      %v3798 = vpop.permute.xlu0 %3797
      %3799 = vrot.lane.b32.xlu0 %v2631, 95
      %v3800 = vpop.permute.xlu0 %3799
      %3801 = vrot.lane.b32.xlu0 %v2632, 95
      %v3802 = vpop.permute.xlu0 %3801
      %vm3803 = vcmask 777216
      %v3804 = vsel %vm3803, %v3768, %v3770
      %v3805 = vsel %vm3803, %v3770, %v3772
      %v3806 = vsel %vm3803, %v3772, %v3774
      %v3807 = vsel %vm3803, %v3774, %v3776
      %v3808 = vsel %vm3803, %v3776, %v3778
      %v3809 = vsel %vm3803, %v3778, %v3780
      %v3810 = vsel %vm3803, %v3780, %v3782
      %v3811 = vsel %vm3803, %v3782, %v3784
      %v3812 = vsel %vm3803, %v3786, %v3788
      %v3813 = vsel %vm3803, %v3788, %v3790
      %v3814 = vsel %vm3803, %v3790, %v3792
      %v3815 = vsel %vm3803, %v3792, %v3794
      %v3816 = vsel %vm3803, %v3794, %v3796
      %v3817 = vsel %vm3803, %v3796, %v3798
      %v3818 = vsel %vm3803, %v3798, %v3800
      %v3819 = vsel %vm3803, %v3800, %v3802
      %v3837 = vsel %vm868, %v3766, 0
      %3839 = vmatprep.subr.mxu0 0.0
      %3840 = vmatpush1.msra.mxu0 0.0
      %3841 = vmatprep.subr.mxu0 0.0
      %3842 = vmatpush1.msra.mxu0 0.0
      %3843 = vmatprep.subr.mxu0 0.0
      %3844 = vmatpush1.msra.mxu0 0.0
      %3845 = vmatprep.subr.mxu0 0.0
      %3846 = vmatpush1.msra.mxu0 0.0
      %3847 = vmatprep.subr.mxu0 0.0
      %3848 = vmatpush1.msra.mxu0 0.0
      %3849 = vmatprep.subr.mxu0 0.0
      %3850 = vmatpush1.msra.mxu0 0.0
      %3851 = vmatprep.subr.mxu0 0.0
      %3852 = vmatpush1.msra.mxu0 0.0
      %3853 = vmatprep.subr.mxu0 0.0
      %3854 = vmatpush1.msra.mxu0 0.0
      %3855 = vmatprep.subr.mxu0 0.0
      %3856 = vmatpush1.msra.mxu0 0.0
      %3857 = vmatprep.subr.mxu0 0.0
      %3858 = vmatpush1.msra.mxu0 0.0
      %3859 = vmatprep.subr.mxu0 0.0
      %3860 = vmatpush1.msra.mxu0 0.0
      %3861 = vmatprep.subr.mxu0 0.0
      %3862 = vmatpush1.msra.mxu0 0.0
      %3863 = vmatprep.subr.mxu0 0.0
      %3864 = vmatpush1.msra.mxu0 0.0
      %3865 = vmatprep.subr.mxu0 0.0
      %3866 = vmatpush1.msra.mxu0 0.0
      %3867 = vmatprep.subr.mxu0 %v3813
      %3868 = vmatpush1.msra.mxu0 %v3812
      %3869 = vmatprep.subr.mxu0 %v3805
      %3870 = vmatpush1.msra.mxu0 %v3804
      %3871 = vmatprep.subr.mxu0 0.0
      %3872 = vmatpush2.msra.mxu0 0.0
      %3873 = vmatprep.subr.mxu0 0.0
      %3874 = vmatpush2.msra.mxu0 0.0
      %3875 = vmatprep.subr.mxu0 0.0
      %3876 = vmatpush2.msra.mxu0 0.0
      %3877 = vmatprep.subr.mxu0 0.0
      %3878 = vmatpush2.msra.mxu0 0.0
      %3879 = vmatprep.subr.mxu0 0.0
      %3880 = vmatpush2.msra.mxu0 0.0
      %3881 = vmatprep.subr.mxu0 0.0
      %3882 = vmatpush2.msra.mxu0 0.0
      %3883 = vmatprep.subr.mxu0 0.0
      %3884 = vmatpush2.msra.mxu0 0.0
      %3885 = vmatprep.subr.mxu0 0.0
      %3886 = vmatpush2.msra.mxu0 0.0
      %3887 = vmatprep.subr.mxu0 0.0
      %3888 = vmatpush2.msra.mxu0 0.0
      %3889 = vmatprep.subr.mxu0 0.0
      %3890 = vmatpush2.msra.mxu0 0.0
      %3891 = vmatprep.subr.mxu0 0.0
      %3892 = vmatpush2.msra.mxu0 0.0
      %3893 = vmatprep.subr.mxu0 0.0
      %3894 = vmatpush2.msra.mxu0 0.0
      %3895 = vmatprep.subr.mxu0 0.0
      %3896 = vmatpush2.msra.mxu0 0.0
      %3897 = vmatprep.subr.mxu0 0.0
      %3898 = vmatpush2.msra.mxu0 0.0
      %3899 = vmatprep.subr.mxu0 0.0
      %3900 = vmatpush2.msra.mxu0 0.0
      %3901 = vmatprep.subr.mxu0 0.0
      %3902 = vmatpush2.msra.mxu0 0.0
      %3903 = vmatprep.mubr.f32.mxu0 0.0
      %3904 = vmatmul.mubr.f32.gmra.mxu0 %v3837
      %v3905 = vpop.f32.mrf.mxu0
      %v3906 = vadd.f32 0.0, %v3905
      %v3907 = vpop.f32.mrf.mxu0
      %v3908 = vadd.f32 0.0, %v3907
      %3909 = vdwg.mxu0
      %3910 = vmatprep.subr.mxu0 0.0
      %3911 = vmatpush1.msra.mxu0 0.0
      %3912 = vmatprep.subr.mxu0 0.0
      %3913 = vmatpush1.msra.mxu0 0.0
      %3914 = vmatprep.subr.mxu0 0.0
      %3915 = vmatpush1.msra.mxu0 0.0
      %3916 = vmatprep.subr.mxu0 0.0
      %3917 = vmatpush1.msra.mxu0 0.0
      %3918 = vmatprep.subr.mxu0 0.0
      %3919 = vmatpush1.msra.mxu0 0.0
      %3920 = vmatprep.subr.mxu0 0.0
      %3921 = vmatpush1.msra.mxu0 0.0
      %3922 = vmatprep.subr.mxu0 0.0
      %3923 = vmatpush1.msra.mxu0 0.0
      %3924 = vmatprep.subr.mxu0 0.0
      %3925 = vmatpush1.msra.mxu0 0.0
      %3926 = vmatprep.subr.mxu0 0.0
      %3927 = vmatpush1.msra.mxu0 0.0
      %3928 = vmatprep.subr.mxu0 0.0
      %3929 = vmatpush1.msra.mxu0 0.0
      %3930 = vmatprep.subr.mxu0 0.0
      %3931 = vmatpush1.msra.mxu0 0.0
      %3932 = vmatprep.subr.mxu0 0.0
      %3933 = vmatpush1.msra.mxu0 0.0
      %3934 = vmatprep.subr.mxu0 0.0
      %3935 = vmatpush1.msra.mxu0 0.0
      %3936 = vmatprep.subr.mxu0 0.0
      %3937 = vmatpush1.msra.mxu0 0.0
      %3938 = vmatprep.subr.mxu0 %v3815
      %3939 = vmatpush1.msra.mxu0 %v3814
      %3940 = vmatprep.subr.mxu0 %v3807
      %3941 = vmatpush1.msra.mxu0 %v3806
      %3942 = vmatprep.subr.mxu0 0.0
      %3943 = vmatpush2.msra.mxu0 0.0
      %3944 = vmatprep.subr.mxu0 0.0
      %3945 = vmatpush2.msra.mxu0 0.0
      %3946 = vmatprep.subr.mxu0 0.0
      %3947 = vmatpush2.msra.mxu0 0.0
      %3948 = vmatprep.subr.mxu0 0.0
      %3949 = vmatpush2.msra.mxu0 0.0
      %3950 = vmatprep.subr.mxu0 0.0
      %3951 = vmatpush2.msra.mxu0 0.0
      %3952 = vmatprep.subr.mxu0 0.0
      %3953 = vmatpush2.msra.mxu0 0.0
      %3954 = vmatprep.subr.mxu0 0.0
      %3955 = vmatpush2.msra.mxu0 0.0
      %3956 = vmatprep.subr.mxu0 0.0
      %3957 = vmatpush2.msra.mxu0 0.0
      %3958 = vmatprep.subr.mxu0 0.0
      %3959 = vmatpush2.msra.mxu0 0.0
      %3960 = vmatprep.subr.mxu0 0.0
      %3961 = vmatpush2.msra.mxu0 0.0
      %3962 = vmatprep.subr.mxu0 0.0
      %3963 = vmatpush2.msra.mxu0 0.0
      %3964 = vmatprep.subr.mxu0 0.0
      %3965 = vmatpush2.msra.mxu0 0.0
      %3966 = vmatprep.subr.mxu0 0.0
      %3967 = vmatpush2.msra.mxu0 0.0
      %3968 = vmatprep.subr.mxu0 0.0
      %3969 = vmatpush2.msra.mxu0 0.0
      %3970 = vmatprep.subr.mxu0 0.0
      %3971 = vmatpush2.msra.mxu0 0.0
      %3972 = vmatprep.subr.mxu0 0.0
      %3973 = vmatpush2.msra.mxu0 0.0
      %3974 = vmatprep.mubr.f32.mxu0 0.0
      %3975 = vmatmul.mubr.f32.gmra.mxu0 %v3837
      %v3976 = vpop.f32.mrf.mxu0
      %v3977 = vadd.f32 0.0, %v3976
      %v3978 = vpop.f32.mrf.mxu0
      %v3979 = vadd.f32 0.0, %v3978
      %3980 = vdwg.mxu0
      %3981 = vmatprep.subr.mxu0 0.0
      %3982 = vmatpush1.msra.mxu0 0.0
      %3983 = vmatprep.subr.mxu0 0.0
      %3984 = vmatpush1.msra.mxu0 0.0
      %3985 = vmatprep.subr.mxu0 0.0
      %3986 = vmatpush1.msra.mxu0 0.0
      %3987 = vmatprep.subr.mxu0 0.0
      %3988 = vmatpush1.msra.mxu0 0.0
      %3989 = vmatprep.subr.mxu0 0.0
      %3990 = vmatpush1.msra.mxu0 0.0
      %3991 = vmatprep.subr.mxu0 0.0
      %3992 = vmatpush1.msra.mxu0 0.0
      %3993 = vmatprep.subr.mxu0 0.0
      %3994 = vmatpush1.msra.mxu0 0.0
      %3995 = vmatprep.subr.mxu0 0.0
      %3996 = vmatpush1.msra.mxu0 0.0
      %3997 = vmatprep.subr.mxu0 0.0
      %3998 = vmatpush1.msra.mxu0 0.0
      %3999 = vmatprep.subr.mxu0 0.0
      %4000 = vmatpush1.msra.mxu0 0.0
      %4001 = vmatprep.subr.mxu0 0.0
      %4002 = vmatpush1.msra.mxu0 0.0
      %4003 = vmatprep.subr.mxu0 0.0
      %4004 = vmatpush1.msra.mxu0 0.0
      %4005 = vmatprep.subr.mxu0 0.0
      %4006 = vmatpush1.msra.mxu0 0.0
      %4007 = vmatprep.subr.mxu0 0.0
      %4008 = vmatpush1.msra.mxu0 0.0
      %4009 = vmatprep.subr.mxu0 %v3817
      %4010 = vmatpush1.msra.mxu0 %v3816
      %4011 = vmatprep.subr.mxu0 %v3809
      %4012 = vmatpush1.msra.mxu0 %v3808
      %4013 = vmatprep.subr.mxu0 0.0
      %4014 = vmatpush2.msra.mxu0 0.0
      %4015 = vmatprep.subr.mxu0 0.0
      %4016 = vmatpush2.msra.mxu0 0.0
      %4017 = vmatprep.subr.mxu0 0.0
      %4018 = vmatpush2.msra.mxu0 0.0
      %4019 = vmatprep.subr.mxu0 0.0
      %4020 = vmatpush2.msra.mxu0 0.0
      %4021 = vmatprep.subr.mxu0 0.0
      %4022 = vmatpush2.msra.mxu0 0.0
      %4023 = vmatprep.subr.mxu0 0.0
      %4024 = vmatpush2.msra.mxu0 0.0
      %4025 = vmatprep.subr.mxu0 0.0
      %4026 = vmatpush2.msra.mxu0 0.0
      %4027 = vmatprep.subr.mxu0 0.0
      %4028 = vmatpush2.msra.mxu0 0.0
      %4029 = vmatprep.subr.mxu0 0.0
      %4030 = vmatpush2.msra.mxu0 0.0
      %4031 = vmatprep.subr.mxu0 0.0
      %4032 = vmatpush2.msra.mxu0 0.0
      %4033 = vmatprep.subr.mxu0 0.0
      %4034 = vmatpush2.msra.mxu0 0.0
      %4035 = vmatprep.subr.mxu0 0.0
      %4036 = vmatpush2.msra.mxu0 0.0
      %4037 = vmatprep.subr.mxu0 0.0
      %4038 = vmatpush2.msra.mxu0 0.0
      %4039 = vmatprep.subr.mxu0 0.0
      %4040 = vmatpush2.msra.mxu0 0.0
      %4041 = vmatprep.subr.mxu0 0.0
      %4042 = vmatpush2.msra.mxu0 0.0
      %4043 = vmatprep.subr.mxu0 0.0
      %4044 = vmatpush2.msra.mxu0 0.0
      %4045 = vmatprep.mubr.f32.mxu0 0.0
      %4046 = vmatmul.mubr.f32.gmra.mxu0 %v3837
      %v4047 = vpop.f32.mrf.mxu0
      %v4048 = vadd.f32 0.0, %v4047
      %v4049 = vpop.f32.mrf.mxu0
      %v4050 = vadd.f32 0.0, %v4049
      %4051 = vdwg.mxu0
      %4052 = vmatprep.subr.mxu0 0.0
      %4053 = vmatpush1.msra.mxu0 0.0
      %4054 = vmatprep.subr.mxu0 0.0
      %4055 = vmatpush1.msra.mxu0 0.0
      %4056 = vmatprep.subr.mxu0 0.0
      %4057 = vmatpush1.msra.mxu0 0.0
      %4058 = vmatprep.subr.mxu0 0.0
      %4059 = vmatpush1.msra.mxu0 0.0
      %4060 = vmatprep.subr.mxu0 0.0
      %4061 = vmatpush1.msra.mxu0 0.0
      %4062 = vmatprep.subr.mxu0 0.0
      %4063 = vmatpush1.msra.mxu0 0.0
      %4064 = vmatprep.subr.mxu0 0.0
      %4065 = vmatpush1.msra.mxu0 0.0
      %4066 = vmatprep.subr.mxu0 0.0
      %4067 = vmatpush1.msra.mxu0 0.0
      %4068 = vmatprep.subr.mxu0 0.0
      %4069 = vmatpush1.msra.mxu0 0.0
      %4070 = vmatprep.subr.mxu0 0.0
      %4071 = vmatpush1.msra.mxu0 0.0
      %4072 = vmatprep.subr.mxu0 0.0
      %4073 = vmatpush1.msra.mxu0 0.0
      %4074 = vmatprep.subr.mxu0 0.0
      %4075 = vmatpush1.msra.mxu0 0.0
      %4076 = vmatprep.subr.mxu0 0.0
      %4077 = vmatpush1.msra.mxu0 0.0
      %4078 = vmatprep.subr.mxu0 0.0
      %4079 = vmatpush1.msra.mxu0 0.0
      %4080 = vmatprep.subr.mxu0 %v3819
      %4081 = vmatpush1.msra.mxu0 %v3818
      %4082 = vmatprep.subr.mxu0 %v3811
      %4083 = vmatpush1.msra.mxu0 %v3810
      %4084 = vmatprep.subr.mxu0 0.0
      %4085 = vmatpush2.msra.mxu0 0.0
      %4086 = vmatprep.subr.mxu0 0.0
      %4087 = vmatpush2.msra.mxu0 0.0
      %4088 = vmatprep.subr.mxu0 0.0
      %4089 = vmatpush2.msra.mxu0 0.0
      %4090 = vmatprep.subr.mxu0 0.0
      %4091 = vmatpush2.msra.mxu0 0.0
      %4092 = vmatprep.subr.mxu0 0.0
      %4093 = vmatpush2.msra.mxu0 0.0
      %4094 = vmatprep.subr.mxu0 0.0
      %4095 = vmatpush2.msra.mxu0 0.0
      %4096 = vmatprep.subr.mxu0 0.0
      %4097 = vmatpush2.msra.mxu0 0.0
      %4098 = vmatprep.subr.mxu0 0.0
      %4099 = vmatpush2.msra.mxu0 0.0
      %4100 = vmatprep.subr.mxu0 0.0
      %4101 = vmatpush2.msra.mxu0 0.0
      %4102 = vmatprep.subr.mxu0 0.0
      %4103 = vmatpush2.msra.mxu0 0.0
      %4104 = vmatprep.subr.mxu0 0.0
      %4105 = vmatpush2.msra.mxu0 0.0
      %4106 = vmatprep.subr.mxu0 0.0
      %4107 = vmatpush2.msra.mxu0 0.0
      %4108 = vmatprep.subr.mxu0 0.0
      %4109 = vmatpush2.msra.mxu0 0.0
      %4110 = vmatprep.subr.mxu0 0.0
      %4111 = vmatpush2.msra.mxu0 0.0
      %4112 = vmatprep.subr.mxu0 0.0
      %4113 = vmatpush2.msra.mxu0 0.0
      %4114 = vmatprep.subr.mxu0 0.0
      %4115 = vmatpush2.msra.mxu0 0.0
      %4116 = vmatprep.mubr.f32.mxu0 0.0
      %4117 = vmatmul.mubr.f32.gmra.mxu0 %v3837
      %v4118 = vpop.f32.mrf.mxu0
      %v4119 = vadd.f32 0.0, %v4118
      %v4120 = vpop.f32.mrf.mxu0
      %v4121 = vadd.f32 0.0, %v4120
      %4122 = vdwg.mxu0
      %v4123 = vsel %vm1920, %v3906, 0.0
      %v4124 = vsel %vm1921, %v3908, 0.0
      %v4125 = vsel %vm1922, %v3977, 0.0
      %v4126 = vsel %vm1923, %v3979, 0.0
      %v4127 = vsel %vm1924, %v4048, 0.0
      %v4128 = vsel %vm1925, %v4050, 0.0
      %v4129 = vsel %vm1926, %v4119, 0.0
      %v4130 = vsel %vm1927, %v4121, 0.0
      %v4131 = vadd.f32 %v3757, %v4123
      %v4132 = vadd.f32 %v3758, %v4124
      %v4133 = vadd.f32 %v3759, %v4125
      %v4134 = vadd.f32 %v3760, %v4126
      %v4135 = vadd.f32 %v3761, %v4127
      %v4136 = vadd.f32 %v3762, %v4128
      %v4137 = vadd.f32 %v3763, %v4129
      %v4138 = vadd.f32 %v3764, %v4130
      %v4139 = vld [vmem:[%s3] sm:$0xff]
      %4141 = vset.pattern.permute.xlu0 0
      %4142 = vperm.xlu0 %4141, %v4139
      %v4143 = vpop.permute.xlu0 %4142
      %v4145 = vadd.f32 %v4131, %v4143
      %v4146 = vadd.f32 %v4132, %v4143
      %v4147 = vadd.f32 %v4133, %v4143
      %v4148 = vadd.f32 %v4134, %v4143
      %v4149 = vadd.f32 %v4135, %v4143
      %v4150 = vadd.f32 %v4136, %v4143
      %v4151 = vadd.f32 %v4137, %v4143
      %v4152 = vadd.f32 %v4138, %v4143
      %v4153 = vtanh.pop %v4145
      %v4154 = vtanh.pop %v4146
      %v4155 = vtanh.pop %v4147
      %v4156 = vtanh.pop %v4148
      %v4157 = vtanh.pop %v4149
      %v4158 = vtanh.pop %v4150
      %v4159 = vtanh.pop %v4151
      %v4160 = vtanh.pop %v4152
      %4161 = vst [vmem:[%s224] sm:$0xff] %v4153
      %4162 = vst [vmem:[%s224 + $0x8] sm:$0xff] %v4154
      %4163 = vst [vmem:[%s224 + $0x10] sm:$0xff] %v4155
      %4164 = vst [vmem:[%s224 + $0x18] sm:$0xff] %v4156
      %4165 = vst [vmem:[%s224 + $0x20] sm:$0xff] %v4157
      %4166 = vst [vmem:[%s224 + $0x28] sm:$0xff] %v4158
      %4167 = vst [vmem:[%s224 + $0x30] sm:$0xff] %v4159
      %4168 = vst [vmem:[%s224 + $0x38] sm:$0xff] %v4160
      %p4169 = scmp.lt.s32.totalorder %s16, 1
      %s4170 = scalar_select %p4169, %s16, 1
      %s4171 = smul.addr %s4170, 8
      %s4172 = smul.addr %s4171, 8
      %s4173 = scalar_lea.vmem %s5, %s4172
      // Predicated region
      $region41: #{upblock_forward.1} parent=39 // pred_check
        %p4174 = pneg %p144
      $region42: #{upblock_forward.1} parent=39 // pred_check_branch
        %4176 = sbr.rel (%p4174) target = $region44
      $region43: #{upblock_forward.1} parent=39 // pred_region
        _
      $region44: #{upblock_forward.1} parent=39 // pred_fallthru
        _
    $region40: #{upblock_forward.1} parent=5 // pred_fallthru
      _
    %p4177 = scmp.le.s32.totalorder 2, %s11
    // Predicated region
    $region45: #{upblock_forward.1} parent=5 // pred_check
      %p4178 = pneg %p4177
    $region46: #{upblock_forward.1} parent=5 // pred_check_branch
      %4180 = sbr.rel (%p4178) target = $region48
    $region47: #{upblock_forward.1} parent=5 // pred_region
      %s4181 = ssub.s32 %s11, 2
      // Predicated region
      $region49: #{upblock_forward.1} parent=47 // pred_check
        %p4182 = pneg %p150
      $region50: #{upblock_forward.1} parent=47 // pred_check_branch
        %4184 = sbr.rel (%p4182) target = $region52
      $region51: #{upblock_forward.1} parent=47 // pred_region
        %p4185 = scmp.lt.s32.totalorder %s17, 1
        %s4186 = scalar_select %p4185, %s17, 1
        %s4187 = smul.addr %s4186, 8
        %s4188 = smul.addr %s4187, 8
        %s4189 = scalar_lea.vmem %s5, %s4188
      $region52: #{upblock_forward.1} parent=47 // pred_fallthru
        _
    $region48: #{upblock_forward.1} parent=5 // pred_fallthru
      _
  $region6: #{upblock_forward.1} parent=0 // loop_footer
    %s15 = sadd.s32 1, %s11
  $region7: #{upblock_forward.1} parent=0 // loop_footer_branch
    %10 = sbr.rel target = $region3
  $region8: #{upblock_forward.1} parent=0 // loop_exit
    _

</llo_original>
